<compile_context>
chip_gen: v5e
topology: v5e:2x2
jax: 0.10.0
libtpu: 0.0.40
codegen_flags: <defaults>
</compile_context>

<pallas_src>
import functools

import jax
import jax.numpy as jnp
from jax.experimental import pallas as pl
from jax.experimental.pallas import tpu as pltpu

Z_DIM = 20
HIDDEN_DIM = 500
OUTPUT_DIM = 28 * 28          # 784 (kept un-padded on the output side)
HIDDEN_PAD = 512              # hidden padded to the next multiple of 128


def decoder_kernel(x_ref, w1_ref, b1_ref, w2_ref, b2_ref, o_ref):
    # First linear: bf16 MXU inputs, f32 accumulation; bias + ReLU in f32.
    h = jnp.dot(x_ref[...], w1_ref[...], preferred_element_type=jnp.float32)
    h = jnp.maximum(h + b1_ref[...], 0.0)            # (TILE_B, Hp) + (1, Hp)
    # Second linear + bias + Sigmoid (exp lands on the EUP slot); store bf16.
    y = jnp.dot(h.astype(jnp.bfloat16), w2_ref[...],
                preferred_element_type=jnp.float32)
    y = y + b2_ref[...]                              # (TILE_B, 784) + (1, 784)
    o_ref[...] = jax.nn.sigmoid(y).astype(o_ref.dtype)


@functools.partial(jax.jit, static_argnames=("tile_b",))
def decoder_forward(x, w1, b1, w2, b2, *, tile_b=256):
    """x: (B, z_dim) f32 -> (B, 784) bf16 Bernoulli means in [0, 1].

    w1: (Z, HIDDEN_PAD) bf16, b1: (1, HIDDEN_PAD) f32,
    w2: (HIDDEN_PAD, 784) bf16, b2: (1, 784) f32.
    """
    assert tile_b % 8 == 0, "tile_b must be a multiple of 8 (f32/bf16 sublanes)"
    B, Z = x.shape
    Hp = w1.shape[1]
    O = w2.shape[1]                                   # 784

    # Feed the MXU bf16 activations (half the x DMA, no in-kernel cast).
    x = x.astype(jnp.bfloat16)

    # Clamp the tile so small batches run as a single grid step.
    tb = min(tile_b, ((B + 7) // 8) * 8)
    Bp = pl.cdiv(B, tb) * tb
    if Bp != B:
        x = jnp.pad(x, ((0, Bp - B), (0, 0)))
    grid = (Bp // tb,)

    cost = pl.CostEstimate(
        flops=2 * Bp * (Z * Hp + Hp * O),
        transcendentals=Bp * O,                        # sigmoid exp
        bytes_accessed=(Bp * Z * 2 + w1.size * 2 + b1.size * 4
                        + w2.size * 2 + b2.size * 4 + Bp * O * 2),
    )

    const = lambda i: (0, 0)                           # resident blocks
    out = pl.pallas_call(
        decoder_kernel,
        out_shape=jax.ShapeDtypeStruct((Bp, O), jnp.bfloat16),
        grid_spec=pltpu.PrefetchScalarGridSpec(
            num_scalar_prefetch=0,
            grid=grid,
            in_specs=[
                pl.BlockSpec((tb, Z), lambda i: (i, 0)),   # x tiles stream
                pl.BlockSpec((Z, Hp), const, pipeline_mode=pl.Buffered(1)),
                pl.BlockSpec((1, Hp), const, pipeline_mode=pl.Buffered(1)),
                pl.BlockSpec((Hp, O), const, pipeline_mode=pl.Buffered(1)),
                pl.BlockSpec((1, O), const, pipeline_mode=pl.Buffered(1)),
            ],
            out_specs=pl.BlockSpec((tb, O), lambda i: (i, 0)),
        ),
        compiler_params=pltpu.CompilerParams(
            dimension_semantics=("parallel",),     # megacore when grid >= 2
            vmem_limit_bytes=32 << 20,             # headroom for 256-row tiles
        ),
        cost_estimate=cost,
    )(x, w1, b1, w2, b2)

    # Only a row slice, and only when B isn't a tile multiple (not in demo).
    return out if Bp == B else out[:B]


def init_decoder_params(key, z_dim=Z_DIM, hidden_dim=HIDDEN_DIM,
                        output_dim=OUTPUT_DIM, hidden_pad=HIDDEN_PAD):
    """PyTorch nn.Linear-style init (U(-1/sqrt(fan_in), +)). The hidden dim is
    zero-padded to 512: padded units have zero w1 column + zero bias, so
    ReLU(0)=0, and their (zero) w2 rows contribute nothing — numerically
    inert. The output dim stays exactly 784 (no padded lanes to mask)."""
    k1, k2, k3, k4 = jax.random.split(key, 4)
    lim1 = 1.0 / jnp.sqrt(z_dim)
    lim2 = 1.0 / jnp.sqrt(hidden_dim)
    w1 = jax.random.uniform(k1, (z_dim, hidden_dim), jnp.float32, -lim1, lim1)
    b1 = jax.random.uniform(k2, (1, hidden_dim), jnp.float32, -lim1, lim1)
    w2 = jax.random.uniform(k3, (hidden_dim, output_dim), jnp.float32, -lim2, lim2)
    b2 = jax.random.uniform(k4, (1, output_dim), jnp.float32, -lim2, lim2)

    w1p = jnp.zeros((z_dim, hidden_pad), jnp.float32).at[:, :hidden_dim].set(w1)
    b1p = jnp.zeros((1, hidden_pad), jnp.float32).at[:, :hidden_dim].set(b1)
    w2p = jnp.zeros((hidden_pad, output_dim), jnp.float32).at[:hidden_dim, :].set(w2)
    return w1p.astype(jnp.bfloat16), b1p, w2p.astype(jnp.bfloat16), b2


def decoder_reference_bf16(x, w1, b1, w2, b2):
    """Same quantized math (bf16 MXU inputs, f32 accumulate, f32 sigmoid)."""
    h = jnp.dot(x.astype(jnp.bfloat16), w1, preferred_element_type=jnp.float32)
    h = jnp.maximum(h + b1, 0.0)
    y = jnp.dot(h.astype(jnp.bfloat16), w2, preferred_element_type=jnp.float32)
    return jax.nn.sigmoid(y + b2)


def decoder_reference_f32(x, w1, b1, w2, b2):
    h = jnp.maximum(x @ w1.astype(jnp.float32) + b1, 0.0)
    return jax.nn.sigmoid(h @ w2.astype(jnp.float32) + b2)


if __name__ == "__main__":
    key = jax.random.PRNGKey(0)
    kx, kp = jax.random.split(key)

    B = 64            # demo batch -> single grid step (tile clamped to 64)
    x = jax.random.normal(kx, (B, Z_DIM), jnp.float32)        # latent codes z
    w1, b1, w2, b2 = init_decoder_params(kp)

    out = decoder_forward(x, w1, b1, w2, b2)
    out = jax.block_until_ready(out)

    assert out.shape == (B, OUTPUT_DIM)
    assert out.dtype == jnp.bfloat16
    out_f = out.astype(jnp.float32)
    ref_q = decoder_reference_bf16(x, w1, b1, w2, b2)
    ref_f = decoder_reference_f32(x, w1, b1, w2, b2)
    # bf16 output carries ~3 decimal digits -> 4e-3 vs the bf16-math reference.
    assert jnp.allclose(out_f, ref_q, atol=4e-3), "mismatch vs bf16 reference"
    assert jnp.allclose(out_f, ref_f, atol=3e-2), "mismatch vs f32 reference"
    assert bool(jnp.all((out_f >= 0.0) & (out_f <= 1.0)))

    print("KERNEL_OK")
</pallas_src>

<mosaic_0001>
module attributes {stable_mosaic.version = 11 : i64} {
  func.func @decoder_kernel(%arg0: i32, %arg1: memref<64x20xbf16, #tpu.memory_space<vmem>>, %arg2: memref<20x512xbf16, #tpu.memory_space<vmem>>, %arg3: memref<1x512xf32, #tpu.memory_space<vmem>>, %arg4: memref<512x784xbf16, #tpu.memory_space<vmem>>, %arg5: memref<1x784xf32, #tpu.memory_space<vmem>>, %arg6: memref<64x784xbf16, #tpu.memory_space<vmem>>) attributes {dimension_semantics = [#tpu.dimension_semantics<parallel>], iteration_bounds = array<i64: 1>, scalar_prefetch = 0 : i64, scratch_operands = 0 : i64, tpu.core_type = #tpu.core_type<tc>, window_params = [{transform_indices = @transform_0, window_bounds = array<i64: 64, 20>}, {pipeline_mode = #tpu.pipeline_mode<synchronous>, transform_indices = @transform_1, window_bounds = array<i64: 20, 512>}, {pipeline_mode = #tpu.pipeline_mode<synchronous>, transform_indices = @transform_2, window_bounds = array<i64: 1, 512>}, {pipeline_mode = #tpu.pipeline_mode<synchronous>, transform_indices = @transform_3, window_bounds = array<i64: 512, 784>}, {pipeline_mode = #tpu.pipeline_mode<synchronous>, transform_indices = @transform_4, window_bounds = array<i64: 1, 784>}, {transform_indices = @transform_5, window_bounds = array<i64: 64, 784>}]} {
    %c0 = arith.constant 0 : index
    %c0_0 = arith.constant 0 : index
    %0 = vector.load %arg1[%c0, %c0_0] : memref<64x20xbf16, #tpu.memory_space<vmem>>, vector<64x20xbf16>
    %c0_1 = arith.constant 0 : index
    %c0_2 = arith.constant 0 : index
    %1 = vector.load %arg2[%c0_1, %c0_2] : memref<20x512xbf16, #tpu.memory_space<vmem>>, vector<20x512xbf16>
    %cst = arith.constant dense<0.000000e+00> : vector<64x512xf32>
    %2 = tpu.matmul %0, %1, %cst {dimension_numbers = #tpu.dot_dimension_numbers<[1], [0], [0], [1], [0, 0, 1, 1], [], []>} : vector<64x20xbf16>, vector<20x512xbf16>, vector<64x512xf32> -> vector<64x512xf32>
    %c0_3 = arith.constant 0 : index
    %c0_4 = arith.constant 0 : index
    %3 = vector.load %arg3[%c0_3, %c0_4] : memref<1x512xf32, #tpu.memory_space<vmem>>, vector<1x512xf32>
    %4 = vector.broadcast %3 : vector<1x512xf32> to vector<64x512xf32>
    %5 = arith.addf %2, %4 : vector<64x512xf32>
    %cst_5 = arith.constant 0.000000e+00 : f32
    %6 = vector.broadcast %cst_5 : f32 to vector<64x512xf32>
    %7 = arith.maximumf %5, %6 : vector<64x512xf32>
    %8 = arith.truncf %7 : vector<64x512xf32> to vector<64x512xbf16>
    %c0_6 = arith.constant 0 : index
    %c0_7 = arith.constant 0 : index
    %9 = vector.load %arg4[%c0_6, %c0_7] : memref<512x784xbf16, #tpu.memory_space<vmem>>, vector<512x784xbf16>
    %cst_8 = arith.constant dense<0.000000e+00> : vector<64x784xf32>
    %10 = tpu.matmul %8, %9, %cst_8 {dimension_numbers = #tpu.dot_dimension_numbers<[1], [0], [0], [1], [0, 0, 1, 1], [], []>} : vector<64x512xbf16>, vector<512x784xbf16>, vector<64x784xf32> -> vector<64x784xf32>
    %c0_9 = arith.constant 0 : index
    %c0_10 = arith.constant 0 : index
    %11 = vector.load %arg5[%c0_9, %c0_10] : memref<1x784xf32, #tpu.memory_space<vmem>>, vector<1x784xf32>
    %12 = vector.broadcast %11 : vector<1x784xf32> to vector<64x784xf32>
    %13 = arith.addf %10, %12 : vector<64x784xf32>
    %14 = arith.negf %13 : vector<64x784xf32>
    %15 = math.exp %14 : vector<64x784xf32>
    %cst_11 = arith.constant 1.000000e+00 : f32
    %16 = vector.broadcast %cst_11 : f32 to vector<64x784xf32>
    %17 = arith.addf %16, %15 : vector<64x784xf32>
    %18 = arith.divf %16, %17 : vector<64x784xf32>
    %19 = arith.truncf %18 : vector<64x784xf32> to vector<64x784xbf16>
    %c0_12 = arith.constant 0 : index
    %c0_13 = arith.constant 0 : index
    %20 = vector.load %arg6[%c0_12, %c0_13] : memref<64x784xbf16, #tpu.memory_space<vmem>>, vector<64x784xbf16>
    tpu.vector_store %arg6[%c0_12, %c0_13], %19 {strides = array<i32>} : memref<64x784xbf16, #tpu.memory_space<vmem>>, vector<64x784xbf16>,
    return
  }
  func.func @transform_0(%arg0: i32) -> (i32, i32) {
    %c0_i32 = arith.constant 0 : i32
    %c0_i32_0 = arith.constant 0 : i32
    return %arg0, %c0_i32 : i32, i32
  }
  func.func @transform_1(%arg0: i32) -> (i32, i32) {
    %c0_i32 = arith.constant 0 : i32
    %c0_i32_0 = arith.constant 0 : i32
    %c0_i32_1 = arith.constant 0 : i32
    return %c0_i32, %c0_i32_0 : i32, i32
  }
  func.func @transform_2(%arg0: i32) -> (i32, i32) {
    %c0_i32 = arith.constant 0 : i32
    %c0_i32_0 = arith.constant 0 : i32
    %c0_i32_1 = arith.constant 0 : i32
    return %c0_i32, %c0_i32_0 : i32, i32
  }
  func.func @transform_3(%arg0: i32) -> (i32, i32) {
    %c0_i32 = arith.constant 0 : i32
    %c0_i32_0 = arith.constant 0 : i32
    %c0_i32_1 = arith.constant 0 : i32
    return %c0_i32, %c0_i32_0 : i32, i32
  }
  func.func @transform_4(%arg0: i32) -> (i32, i32) {
    %c0_i32 = arith.constant 0 : i32
    %c0_i32_0 = arith.constant 0 : i32
    %c0_i32_1 = arith.constant 0 : i32
    return %c0_i32, %c0_i32_0 : i32, i32
  }
  func.func @transform_5(%arg0: i32) -> (i32, i32) {
    %c0_i32 = arith.constant 0 : i32
    %c0_i32_0 = arith.constant 0 : i32
    return %arg0, %c0_i32 : i32, i32
  }
}

</mosaic_0001>

<llo_original>
// kernel: decoder_forward.1
$region0: #{decoder_forward.1}
  #allocation0 [shape = 'u32[]', space=smem, size = 0x4, offset = 0x4, fixed_abs, tag = 'smem constant byte address 0x4 - core index']
  #allocation1 [shape = 'u32[72,128]{1,0:T(1,128)}', space=vmem, size = 0x9000, scoped, tag = 'internal scratch']
  %s0 = inlined_call_operand.vmem [shape: bf16[64,20], index: 0, kind: input, shape index: {}]
  %s1 = inlined_call_operand.vmem [shape: bf16[20,512], index: 1, kind: input, shape index: {}]
  %s2 = inlined_call_operand.vmem [shape: f32[1,512], index: 2, kind: input, shape index: {}]
  %s3 = inlined_call_operand.vmem [shape: bf16[512,784], index: 3, kind: input, shape index: {}]
  %s4 = inlined_call_operand.vmem [shape: f32[1,784], index: 4, kind: input, shape index: {}]
  %s5 = inlined_call_operand.hbm [shape: bf16[64,784], index: 5, kind: output, shape index: {}]
  %s6 = sld [smem:[#allocation0]]
  $region30: #{decoder_forward.1} parent=0
    _
  %s8 = ssub.s32 1, %s6
  %s9 = scalar_select 0, %s8, %s6
  $region1: #{decoder_forward.1} parent=0
    #allocation2 [shape = 'u8[114688]{0}', space=vmem, size = 0x1c000, scoped, tag = 'output window, operand 0, single buffered']
    #allocation3 [shape = 's32[1]{0}', space=sflag, size = 0x4, scoped, tag = 'scoped memory for decoder_forward.1']
    %10 = vsyncpa [#allocation3], 0
    // Predicated region
    $region2: #{decoder_forward.1} parent=1 // pred_check
      _
    $region3: #{decoder_forward.1} parent=1 // pred_check_branch
      %12 = sbr.rel (0) target = $region5
    $region4: #{decoder_forward.1} parent=1 // pred_region
      _
    $region5: #{decoder_forward.1} parent=1 // pred_fallthru
      _
    // Predicated region
    $region6: #{decoder_forward.1} parent=1 // pred_check
      _
    $region7: #{decoder_forward.1} parent=1 // pred_check_branch
      %14 = sbr.rel (0) target = $region9
    $region8: #{decoder_forward.1} parent=1 // pred_region
      _
    $region9: #{decoder_forward.1} parent=1 // pred_fallthru
      _
    // Predicated region
    $region10: #{decoder_forward.1} parent=1 // pred_check
      _
    $region11: #{decoder_forward.1} parent=1 // pred_check_branch
      %16 = sbr.rel (0) target = $region13
    $region12: #{decoder_forward.1} parent=1 // pred_region
      _
    $region13: #{decoder_forward.1} parent=1 // pred_fallthru
      _
    // Predicated region
    $region14: #{decoder_forward.1} parent=1 // pred_check
      _
    $region15: #{decoder_forward.1} parent=1 // pred_check_branch
      %18 = sbr.rel (0) target = $region17
    $region16: #{decoder_forward.1} parent=1 // pred_region
      _
    $region17: #{decoder_forward.1} parent=1 // pred_fallthru
      _
    // Predicated region
    $region18: #{decoder_forward.1} parent=1 // pred_check
      _
    $region19: #{decoder_forward.1} parent=1 // pred_check_branch
      %20 = sbr.rel (0) target = $region21
    $region20: #{decoder_forward.1} parent=1 // pred_region
      _
    $region21: #{decoder_forward.1} parent=1 // pred_fallthru
      _
    %v22 = vld [vmem:[%s0] sm:$0xf]
    %v23 = vld [vmem:[%s0 + $0x4] sm:$0xf]
    %v24 = vld [vmem:[%s0 + $0x8] sm:$0xf]
    %v25 = vld [vmem:[%s0 + $0xc] sm:$0xf]
    %v26 = vld [vmem:[%s0 + $0x10] sm:$0xf]
    %v27 = vld [vmem:[%s0 + $0x14] sm:$0xf]
    %v28 = vld [vmem:[%s0 + $0x18] sm:$0xf]
    %v29 = vld [vmem:[%s0 + $0x1c] sm:$0xf]
    %v30 = vld [vmem:[%s1] sm:$0xff]
    %v31 = vld [vmem:[%s1 + $0x8] sm:$0xff]
    %v32 = vld [vmem:[%s1 + $0x10] sm:$0xff]
    %v33 = vld [vmem:[%s1 + $0x18] sm:$0xff]
    %v34 = vld [vmem:[%s1 + $0x20] sm:$0x33]
    %v35 = vld [vmem:[%s1 + $0x28] sm:$0x33]
    %v36 = vld [vmem:[%s2] sm:$0xf]
    %v38 = vperm.slane %v36, 0
    %v39 = vperm.slane %v36, 1
    %v40 = vperm.slane %v36, 2
    %v41 = vperm.slane %v36, 3
    %v54 = vunpack.c.l.b16 %v22
    %v55 = vunpack.c.l.b16 %v23
    %v56 = vunpack.c.l.b16 %v24
    %v57 = vunpack.c.l.b16 %v25
    %v58 = vunpack.c.l.b16 %v26
    %v59 = vunpack.c.l.b16 %v27
    %v60 = vunpack.c.l.b16 %v28
    %v61 = vunpack.c.l.b16 %v29
    %v62 = vpack.c.b16 %v55, %v54
    %v63 = vpack.c.b16 %v57, %v56
    %v64 = vpack.c.b16 %v59, %v58
    %v65 = vpack.c.b16 %v61, %v60
    %v72 = vunpack.c.l.b16 %v30
    %v73 = vunpack.c.h.b16 %v30
    %v74 = vunpack.c.l.b16 %v31
    %v75 = vunpack.c.h.b16 %v31
    %v76 = vunpack.c.l.b16 %v32
    %v77 = vunpack.c.h.b16 %v32
    %v78 = vunpack.c.l.b16 %v33
    %v79 = vunpack.c.h.b16 %v33
    %v80 = vunpack.c.l.b16 %v34
    %v81 = vunpack.c.h.b16 %v34
    %v82 = vunpack.c.l.b16 %v35
    %v83 = vunpack.c.h.b16 %v35
    %v84 = vpack.c.b16 %v76, %v72
    %v85 = vpack.c.b16 %v77, %v73
    %v86 = vpack.c.b16 %v78, %v74
    %v87 = vpack.c.b16 %v79, %v75
    %v88 = vpack.c.b16 %v80, %v80
    %v89 = vpack.c.b16 %v81, %v81
    %v90 = vpack.c.b16 %v82, %v82
    %v91 = vpack.c.b16 %v83, %v83
    %vm96 = vcmask 162816
    %v98 = vsel %vm96, %v62, 0
    %v101 = vsel %vm96, %v63, 0
    %v104 = vsel %vm96, %v64, 0
    %v107 = vsel %vm96, %v65, 0
    %vm109 = vcmask 1041408
    %v111 = vsel %vm109, %v88, 0
    %v114 = vsel %vm109, %v89, 0
    %v117 = vsel %vm109, %v90, 0
    %v120 = vsel %vm109, %v91, 0
    %122 = vmatpush.bf16.msra.mxu0 0
    %123 = vmatpush.bf16.msra.mxu0 0
    %124 = vmatpush.bf16.msra.mxu0 0
    %125 = vmatpush.bf16.msra.mxu0 0
    %126 = vmatpush.bf16.msra.mxu0 0
    %127 = vmatpush.bf16.msra.mxu0 0
    %128 = vmatpush.bf16.msra.mxu0 %v111
    %129 = vmatpush.bf16.msra.mxu0 %v84
    %130 = vmatmul.bf16.gmra.mxu0 %v98
    %v131 = vpop.f32.mrf.mxu0
    %v132 = vadd.f32 %v38, %v131
    %v133 = vpop.f32.mrf.mxu0
    %v134 = vadd.f32 %v38, %v133
    %135 = vmatmul.bf16.gmra.mxu0 %v101
    %v136 = vpop.f32.mrf.mxu0
    %v137 = vadd.f32 %v38, %v136
    %v138 = vpop.f32.mrf.mxu0
    %v139 = vadd.f32 %v38, %v138
    %140 = vmatmul.bf16.gmra.mxu0 %v104
    %v141 = vpop.f32.mrf.mxu0
    %v142 = vadd.f32 %v38, %v141
    %v143 = vpop.f32.mrf.mxu0
    %v144 = vadd.f32 %v38, %v143
    %145 = vmatmul.bf16.gmra.mxu0 %v107
    %v146 = vpop.f32.mrf.mxu0
    %v147 = vadd.f32 %v38, %v146
    %v148 = vpop.f32.mrf.mxu0
    %v149 = vadd.f32 %v38, %v148
    %150 = vdwg.mxu0
    %151 = vmatpush.bf16.msra.mxu0 0
    %152 = vmatpush.bf16.msra.mxu0 0
    %153 = vmatpush.bf16.msra.mxu0 0
    %154 = vmatpush.bf16.msra.mxu0 0
    %155 = vmatpush.bf16.msra.mxu0 0
    %156 = vmatpush.bf16.msra.mxu0 0
    %157 = vmatpush.bf16.msra.mxu0 %v114
    %158 = vmatpush.bf16.msra.mxu0 %v85
    %159 = vmatmul.bf16.gmra.mxu0 %v98
    %v160 = vpop.f32.mrf.mxu0
    %v161 = vadd.f32 %v39, %v160
    %v162 = vpop.f32.mrf.mxu0
    %v163 = vadd.f32 %v39, %v162
    %164 = vmatmul.bf16.gmra.mxu0 %v101
    %v165 = vpop.f32.mrf.mxu0
    %v166 = vadd.f32 %v39, %v165
    %v167 = vpop.f32.mrf.mxu0
    %v168 = vadd.f32 %v39, %v167
    %169 = vmatmul.bf16.gmra.mxu0 %v104
    %v170 = vpop.f32.mrf.mxu0
    %v171 = vadd.f32 %v39, %v170
    %v172 = vpop.f32.mrf.mxu0
    %v173 = vadd.f32 %v39, %v172
    %174 = vmatmul.bf16.gmra.mxu0 %v107
    %v175 = vpop.f32.mrf.mxu0
    %v176 = vadd.f32 %v39, %v175
    %v177 = vpop.f32.mrf.mxu0
    %v178 = vadd.f32 %v39, %v177
    %179 = vdwg.mxu0
    %180 = vmatpush.bf16.msra.mxu0 0
    %181 = vmatpush.bf16.msra.mxu0 0
    %182 = vmatpush.bf16.msra.mxu0 0
    %183 = vmatpush.bf16.msra.mxu0 0
    %184 = vmatpush.bf16.msra.mxu0 0
    %185 = vmatpush.bf16.msra.mxu0 0
    %186 = vmatpush.bf16.msra.mxu0 %v117
    %187 = vmatpush.bf16.msra.mxu0 %v86
    %188 = vmatmul.bf16.gmra.mxu0 %v98
    %v189 = vpop.f32.mrf.mxu0
    %v190 = vadd.f32 %v40, %v189
    %v191 = vpop.f32.mrf.mxu0
    %v192 = vadd.f32 %v40, %v191
    %193 = vmatmul.bf16.gmra.mxu0 %v101
    %v194 = vpop.f32.mrf.mxu0
    %v195 = vadd.f32 %v40, %v194
    %v196 = vpop.f32.mrf.mxu0
    %v197 = vadd.f32 %v40, %v196
    %198 = vmatmul.bf16.gmra.mxu0 %v104
    %v199 = vpop.f32.mrf.mxu0
    %v200 = vadd.f32 %v40, %v199
    %v201 = vpop.f32.mrf.mxu0
    %v202 = vadd.f32 %v40, %v201
    %203 = vmatmul.bf16.gmra.mxu0 %v107
    %v204 = vpop.f32.mrf.mxu0
    %v205 = vadd.f32 %v40, %v204
    %v206 = vpop.f32.mrf.mxu0
    %v207 = vadd.f32 %v40, %v206
    %208 = vdwg.mxu0
    %209 = vmatpush.bf16.msra.mxu0 0
    %210 = vmatpush.bf16.msra.mxu0 0
    %211 = vmatpush.bf16.msra.mxu0 0
    %212 = vmatpush.bf16.msra.mxu0 0
    %213 = vmatpush.bf16.msra.mxu0 0
    %214 = vmatpush.bf16.msra.mxu0 0
    %215 = vmatpush.bf16.msra.mxu0 %v120
    %216 = vmatpush.bf16.msra.mxu0 %v87
    %217 = vmatmul.bf16.gmra.mxu0 %v98
    %v218 = vpop.f32.mrf.mxu0
    %v219 = vadd.f32 %v41, %v218
    %v220 = vpop.f32.mrf.mxu0
    %v221 = vadd.f32 %v41, %v220
    %222 = vmatmul.bf16.gmra.mxu0 %v101
    %v223 = vpop.f32.mrf.mxu0
    %v224 = vadd.f32 %v41, %v223
    %v225 = vpop.f32.mrf.mxu0
    %v226 = vadd.f32 %v41, %v225
    %227 = vmatmul.bf16.gmra.mxu0 %v104
    %v228 = vpop.f32.mrf.mxu0
    %v229 = vadd.f32 %v41, %v228
    %v230 = vpop.f32.mrf.mxu0
    %v231 = vadd.f32 %v41, %v230
    %232 = vmatmul.bf16.gmra.mxu0 %v107
    %v233 = vpop.f32.mrf.mxu0
    %v234 = vadd.f32 %v41, %v233
    %v235 = vpop.f32.mrf.mxu0
    %v236 = vadd.f32 %v41, %v235
    %237 = vdwg.mxu0
    %v238 = vmax.f32 %v132, 0.0
    %v239 = vmax.f32 %v161, 0.0
    %v240 = vmax.f32 %v190, 0.0
    %v241 = vmax.f32 %v219, 0.0
    %v242 = vmax.f32 %v134, 0.0
    %v243 = vmax.f32 %v163, 0.0
    %v244 = vmax.f32 %v192, 0.0
    %v245 = vmax.f32 %v221, 0.0
    %v246 = vmax.f32 %v137, 0.0
    %v247 = vmax.f32 %v166, 0.0
    %v248 = vmax.f32 %v195, 0.0
    %v249 = vmax.f32 %v224, 0.0
    %v250 = vmax.f32 %v139, 0.0
    %v251 = vmax.f32 %v168, 0.0
    %v252 = vmax.f32 %v197, 0.0
    %v253 = vmax.f32 %v226, 0.0
    %v254 = vmax.f32 %v142, 0.0
    %v255 = vmax.f32 %v171, 0.0
    %v256 = vmax.f32 %v200, 0.0
    %v257 = vmax.f32 %v229, 0.0
    %v258 = vmax.f32 %v144, 0.0
    %v259 = vmax.f32 %v173, 0.0
    %v260 = vmax.f32 %v202, 0.0
    %v261 = vmax.f32 %v231, 0.0
    %v262 = vmax.f32 %v147, 0.0
    %v263 = vmax.f32 %v176, 0.0
    %v264 = vmax.f32 %v205, 0.0
    %v265 = vmax.f32 %v234, 0.0
    %v266 = vmax.f32 %v149, 0.0
    %v267 = vmax.f32 %v178, 0.0
    %v268 = vmax.f32 %v207, 0.0
    %v269 = vmax.f32 %v236, 0.0
    %v270 = vpack.c.bf16 %v242, %v238
    %v271 = vpack.c.bf16 %v243, %v239
    %v272 = vpack.c.bf16 %v244, %v240
    %v273 = vpack.c.bf16 %v245, %v241
    %v274 = vpack.c.bf16 %v250, %v246
    %v275 = vpack.c.bf16 %v251, %v247
    %v276 = vpack.c.bf16 %v252, %v248
    %v277 = vpack.c.bf16 %v253, %v249
    %v278 = vpack.c.bf16 %v258, %v254
    %v279 = vpack.c.bf16 %v259, %v255
    %v280 = vpack.c.bf16 %v260, %v256
    %v281 = vpack.c.bf16 %v261, %v257
    %v282 = vpack.c.bf16 %v266, %v262
    %v283 = vpack.c.bf16 %v267, %v263
    %v284 = vpack.c.bf16 %v268, %v264
    %v285 = vpack.c.bf16 %v269, %v265
    %v286 = vld [vmem:[%s3] sm:$0xff]
    %v287 = vld [vmem:[%s3 + $0x8] sm:$0xff]
    %v288 = vld [vmem:[%s3 + $0x10] sm:$0xff]
    %v289 = vld [vmem:[%s3 + $0x18] sm:$0xf]
    %v290 = vld [vmem:[%s3 + $0x1c] sm:$0xff]
    %v291 = vld [vmem:[%s3 + $0x24] sm:$0xff]
    %v292 = vld [vmem:[%s3 + $0x2c] sm:$0xff]
    %v293 = vld [vmem:[%s3 + $0x34] sm:$0xf]
    %v294 = vld [vmem:[%s3 + $0x38] sm:$0xff]
    %v295 = vld [vmem:[%s3 + $0x40] sm:$0xff]
    %v296 = vld [vmem:[%s3 + $0x48] sm:$0xff]
    %v297 = vld [vmem:[%s3 + $0x50] sm:$0xf]
    %v298 = vld [vmem:[%s3 + $0x54] sm:$0xff]
    %v299 = vld [vmem:[%s3 + $0x5c] sm:$0xff]
    %v300 = vld [vmem:[%s3 + $0x64] sm:$0xff]
    %v301 = vld [vmem:[%s3 + $0x6c] sm:$0xf]
    %v302 = vld [vmem:[%s3 + $0x70] sm:$0xff]
    %v303 = vld [vmem:[%s3 + $0x78] sm:$0xff]
    %v304 = vld [vmem:[%s3 + $0x80] sm:$0xff]
    %v305 = vld [vmem:[%s3 + $0x88] sm:$0xf]
    %v306 = vld [vmem:[%s3 + $0x8c] sm:$0xff]
    %v307 = vld [vmem:[%s3 + $0x94] sm:$0xff]
    %v308 = vld [vmem:[%s3 + $0x9c] sm:$0xff]
    %v309 = vld [vmem:[%s3 + $0xa4] sm:$0xf]
    %v310 = vld [vmem:[%s3 + $0xa8] sm:$0xff]
    %v311 = vld [vmem:[%s3 + $0xb0] sm:$0xff]
    %v312 = vld [vmem:[%s3 + $0xb8] sm:$0xff]
    %v313 = vld [vmem:[%s3 + $0xc0] sm:$0xf]
    %v314 = vld [vmem:[%s3 + $0xc4] sm:$0xff]
    %v315 = vld [vmem:[%s3 + $0xcc] sm:$0xff]
    %v316 = vld [vmem:[%s3 + $0xd4] sm:$0xff]
    %v317 = vld [vmem:[%s3 + $0xdc] sm:$0xf]
    %v318 = vld [vmem:[%s3 + $0xe0] sm:$0xff]
    %v319 = vld [vmem:[%s3 + $0xe8] sm:$0xff]
    %v320 = vld [vmem:[%s3 + $0xf0] sm:$0xff]
    %v321 = vld [vmem:[%s3 + $0xf8] sm:$0xf]
    %v322 = vld [vmem:[%s3 + $0xfc] sm:$0xff]
    %v323 = vld [vmem:[%s3 + $0x104] sm:$0xff]
    %v324 = vld [vmem:[%s3 + $0x10c] sm:$0xff]
    %v325 = vld [vmem:[%s3 + $0x114] sm:$0xf]
    %v326 = vld [vmem:[%s3 + $0x118] sm:$0xff]
    %v327 = vld [vmem:[%s3 + $0x120] sm:$0xff]
    %v328 = vld [vmem:[%s3 + $0x128] sm:$0xff]
    %v329 = vld [vmem:[%s3 + $0x130] sm:$0xf]
    %v330 = vld [vmem:[%s3 + $0x134] sm:$0xff]
    %v331 = vld [vmem:[%s3 + $0x13c] sm:$0xff]
    %v332 = vld [vmem:[%s3 + $0x144] sm:$0xff]
    %v333 = vld [vmem:[%s3 + $0x14c] sm:$0xf]
    %v334 = vld [vmem:[%s3 + $0x150] sm:$0xff]
    %v335 = vld [vmem:[%s3 + $0x158] sm:$0xff]
    %v336 = vld [vmem:[%s3 + $0x160] sm:$0xff]
    %v337 = vld [vmem:[%s3 + $0x168] sm:$0xf]
    %v338 = vld [vmem:[%s3 + $0x16c] sm:$0xff]
    %v339 = vld [vmem:[%s3 + $0x174] sm:$0xff]
    %v340 = vld [vmem:[%s3 + $0x17c] sm:$0xff]
    %v341 = vld [vmem:[%s3 + $0x184] sm:$0xf]
    %v342 = vld [vmem:[%s3 + $0x188] sm:$0xff]
    %v343 = vld [vmem:[%s3 + $0x190] sm:$0xff]
    %v344 = vld [vmem:[%s3 + $0x198] sm:$0xff]
    %v345 = vld [vmem:[%s3 + $0x1a0] sm:$0xf]
    %v346 = vld [vmem:[%s3 + $0x1a4] sm:$0xff]
    %v347 = vld [vmem:[%s3 + $0x1ac] sm:$0xff]
    %v348 = vld [vmem:[%s3 + $0x1b4] sm:$0xff]
    %v349 = vld [vmem:[%s3 + $0x1bc] sm:$0xf]
    %v350 = vld [vmem:[%s3 + $0x1c0] sm:$0xff]
    %v351 = vld [vmem:[%s3 + $0x1c8] sm:$0xff]
    %v352 = vld [vmem:[%s3 + $0x1d0] sm:$0xff]
    %v353 = vld [vmem:[%s3 + $0x1d8] sm:$0xf]
    %v354 = vld [vmem:[%s3 + $0x1dc] sm:$0xff]
    %v355 = vld [vmem:[%s3 + $0x1e4] sm:$0xff]
    %v356 = vld [vmem:[%s3 + $0x1ec] sm:$0xff]
    %v357 = vld [vmem:[%s3 + $0x1f4] sm:$0xf]
    %v358 = vld [vmem:[%s3 + $0x1f8] sm:$0xff]
    %v359 = vld [vmem:[%s3 + $0x200] sm:$0xff]
    %v360 = vld [vmem:[%s3 + $0x208] sm:$0xff]
    %v361 = vld [vmem:[%s3 + $0x210] sm:$0xf]
    %v362 = vld [vmem:[%s3 + $0x214] sm:$0xff]
    %v363 = vld [vmem:[%s3 + $0x21c] sm:$0xff]
    %v364 = vld [vmem:[%s3 + $0x224] sm:$0xff]
    %v365 = vld [vmem:[%s3 + $0x22c] sm:$0xf]
    %v366 = vld [vmem:[%s3 + $0x230] sm:$0xff]
    %v367 = vld [vmem:[%s3 + $0x238] sm:$0xff]
    %v368 = vld [vmem:[%s3 + $0x240] sm:$0xff]
    %v369 = vld [vmem:[%s3 + $0x248] sm:$0xf]
    %v370 = vld [vmem:[%s3 + $0x24c] sm:$0xff]
    %v371 = vld [vmem:[%s3 + $0x254] sm:$0xff]
    %v372 = vld [vmem:[%s3 + $0x25c] sm:$0xff]
    %v373 = vld [vmem:[%s3 + $0x264] sm:$0xf]
    %v374 = vld [vmem:[%s3 + $0x268] sm:$0xff]
    %v375 = vld [vmem:[%s3 + $0x270] sm:$0xff]
    %v376 = vld [vmem:[%s3 + $0x278] sm:$0xff]
    %v377 = vld [vmem:[%s3 + $0x280] sm:$0xf]
    %v378 = vld [vmem:[%s3 + $0x284] sm:$0xff]
    %v379 = vld [vmem:[%s3 + $0x28c] sm:$0xff]
    %v380 = vld [vmem:[%s3 + $0x294] sm:$0xff]
    %v381 = vld [vmem:[%s3 + $0x29c] sm:$0xf]
    %v382 = vld [vmem:[%s3 + $0x2a0] sm:$0xff]
    %v383 = vld [vmem:[%s3 + $0x2a8] sm:$0xff]
    %v384 = vld [vmem:[%s3 + $0x2b0] sm:$0xff]
    %v385 = vld [vmem:[%s3 + $0x2b8] sm:$0xf]
    %v386 = vld [vmem:[%s3 + $0x2bc] sm:$0xff]
    %v387 = vld [vmem:[%s3 + $0x2c4] sm:$0xff]
    %v388 = vld [vmem:[%s3 + $0x2cc] sm:$0xff]
    %v389 = vld [vmem:[%s3 + $0x2d4] sm:$0xf]
    %v390 = vld [vmem:[%s3 + $0x2d8] sm:$0xff]
    %v391 = vld [vmem:[%s3 + $0x2e0] sm:$0xff]
    %v392 = vld [vmem:[%s3 + $0x2e8] sm:$0xff]
    %v393 = vld [vmem:[%s3 + $0x2f0] sm:$0xf]
    %v394 = vld [vmem:[%s3 + $0x2f4] sm:$0xff]
    %v395 = vld [vmem:[%s3 + $0x2fc] sm:$0xff]
    %v396 = vld [vmem:[%s3 + $0x304] sm:$0xff]
    %v397 = vld [vmem:[%s3 + $0x30c] sm:$0xf]
    %v398 = vld [vmem:[%s3 + $0x310] sm:$0xff]
    %v399 = vld [vmem:[%s3 + $0x318] sm:$0xff]
    %v400 = vld [vmem:[%s3 + $0x320] sm:$0xff]
    %v401 = vld [vmem:[%s3 + $0x328] sm:$0xf]
    %v402 = vld [vmem:[%s3 + $0x32c] sm:$0xff]
    %v403 = vld [vmem:[%s3 + $0x334] sm:$0xff]
    %v404 = vld [vmem:[%s3 + $0x33c] sm:$0xff]
    %v405 = vld [vmem:[%s3 + $0x344] sm:$0xf]
    %v406 = vld [vmem:[%s3 + $0x348] sm:$0xff]
    %v407 = vld [vmem:[%s3 + $0x350] sm:$0xff]
    %v408 = vld [vmem:[%s3 + $0x358] sm:$0xff]
    %v409 = vld [vmem:[%s3 + $0x360] sm:$0xf]
    %v410 = vld [vmem:[%s3 + $0x364] sm:$0xff]
    %v411 = vld [vmem:[%s3 + $0x36c] sm:$0xff]
    %v412 = vld [vmem:[%s3 + $0x374] sm:$0xff]
    %v413 = vld [vmem:[%s3 + $0x37c] sm:$0xf]
    %v414 = vld [vmem:[%s3 + $0x380] sm:$0xff]
    %v415 = vld [vmem:[%s3 + $0x388] sm:$0xff]
    %v416 = vld [vmem:[%s3 + $0x390] sm:$0xff]
    %v417 = vld [vmem:[%s3 + $0x398] sm:$0xf]
    %v418 = vld [vmem:[%s3 + $0x39c] sm:$0xff]
    %v419 = vld [vmem:[%s3 + $0x3a4] sm:$0xff]
    %v420 = vld [vmem:[%s3 + $0x3ac] sm:$0xff]
    %v421 = vld [vmem:[%s3 + $0x3b4] sm:$0xf]
    %v422 = vld [vmem:[%s3 + $0x3b8] sm:$0xff]
    %v423 = vld [vmem:[%s3 + $0x3c0] sm:$0xff]
    %v424 = vld [vmem:[%s3 + $0x3c8] sm:$0xff]
    %v425 = vld [vmem:[%s3 + $0x3d0] sm:$0xf]
    %v426 = vld [vmem:[%s3 + $0x3d4] sm:$0xff]
    %v427 = vld [vmem:[%s3 + $0x3dc] sm:$0xff]
    %v428 = vld [vmem:[%s3 + $0x3e4] sm:$0xff]
    %v429 = vld [vmem:[%s3 + $0x3ec] sm:$0xf]
    %v430 = vld [vmem:[%s3 + $0x3f0] sm:$0xff]
    %v431 = vld [vmem:[%s3 + $0x3f8] sm:$0xff]
    %v432 = vld [vmem:[%s3 + $0x400] sm:$0xff]
    %v433 = vld [vmem:[%s3 + $0x408] sm:$0xf]
    %v434 = vld [vmem:[%s3 + $0x40c] sm:$0xff]
    %v435 = vld [vmem:[%s3 + $0x414] sm:$0xff]
    %v436 = vld [vmem:[%s3 + $0x41c] sm:$0xff]
    %v437 = vld [vmem:[%s3 + $0x424] sm:$0xf]
    %v438 = vld [vmem:[%s3 + $0x428] sm:$0xff]
    %v439 = vld [vmem:[%s3 + $0x430] sm:$0xff]
    %v440 = vld [vmem:[%s3 + $0x438] sm:$0xff]
    %v441 = vld [vmem:[%s3 + $0x440] sm:$0xf]
    %v442 = vld [vmem:[%s3 + $0x444] sm:$0xff]
    %v443 = vld [vmem:[%s3 + $0x44c] sm:$0xff]
    %v444 = vld [vmem:[%s3 + $0x454] sm:$0xff]
    %v445 = vld [vmem:[%s3 + $0x45c] sm:$0xf]
    %v446 = vld [vmem:[%s3 + $0x460] sm:$0xff]
    %v447 = vld [vmem:[%s3 + $0x468] sm:$0xff]
    %v448 = vld [vmem:[%s3 + $0x470] sm:$0xff]
    %v449 = vld [vmem:[%s3 + $0x478] sm:$0xf]
    %v450 = vld [vmem:[%s3 + $0x47c] sm:$0xff]
    %v451 = vld [vmem:[%s3 + $0x484] sm:$0xff]
    %v452 = vld [vmem:[%s3 + $0x48c] sm:$0xff]
    %v453 = vld [vmem:[%s3 + $0x494] sm:$0xf]
    %v454 = vld [vmem:[%s3 + $0x498] sm:$0xff]
    %v455 = vld [vmem:[%s3 + $0x4a0] sm:$0xff]
    %v456 = vld [vmem:[%s3 + $0x4a8] sm:$0xff]
    %v457 = vld [vmem:[%s3 + $0x4b0] sm:$0xf]
    %v458 = vld [vmem:[%s3 + $0x4b4] sm:$0xff]
    %v459 = vld [vmem:[%s3 + $0x4bc] sm:$0xff]
    %v460 = vld [vmem:[%s3 + $0x4c4] sm:$0xff]
    %v461 = vld [vmem:[%s3 + $0x4cc] sm:$0xf]
    %v462 = vld [vmem:[%s3 + $0x4d0] sm:$0xff]
    %v463 = vld [vmem:[%s3 + $0x4d8] sm:$0xff]
    %v464 = vld [vmem:[%s3 + $0x4e0] sm:$0xff]
    %v465 = vld [vmem:[%s3 + $0x4e8] sm:$0xf]
    %v466 = vld [vmem:[%s3 + $0x4ec] sm:$0xff]
    %v467 = vld [vmem:[%s3 + $0x4f4] sm:$0xff]
    %v468 = vld [vmem:[%s3 + $0x4fc] sm:$0xff]
    %v469 = vld [vmem:[%s3 + $0x504] sm:$0xf]
    %v470 = vld [vmem:[%s3 + $0x508] sm:$0xff]
    %v471 = vld [vmem:[%s3 + $0x510] sm:$0xff]
    %v472 = vld [vmem:[%s3 + $0x518] sm:$0xff]
    %v473 = vld [vmem:[%s3 + $0x520] sm:$0xf]
    %v474 = vld [vmem:[%s3 + $0x524] sm:$0xff]
    %v475 = vld [vmem:[%s3 + $0x52c] sm:$0xff]
    %v476 = vld [vmem:[%s3 + $0x534] sm:$0xff]
    %v477 = vld [vmem:[%s3 + $0x53c] sm:$0xf]
    %v478 = vld [vmem:[%s3 + $0x540] sm:$0xff]
    %v479 = vld [vmem:[%s3 + $0x548] sm:$0xff]
    %v480 = vld [vmem:[%s3 + $0x550] sm:$0xff]
    %v481 = vld [vmem:[%s3 + $0x558] sm:$0xf]
    %v482 = vld [vmem:[%s3 + $0x55c] sm:$0xff]
    %v483 = vld [vmem:[%s3 + $0x564] sm:$0xff]
    %v484 = vld [vmem:[%s3 + $0x56c] sm:$0xff]
    %v485 = vld [vmem:[%s3 + $0x574] sm:$0xf]
    %v486 = vld [vmem:[%s3 + $0x578] sm:$0xff]
    %v487 = vld [vmem:[%s3 + $0x580] sm:$0xff]
    %v488 = vld [vmem:[%s3 + $0x588] sm:$0xff]
    %v489 = vld [vmem:[%s3 + $0x590] sm:$0xf]
    %v490 = vld [vmem:[%s3 + $0x594] sm:$0xff]
    %v491 = vld [vmem:[%s3 + $0x59c] sm:$0xff]
    %v492 = vld [vmem:[%s3 + $0x5a4] sm:$0xff]
    %v493 = vld [vmem:[%s3 + $0x5ac] sm:$0xf]
    %v494 = vld [vmem:[%s3 + $0x5b0] sm:$0xff]
    %v495 = vld [vmem:[%s3 + $0x5b8] sm:$0xff]
    %v496 = vld [vmem:[%s3 + $0x5c0] sm:$0xff]
    %v497 = vld [vmem:[%s3 + $0x5c8] sm:$0xf]
    %v498 = vld [vmem:[%s3 + $0x5cc] sm:$0xff]
    %v499 = vld [vmem:[%s3 + $0x5d4] sm:$0xff]
    %v500 = vld [vmem:[%s3 + $0x5dc] sm:$0xff]
    %v501 = vld [vmem:[%s3 + $0x5e4] sm:$0xf]
    %v502 = vld [vmem:[%s3 + $0x5e8] sm:$0xff]
    %v503 = vld [vmem:[%s3 + $0x5f0] sm:$0xff]
    %v504 = vld [vmem:[%s3 + $0x5f8] sm:$0xff]
    %v505 = vld [vmem:[%s3 + $0x600] sm:$0xf]
    %v506 = vld [vmem:[%s3 + $0x604] sm:$0xff]
    %v507 = vld [vmem:[%s3 + $0x60c] sm:$0xff]
    %v508 = vld [vmem:[%s3 + $0x614] sm:$0xff]
    %v509 = vld [vmem:[%s3 + $0x61c] sm:$0xf]
    %v510 = vld [vmem:[%s3 + $0x620] sm:$0xff]
    %v511 = vld [vmem:[%s3 + $0x628] sm:$0xff]
    %v512 = vld [vmem:[%s3 + $0x630] sm:$0xff]
    %v513 = vld [vmem:[%s3 + $0x638] sm:$0xf]
    %v514 = vld [vmem:[%s3 + $0x63c] sm:$0xff]
    %v515 = vld [vmem:[%s3 + $0x644] sm:$0xff]
    %v516 = vld [vmem:[%s3 + $0x64c] sm:$0xff]
    %v517 = vld [vmem:[%s3 + $0x654] sm:$0xf]
    %v518 = vld [vmem:[%s3 + $0x658] sm:$0xff]
    %v519 = vld [vmem:[%s3 + $0x660] sm:$0xff]
    %v520 = vld [vmem:[%s3 + $0x668] sm:$0xff]
    %v521 = vld [vmem:[%s3 + $0x670] sm:$0xf]
    %v522 = vld [vmem:[%s3 + $0x674] sm:$0xff]
    %v523 = vld [vmem:[%s3 + $0x67c] sm:$0xff]
    %v524 = vld [vmem:[%s3 + $0x684] sm:$0xff]
    %v525 = vld [vmem:[%s3 + $0x68c] sm:$0xf]
    %v526 = vld [vmem:[%s3 + $0x690] sm:$0xff]
    %v527 = vld [vmem:[%s3 + $0x698] sm:$0xff]
    %v528 = vld [vmem:[%s3 + $0x6a0] sm:$0xff]
    %v529 = vld [vmem:[%s3 + $0x6a8] sm:$0xf]
    %v530 = vld [vmem:[%s3 + $0x6ac] sm:$0xff]
    %v531 = vld [vmem:[%s3 + $0x6b4] sm:$0xff]
    %v532 = vld [vmem:[%s3 + $0x6bc] sm:$0xff]
    %v533 = vld [vmem:[%s3 + $0x6c4] sm:$0xf]
    %v534 = vld [vmem:[%s3 + $0x6c8] sm:$0xff]
    %v535 = vld [vmem:[%s3 + $0x6d0] sm:$0xff]
    %v536 = vld [vmem:[%s3 + $0x6d8] sm:$0xff]
    %v537 = vld [vmem:[%s3 + $0x6e0] sm:$0xf]
    %v538 = vld [vmem:[%s3 + $0x6e4] sm:$0xff]
    %v539 = vld [vmem:[%s3 + $0x6ec] sm:$0xff]
    %v540 = vld [vmem:[%s3 + $0x6f4] sm:$0xff]
    %v541 = vld [vmem:[%s3 + $0x6fc] sm:$0xf]
    %v542 = vld [vmem:[%s4] sm:$0x7f]
    %v544 = vperm.slane %v542, 0
    %v545 = vperm.slane %v542, 1
    %v546 = vperm.slane %v542, 2
    %v547 = vperm.slane %v542, 3
    %v548 = vperm.slane %v542, 4
    %v549 = vperm.slane %v542, 5
    %v550 = vperm.slane %v542, 6
    %v814 = vunpack.c.l.b16 %v286
    %v815 = vunpack.c.h.b16 %v286
    %v816 = vunpack.c.l.b16 %v287
    %v817 = vunpack.c.h.b16 %v287
    %v818 = vunpack.c.l.b16 %v288
    %v819 = vunpack.c.h.b16 %v288
    %v820 = vunpack.c.l.b16 %v289
    %v821 = vunpack.c.l.b16 %v290
    %v822 = vunpack.c.h.b16 %v290
    %v823 = vunpack.c.l.b16 %v291
    %v824 = vunpack.c.h.b16 %v291
    %v825 = vunpack.c.l.b16 %v292
    %v826 = vunpack.c.h.b16 %v292
    %v827 = vunpack.c.l.b16 %v293
    %v828 = vunpack.c.l.b16 %v294
    %v829 = vunpack.c.h.b16 %v294
    %v830 = vunpack.c.l.b16 %v295
    %v831 = vunpack.c.h.b16 %v295
    %v832 = vunpack.c.l.b16 %v296
    %v833 = vunpack.c.h.b16 %v296
    %v834 = vunpack.c.l.b16 %v297
    %v835 = vunpack.c.l.b16 %v298
    %v836 = vunpack.c.h.b16 %v298
    %v837 = vunpack.c.l.b16 %v299
    %v838 = vunpack.c.h.b16 %v299
    %v839 = vunpack.c.l.b16 %v300
    %v840 = vunpack.c.h.b16 %v300
    %v841 = vunpack.c.l.b16 %v301
    %v842 = vunpack.c.l.b16 %v302
    %v843 = vunpack.c.h.b16 %v302
    %v844 = vunpack.c.l.b16 %v303
    %v845 = vunpack.c.h.b16 %v303
    %v846 = vunpack.c.l.b16 %v304
    %v847 = vunpack.c.h.b16 %v304
    %v848 = vunpack.c.l.b16 %v305
    %v849 = vunpack.c.l.b16 %v306
    %v850 = vunpack.c.h.b16 %v306
    %v851 = vunpack.c.l.b16 %v307
    %v852 = vunpack.c.h.b16 %v307
    %v853 = vunpack.c.l.b16 %v308
    %v854 = vunpack.c.h.b16 %v308
    %v855 = vunpack.c.l.b16 %v309
    %v856 = vunpack.c.l.b16 %v310
    %v857 = vunpack.c.h.b16 %v310
    %v858 = vunpack.c.l.b16 %v311
    %v859 = vunpack.c.h.b16 %v311
    %v860 = vunpack.c.l.b16 %v312
    %v861 = vunpack.c.h.b16 %v312
    %v862 = vunpack.c.l.b16 %v313
    %v863 = vunpack.c.l.b16 %v314
    %v864 = vunpack.c.h.b16 %v314
    %v865 = vunpack.c.l.b16 %v315
    %v866 = vunpack.c.h.b16 %v315
    %v867 = vunpack.c.l.b16 %v316
    %v868 = vunpack.c.h.b16 %v316
    %v869 = vunpack.c.l.b16 %v317
    %v870 = vunpack.c.l.b16 %v318
    %v871 = vunpack.c.h.b16 %v318
    %v872 = vunpack.c.l.b16 %v319
    %v873 = vunpack.c.h.b16 %v319
    %v874 = vunpack.c.l.b16 %v320
    %v875 = vunpack.c.h.b16 %v320
    %v876 = vunpack.c.l.b16 %v321
    %v877 = vunpack.c.l.b16 %v322
    %v878 = vunpack.c.h.b16 %v322
    %v879 = vunpack.c.l.b16 %v323
    %v880 = vunpack.c.h.b16 %v323
    %v881 = vunpack.c.l.b16 %v324
    %v882 = vunpack.c.h.b16 %v324
    %v883 = vunpack.c.l.b16 %v325
    %v884 = vunpack.c.l.b16 %v326
    %v885 = vunpack.c.h.b16 %v326
    %v886 = vunpack.c.l.b16 %v327
    %v887 = vunpack.c.h.b16 %v327
    %v888 = vunpack.c.l.b16 %v328
    %v889 = vunpack.c.h.b16 %v328
    %v890 = vunpack.c.l.b16 %v329
    %v891 = vunpack.c.l.b16 %v330
    %v892 = vunpack.c.h.b16 %v330
    %v893 = vunpack.c.l.b16 %v331
    %v894 = vunpack.c.h.b16 %v331
    %v895 = vunpack.c.l.b16 %v332
    %v896 = vunpack.c.h.b16 %v332
    %v897 = vunpack.c.l.b16 %v333
    %v898 = vunpack.c.l.b16 %v334
    %v899 = vunpack.c.h.b16 %v334
    %v900 = vunpack.c.l.b16 %v335
    %v901 = vunpack.c.h.b16 %v335
    %v902 = vunpack.c.l.b16 %v336
    %v903 = vunpack.c.h.b16 %v336
    %v904 = vunpack.c.l.b16 %v337
    %v905 = vunpack.c.l.b16 %v338
    %v906 = vunpack.c.h.b16 %v338
    %v907 = vunpack.c.l.b16 %v339
    %v908 = vunpack.c.h.b16 %v339
    %v909 = vunpack.c.l.b16 %v340
    %v910 = vunpack.c.h.b16 %v340
    %v911 = vunpack.c.l.b16 %v341
    %v912 = vunpack.c.l.b16 %v342
    %v913 = vunpack.c.h.b16 %v342
    %v914 = vunpack.c.l.b16 %v343
    %v915 = vunpack.c.h.b16 %v343
    %v916 = vunpack.c.l.b16 %v344
    %v917 = vunpack.c.h.b16 %v344
    %v918 = vunpack.c.l.b16 %v345
    %v919 = vunpack.c.l.b16 %v346
    %v920 = vunpack.c.h.b16 %v346
    %v921 = vunpack.c.l.b16 %v347
    %v922 = vunpack.c.h.b16 %v347
    %v923 = vunpack.c.l.b16 %v348
    %v924 = vunpack.c.h.b16 %v348
    %v925 = vunpack.c.l.b16 %v349
    %v926 = vunpack.c.l.b16 %v350
    %v927 = vunpack.c.h.b16 %v350
    %v928 = vunpack.c.l.b16 %v351
    %v929 = vunpack.c.h.b16 %v351
    %v930 = vunpack.c.l.b16 %v352
    %v931 = vunpack.c.h.b16 %v352
    %v932 = vunpack.c.l.b16 %v353
    %v933 = vunpack.c.l.b16 %v354
    %v934 = vunpack.c.h.b16 %v354
    %v935 = vunpack.c.l.b16 %v355
    %v936 = vunpack.c.h.b16 %v355
    %v937 = vunpack.c.l.b16 %v356
    %v938 = vunpack.c.h.b16 %v356
    %v939 = vunpack.c.l.b16 %v357
    %v940 = vunpack.c.l.b16 %v358
    %v941 = vunpack.c.h.b16 %v358
    %v942 = vunpack.c.l.b16 %v359
    %v943 = vunpack.c.h.b16 %v359
    %v944 = vunpack.c.l.b16 %v360
    %v945 = vunpack.c.h.b16 %v360
    %v946 = vunpack.c.l.b16 %v361
    %v947 = vunpack.c.l.b16 %v362
    %v948 = vunpack.c.h.b16 %v362
    %v949 = vunpack.c.l.b16 %v363
    %v950 = vunpack.c.h.b16 %v363
    %v951 = vunpack.c.l.b16 %v364
    %v952 = vunpack.c.h.b16 %v364
    %v953 = vunpack.c.l.b16 %v365
    %v954 = vunpack.c.l.b16 %v366
    %v955 = vunpack.c.h.b16 %v366
    %v956 = vunpack.c.l.b16 %v367
    %v957 = vunpack.c.h.b16 %v367
    %v958 = vunpack.c.l.b16 %v368
    %v959 = vunpack.c.h.b16 %v368
    %v960 = vunpack.c.l.b16 %v369
    %v961 = vunpack.c.l.b16 %v370
    %v962 = vunpack.c.h.b16 %v370
    %v963 = vunpack.c.l.b16 %v371
    %v964 = vunpack.c.h.b16 %v371
    %v965 = vunpack.c.l.b16 %v372
    %v966 = vunpack.c.h.b16 %v372
    %v967 = vunpack.c.l.b16 %v373
    %v968 = vunpack.c.l.b16 %v374
    %v969 = vunpack.c.h.b16 %v374
    %v970 = vunpack.c.l.b16 %v375
    %v971 = vunpack.c.h.b16 %v375
    %v972 = vunpack.c.l.b16 %v376
    %v973 = vunpack.c.h.b16 %v376
    %v974 = vunpack.c.l.b16 %v377
    %v975 = vunpack.c.l.b16 %v378
    %v976 = vunpack.c.h.b16 %v378
    %v977 = vunpack.c.l.b16 %v379
    %v978 = vunpack.c.h.b16 %v379
    %v979 = vunpack.c.l.b16 %v380
    %v980 = vunpack.c.h.b16 %v380
    %v981 = vunpack.c.l.b16 %v381
    %v982 = vunpack.c.l.b16 %v382
    %v983 = vunpack.c.h.b16 %v382
    %v984 = vunpack.c.l.b16 %v383
    %v985 = vunpack.c.h.b16 %v383
    %v986 = vunpack.c.l.b16 %v384
    %v987 = vunpack.c.h.b16 %v384
    %v988 = vunpack.c.l.b16 %v385
    %v989 = vunpack.c.l.b16 %v386
    %v990 = vunpack.c.h.b16 %v386
    %v991 = vunpack.c.l.b16 %v387
    %v992 = vunpack.c.h.b16 %v387
    %v993 = vunpack.c.l.b16 %v388
    %v994 = vunpack.c.h.b16 %v388
    %v995 = vunpack.c.l.b16 %v389
    %v996 = vunpack.c.l.b16 %v390
    %v997 = vunpack.c.h.b16 %v390
    %v998 = vunpack.c.l.b16 %v391
    %v999 = vunpack.c.h.b16 %v391
    %v1000 = vunpack.c.l.b16 %v392
    %v1001 = vunpack.c.h.b16 %v392
    %v1002 = vunpack.c.l.b16 %v393
    %v1003 = vunpack.c.l.b16 %v394
    %v1004 = vunpack.c.h.b16 %v394
    %v1005 = vunpack.c.l.b16 %v395
    %v1006 = vunpack.c.h.b16 %v395
    %v1007 = vunpack.c.l.b16 %v396
    %v1008 = vunpack.c.h.b16 %v396
    %v1009 = vunpack.c.l.b16 %v397
    %v1010 = vunpack.c.l.b16 %v398
    %v1011 = vunpack.c.h.b16 %v398
    %v1012 = vunpack.c.l.b16 %v399
    %v1013 = vunpack.c.h.b16 %v399
    %v1014 = vunpack.c.l.b16 %v400
    %v1015 = vunpack.c.h.b16 %v400
    %v1016 = vunpack.c.l.b16 %v401
    %v1017 = vunpack.c.l.b16 %v402
    %v1018 = vunpack.c.h.b16 %v402
    %v1019 = vunpack.c.l.b16 %v403
    %v1020 = vunpack.c.h.b16 %v403
    %v1021 = vunpack.c.l.b16 %v404
    %v1022 = vunpack.c.h.b16 %v404
    %v1023 = vunpack.c.l.b16 %v405
    %v1024 = vunpack.c.l.b16 %v406
    %v1025 = vunpack.c.h.b16 %v406
    %v1026 = vunpack.c.l.b16 %v407
    %v1027 = vunpack.c.h.b16 %v407
    %v1028 = vunpack.c.l.b16 %v408
    %v1029 = vunpack.c.h.b16 %v408
    %v1030 = vunpack.c.l.b16 %v409
    %v1031 = vunpack.c.l.b16 %v410
    %v1032 = vunpack.c.h.b16 %v410
    %v1033 = vunpack.c.l.b16 %v411
    %v1034 = vunpack.c.h.b16 %v411
    %v1035 = vunpack.c.l.b16 %v412
    %v1036 = vunpack.c.h.b16 %v412
    %v1037 = vunpack.c.l.b16 %v413
    %v1038 = vunpack.c.l.b16 %v414
    %v1039 = vunpack.c.h.b16 %v414
    %v1040 = vunpack.c.l.b16 %v415
    %v1041 = vunpack.c.h.b16 %v415
    %v1042 = vunpack.c.l.b16 %v416
    %v1043 = vunpack.c.h.b16 %v416
    %v1044 = vunpack.c.l.b16 %v417
    %v1045 = vunpack.c.l.b16 %v418
    %v1046 = vunpack.c.h.b16 %v418
    %v1047 = vunpack.c.l.b16 %v419
    %v1048 = vunpack.c.h.b16 %v419
    %v1049 = vunpack.c.l.b16 %v420
    %v1050 = vunpack.c.h.b16 %v420
    %v1051 = vunpack.c.l.b16 %v421
    %v1052 = vunpack.c.l.b16 %v422
    %v1053 = vunpack.c.h.b16 %v422
    %v1054 = vunpack.c.l.b16 %v423
    %v1055 = vunpack.c.h.b16 %v423
    %v1056 = vunpack.c.l.b16 %v424
    %v1057 = vunpack.c.h.b16 %v424
    %v1058 = vunpack.c.l.b16 %v425
    %v1059 = vunpack.c.l.b16 %v426
    %v1060 = vunpack.c.h.b16 %v426
    %v1061 = vunpack.c.l.b16 %v427
    %v1062 = vunpack.c.h.b16 %v427
    %v1063 = vunpack.c.l.b16 %v428
    %v1064 = vunpack.c.h.b16 %v428
    %v1065 = vunpack.c.l.b16 %v429
    %v1066 = vunpack.c.l.b16 %v430
    %v1067 = vunpack.c.h.b16 %v430
    %v1068 = vunpack.c.l.b16 %v431
    %v1069 = vunpack.c.h.b16 %v431
    %v1070 = vunpack.c.l.b16 %v432
    %v1071 = vunpack.c.h.b16 %v432
    %v1072 = vunpack.c.l.b16 %v433
    %v1073 = vunpack.c.l.b16 %v434
    %v1074 = vunpack.c.h.b16 %v434
    %v1075 = vunpack.c.l.b16 %v435
    %v1076 = vunpack.c.h.b16 %v435
    %v1077 = vunpack.c.l.b16 %v436
    %v1078 = vunpack.c.h.b16 %v436
    %v1079 = vunpack.c.l.b16 %v437
    %v1080 = vunpack.c.l.b16 %v438
    %v1081 = vunpack.c.h.b16 %v438
    %v1082 = vunpack.c.l.b16 %v439
    %v1083 = vunpack.c.h.b16 %v439
    %v1084 = vunpack.c.l.b16 %v440
    %v1085 = vunpack.c.h.b16 %v440
    %v1086 = vunpack.c.l.b16 %v441
    %v1087 = vunpack.c.l.b16 %v442
    %v1088 = vunpack.c.h.b16 %v442
    %v1089 = vunpack.c.l.b16 %v443
    %v1090 = vunpack.c.h.b16 %v443
    %v1091 = vunpack.c.l.b16 %v444
    %v1092 = vunpack.c.h.b16 %v444
    %v1093 = vunpack.c.l.b16 %v445
    %v1094 = vunpack.c.l.b16 %v446
    %v1095 = vunpack.c.h.b16 %v446
    %v1096 = vunpack.c.l.b16 %v447
    %v1097 = vunpack.c.h.b16 %v447
    %v1098 = vunpack.c.l.b16 %v448
    %v1099 = vunpack.c.h.b16 %v448
    %v1100 = vunpack.c.l.b16 %v449
    %v1101 = vunpack.c.l.b16 %v450
    %v1102 = vunpack.c.h.b16 %v450
    %v1103 = vunpack.c.l.b16 %v451
    %v1104 = vunpack.c.h.b16 %v451
    %v1105 = vunpack.c.l.b16 %v452
    %v1106 = vunpack.c.h.b16 %v452
    %v1107 = vunpack.c.l.b16 %v453
    %v1108 = vunpack.c.l.b16 %v454
    %v1109 = vunpack.c.h.b16 %v454
    %v1110 = vunpack.c.l.b16 %v455
    %v1111 = vunpack.c.h.b16 %v455
    %v1112 = vunpack.c.l.b16 %v456
    %v1113 = vunpack.c.h.b16 %v456
    %v1114 = vunpack.c.l.b16 %v457
    %v1115 = vunpack.c.l.b16 %v458
    %v1116 = vunpack.c.h.b16 %v458
    %v1117 = vunpack.c.l.b16 %v459
    %v1118 = vunpack.c.h.b16 %v459
    %v1119 = vunpack.c.l.b16 %v460
    %v1120 = vunpack.c.h.b16 %v460
    %v1121 = vunpack.c.l.b16 %v461
    %v1122 = vunpack.c.l.b16 %v462
    %v1123 = vunpack.c.h.b16 %v462
    %v1124 = vunpack.c.l.b16 %v463
    %v1125 = vunpack.c.h.b16 %v463
    %v1126 = vunpack.c.l.b16 %v464
    %v1127 = vunpack.c.h.b16 %v464
    %v1128 = vunpack.c.l.b16 %v465
    %v1129 = vunpack.c.l.b16 %v466
    %v1130 = vunpack.c.h.b16 %v466
    %v1131 = vunpack.c.l.b16 %v467
    %v1132 = vunpack.c.h.b16 %v467
    %v1133 = vunpack.c.l.b16 %v468
    %v1134 = vunpack.c.h.b16 %v468
    %v1135 = vunpack.c.l.b16 %v469
    %v1136 = vunpack.c.l.b16 %v470
    %v1137 = vunpack.c.h.b16 %v470
    %v1138 = vunpack.c.l.b16 %v471
    %v1139 = vunpack.c.h.b16 %v471
    %v1140 = vunpack.c.l.b16 %v472
    %v1141 = vunpack.c.h.b16 %v472
    %v1142 = vunpack.c.l.b16 %v473
    %v1143 = vunpack.c.l.b16 %v474
    %v1144 = vunpack.c.h.b16 %v474
    %v1145 = vunpack.c.l.b16 %v475
    %v1146 = vunpack.c.h.b16 %v475
    %v1147 = vunpack.c.l.b16 %v476
    %v1148 = vunpack.c.h.b16 %v476
    %v1149 = vunpack.c.l.b16 %v477
    %v1150 = vunpack.c.l.b16 %v478
    %v1151 = vunpack.c.h.b16 %v478
    %v1152 = vunpack.c.l.b16 %v479
    %v1153 = vunpack.c.h.b16 %v479
    %v1154 = vunpack.c.l.b16 %v480
    %v1155 = vunpack.c.h.b16 %v480
    %v1156 = vunpack.c.l.b16 %v481
    %v1157 = vunpack.c.l.b16 %v482
    %v1158 = vunpack.c.h.b16 %v482
    %v1159 = vunpack.c.l.b16 %v483
    %v1160 = vunpack.c.h.b16 %v483
    %v1161 = vunpack.c.l.b16 %v484
    %v1162 = vunpack.c.h.b16 %v484
    %v1163 = vunpack.c.l.b16 %v485
    %v1164 = vunpack.c.l.b16 %v486
    %v1165 = vunpack.c.h.b16 %v486
    %v1166 = vunpack.c.l.b16 %v487
    %v1167 = vunpack.c.h.b16 %v487
    %v1168 = vunpack.c.l.b16 %v488
    %v1169 = vunpack.c.h.b16 %v488
    %v1170 = vunpack.c.l.b16 %v489
    %v1171 = vunpack.c.l.b16 %v490
    %v1172 = vunpack.c.h.b16 %v490
    %v1173 = vunpack.c.l.b16 %v491
    %v1174 = vunpack.c.h.b16 %v491
    %v1175 = vunpack.c.l.b16 %v492
    %v1176 = vunpack.c.h.b16 %v492
    %v1177 = vunpack.c.l.b16 %v493
    %v1178 = vunpack.c.l.b16 %v494
    %v1179 = vunpack.c.h.b16 %v494
    %v1180 = vunpack.c.l.b16 %v495
    %v1181 = vunpack.c.h.b16 %v495
    %v1182 = vunpack.c.l.b16 %v496
    %v1183 = vunpack.c.h.b16 %v496
    %v1184 = vunpack.c.l.b16 %v497
    %v1185 = vunpack.c.l.b16 %v498
    %v1186 = vunpack.c.h.b16 %v498
    %v1187 = vunpack.c.l.b16 %v499
    %v1188 = vunpack.c.h.b16 %v499
    %v1189 = vunpack.c.l.b16 %v500
    %v1190 = vunpack.c.h.b16 %v500
    %v1191 = vunpack.c.l.b16 %v501
    %v1192 = vunpack.c.l.b16 %v502
    %v1193 = vunpack.c.h.b16 %v502
    %v1194 = vunpack.c.l.b16 %v503
    %v1195 = vunpack.c.h.b16 %v503
    %v1196 = vunpack.c.l.b16 %v504
    %v1197 = vunpack.c.h.b16 %v504
    %v1198 = vunpack.c.l.b16 %v505
    %v1199 = vunpack.c.l.b16 %v506
    %v1200 = vunpack.c.h.b16 %v506
    %v1201 = vunpack.c.l.b16 %v507
    %v1202 = vunpack.c.h.b16 %v507
    %v1203 = vunpack.c.l.b16 %v508
    %v1204 = vunpack.c.h.b16 %v508
    %v1205 = vunpack.c.l.b16 %v509
    %v1206 = vunpack.c.l.b16 %v510
    %v1207 = vunpack.c.h.b16 %v510
    %v1208 = vunpack.c.l.b16 %v511
    %v1209 = vunpack.c.h.b16 %v511
    %v1210 = vunpack.c.l.b16 %v512
    %v1211 = vunpack.c.h.b16 %v512
    %v1212 = vunpack.c.l.b16 %v513
    %v1213 = vunpack.c.l.b16 %v514
    %v1214 = vunpack.c.h.b16 %v514
    %v1215 = vunpack.c.l.b16 %v515
    %v1216 = vunpack.c.h.b16 %v515
    %v1217 = vunpack.c.l.b16 %v516
    %v1218 = vunpack.c.h.b16 %v516
    %v1219 = vunpack.c.l.b16 %v517
    %v1220 = vunpack.c.l.b16 %v518
    %v1221 = vunpack.c.h.b16 %v518
    %v1222 = vunpack.c.l.b16 %v519
    %v1223 = vunpack.c.h.b16 %v519
    %v1224 = vunpack.c.l.b16 %v520
    %v1225 = vunpack.c.h.b16 %v520
    %v1226 = vunpack.c.l.b16 %v521
    %v1227 = vunpack.c.l.b16 %v522
    %v1228 = vunpack.c.h.b16 %v522
    %v1229 = vunpack.c.l.b16 %v523
    %v1230 = vunpack.c.h.b16 %v523
    %v1231 = vunpack.c.l.b16 %v524
    %v1232 = vunpack.c.h.b16 %v524
    %v1233 = vunpack.c.l.b16 %v525
    %v1234 = vunpack.c.l.b16 %v526
    %v1235 = vunpack.c.h.b16 %v526
    %v1236 = vunpack.c.l.b16 %v527
    %v1237 = vunpack.c.h.b16 %v527
    %v1238 = vunpack.c.l.b16 %v528
    %v1239 = vunpack.c.h.b16 %v528
    %v1240 = vunpack.c.l.b16 %v529
    %v1241 = vunpack.c.l.b16 %v530
    %v1242 = vunpack.c.h.b16 %v530
    %v1243 = vunpack.c.l.b16 %v531
    %v1244 = vunpack.c.h.b16 %v531
    %v1245 = vunpack.c.l.b16 %v532
    %v1246 = vunpack.c.h.b16 %v532
    %v1247 = vunpack.c.l.b16 %v533
    %v1248 = vunpack.c.l.b16 %v534
    %v1249 = vunpack.c.h.b16 %v534
    %v1250 = vunpack.c.l.b16 %v535
    %v1251 = vunpack.c.h.b16 %v535
    %v1252 = vunpack.c.l.b16 %v536
    %v1253 = vunpack.c.h.b16 %v536
    %v1254 = vunpack.c.l.b16 %v537
    %v1255 = vunpack.c.l.b16 %v538
    %v1256 = vunpack.c.h.b16 %v538
    %v1257 = vunpack.c.l.b16 %v539
    %v1258 = vunpack.c.h.b16 %v539
    %v1259 = vunpack.c.l.b16 %v540
    %v1260 = vunpack.c.h.b16 %v540
    %v1261 = vunpack.c.l.b16 %v541
    %v1262 = vpack.c.b16 %v821, %v814
    %v1263 = vpack.c.b16 %v822, %v815
    %v1264 = vpack.c.b16 %v823, %v816
    %v1265 = vpack.c.b16 %v824, %v817
    %v1266 = vpack.c.b16 %v825, %v818
    %v1267 = vpack.c.b16 %v826, %v819
    %v1268 = vpack.c.b16 %v827, %v820
    %v1269 = vpack.c.b16 %v835, %v828
    %v1270 = vpack.c.b16 %v836, %v829
    %v1271 = vpack.c.b16 %v837, %v830
    %v1272 = vpack.c.b16 %v838, %v831
    %v1273 = vpack.c.b16 %v839, %v832
    %v1274 = vpack.c.b16 %v840, %v833
    %v1275 = vpack.c.b16 %v841, %v834
    %v1276 = vpack.c.b16 %v849, %v842
    %v1277 = vpack.c.b16 %v850, %v843
    %v1278 = vpack.c.b16 %v851, %v844
    %v1279 = vpack.c.b16 %v852, %v845
    %v1280 = vpack.c.b16 %v853, %v846
    %v1281 = vpack.c.b16 %v854, %v847
    %v1282 = vpack.c.b16 %v855, %v848
    %v1283 = vpack.c.b16 %v863, %v856
    %v1284 = vpack.c.b16 %v864, %v857
    %v1285 = vpack.c.b16 %v865, %v858
    %v1286 = vpack.c.b16 %v866, %v859
    %v1287 = vpack.c.b16 %v867, %v860
    %v1288 = vpack.c.b16 %v868, %v861
    %v1289 = vpack.c.b16 %v869, %v862
    %v1290 = vpack.c.b16 %v877, %v870
    %v1291 = vpack.c.b16 %v878, %v871
    %v1292 = vpack.c.b16 %v879, %v872
    %v1293 = vpack.c.b16 %v880, %v873
    %v1294 = vpack.c.b16 %v881, %v874
    %v1295 = vpack.c.b16 %v882, %v875
    %v1296 = vpack.c.b16 %v883, %v876
    %v1297 = vpack.c.b16 %v891, %v884
    %v1298 = vpack.c.b16 %v892, %v885
    %v1299 = vpack.c.b16 %v893, %v886
    %v1300 = vpack.c.b16 %v894, %v887
    %v1301 = vpack.c.b16 %v895, %v888
    %v1302 = vpack.c.b16 %v896, %v889
    %v1303 = vpack.c.b16 %v897, %v890
    %v1304 = vpack.c.b16 %v905, %v898
    %v1305 = vpack.c.b16 %v906, %v899
    %v1306 = vpack.c.b16 %v907, %v900
    %v1307 = vpack.c.b16 %v908, %v901
    %v1308 = vpack.c.b16 %v909, %v902
    %v1309 = vpack.c.b16 %v910, %v903
    %v1310 = vpack.c.b16 %v911, %v904
    %v1311 = vpack.c.b16 %v919, %v912
    %v1312 = vpack.c.b16 %v920, %v913
    %v1313 = vpack.c.b16 %v921, %v914
    %v1314 = vpack.c.b16 %v922, %v915
    %v1315 = vpack.c.b16 %v923, %v916
    %v1316 = vpack.c.b16 %v924, %v917
    %v1317 = vpack.c.b16 %v925, %v918
    %v1318 = vpack.c.b16 %v933, %v926
    %v1319 = vpack.c.b16 %v934, %v927
    %v1320 = vpack.c.b16 %v935, %v928
    %v1321 = vpack.c.b16 %v936, %v929
    %v1322 = vpack.c.b16 %v937, %v930
    %v1323 = vpack.c.b16 %v938, %v931
    %v1324 = vpack.c.b16 %v939, %v932
    %v1325 = vpack.c.b16 %v947, %v940
    %v1326 = vpack.c.b16 %v948, %v941
    %v1327 = vpack.c.b16 %v949, %v942
    %v1328 = vpack.c.b16 %v950, %v943
    %v1329 = vpack.c.b16 %v951, %v944
    %v1330 = vpack.c.b16 %v952, %v945
    %v1331 = vpack.c.b16 %v953, %v946
    %v1332 = vpack.c.b16 %v961, %v954
    %v1333 = vpack.c.b16 %v962, %v955
    %v1334 = vpack.c.b16 %v963, %v956
    %v1335 = vpack.c.b16 %v964, %v957
    %v1336 = vpack.c.b16 %v965, %v958
    %v1337 = vpack.c.b16 %v966, %v959
    %v1338 = vpack.c.b16 %v967, %v960
    %v1339 = vpack.c.b16 %v975, %v968
    %v1340 = vpack.c.b16 %v976, %v969
    %v1341 = vpack.c.b16 %v977, %v970
    %v1342 = vpack.c.b16 %v978, %v971
    %v1343 = vpack.c.b16 %v979, %v972
    %v1344 = vpack.c.b16 %v980, %v973
    %v1345 = vpack.c.b16 %v981, %v974
    %v1346 = vpack.c.b16 %v989, %v982
    %v1347 = vpack.c.b16 %v990, %v983
    %v1348 = vpack.c.b16 %v991, %v984
    %v1349 = vpack.c.b16 %v992, %v985
    %v1350 = vpack.c.b16 %v993, %v986
    %v1351 = vpack.c.b16 %v994, %v987
    %v1352 = vpack.c.b16 %v995, %v988
    %v1353 = vpack.c.b16 %v1003, %v996
    %v1354 = vpack.c.b16 %v1004, %v997
    %v1355 = vpack.c.b16 %v1005, %v998
    %v1356 = vpack.c.b16 %v1006, %v999
    %v1357 = vpack.c.b16 %v1007, %v1000
    %v1358 = vpack.c.b16 %v1008, %v1001
    %v1359 = vpack.c.b16 %v1009, %v1002
    %v1360 = vpack.c.b16 %v1017, %v1010
    %v1361 = vpack.c.b16 %v1018, %v1011
    %v1362 = vpack.c.b16 %v1019, %v1012
    %v1363 = vpack.c.b16 %v1020, %v1013
    %v1364 = vpack.c.b16 %v1021, %v1014
    %v1365 = vpack.c.b16 %v1022, %v1015
    %v1366 = vpack.c.b16 %v1023, %v1016
    %v1367 = vpack.c.b16 %v1031, %v1024
    %v1368 = vpack.c.b16 %v1032, %v1025
    %v1369 = vpack.c.b16 %v1033, %v1026
    %v1370 = vpack.c.b16 %v1034, %v1027
    %v1371 = vpack.c.b16 %v1035, %v1028
    %v1372 = vpack.c.b16 %v1036, %v1029
    %v1373 = vpack.c.b16 %v1037, %v1030
    %v1374 = vpack.c.b16 %v1045, %v1038
    %v1375 = vpack.c.b16 %v1046, %v1039
    %v1376 = vpack.c.b16 %v1047, %v1040
    %v1377 = vpack.c.b16 %v1048, %v1041
    %v1378 = vpack.c.b16 %v1049, %v1042
    %v1379 = vpack.c.b16 %v1050, %v1043
    %v1380 = vpack.c.b16 %v1051, %v1044
    %v1381 = vpack.c.b16 %v1059, %v1052
    %v1382 = vpack.c.b16 %v1060, %v1053
    %v1383 = vpack.c.b16 %v1061, %v1054
    %v1384 = vpack.c.b16 %v1062, %v1055
    %v1385 = vpack.c.b16 %v1063, %v1056
    %v1386 = vpack.c.b16 %v1064, %v1057
    %v1387 = vpack.c.b16 %v1065, %v1058
    %v1388 = vpack.c.b16 %v1073, %v1066
    %v1389 = vpack.c.b16 %v1074, %v1067
    %v1390 = vpack.c.b16 %v1075, %v1068
    %v1391 = vpack.c.b16 %v1076, %v1069
    %v1392 = vpack.c.b16 %v1077, %v1070
    %v1393 = vpack.c.b16 %v1078, %v1071
    %v1394 = vpack.c.b16 %v1079, %v1072
    %v1395 = vpack.c.b16 %v1087, %v1080
    %v1396 = vpack.c.b16 %v1088, %v1081
    %v1397 = vpack.c.b16 %v1089, %v1082
    %v1398 = vpack.c.b16 %v1090, %v1083
    %v1399 = vpack.c.b16 %v1091, %v1084
    %v1400 = vpack.c.b16 %v1092, %v1085
    %v1401 = vpack.c.b16 %v1093, %v1086
    %v1402 = vpack.c.b16 %v1101, %v1094
    %v1403 = vpack.c.b16 %v1102, %v1095
    %v1404 = vpack.c.b16 %v1103, %v1096
    %v1405 = vpack.c.b16 %v1104, %v1097
    %v1406 = vpack.c.b16 %v1105, %v1098
    %v1407 = vpack.c.b16 %v1106, %v1099
    %v1408 = vpack.c.b16 %v1107, %v1100
    %v1409 = vpack.c.b16 %v1115, %v1108
    %v1410 = vpack.c.b16 %v1116, %v1109
    %v1411 = vpack.c.b16 %v1117, %v1110
    %v1412 = vpack.c.b16 %v1118, %v1111
    %v1413 = vpack.c.b16 %v1119, %v1112
    %v1414 = vpack.c.b16 %v1120, %v1113
    %v1415 = vpack.c.b16 %v1121, %v1114
    %v1416 = vpack.c.b16 %v1129, %v1122
    %v1417 = vpack.c.b16 %v1130, %v1123
    %v1418 = vpack.c.b16 %v1131, %v1124
    %v1419 = vpack.c.b16 %v1132, %v1125
    %v1420 = vpack.c.b16 %v1133, %v1126
    %v1421 = vpack.c.b16 %v1134, %v1127
    %v1422 = vpack.c.b16 %v1135, %v1128
    %v1423 = vpack.c.b16 %v1143, %v1136
    %v1424 = vpack.c.b16 %v1144, %v1137
    %v1425 = vpack.c.b16 %v1145, %v1138
    %v1426 = vpack.c.b16 %v1146, %v1139
    %v1427 = vpack.c.b16 %v1147, %v1140
    %v1428 = vpack.c.b16 %v1148, %v1141
    %v1429 = vpack.c.b16 %v1149, %v1142
    %v1430 = vpack.c.b16 %v1157, %v1150
    %v1431 = vpack.c.b16 %v1158, %v1151
    %v1432 = vpack.c.b16 %v1159, %v1152
    %v1433 = vpack.c.b16 %v1160, %v1153
    %v1434 = vpack.c.b16 %v1161, %v1154
    %v1435 = vpack.c.b16 %v1162, %v1155
    %v1436 = vpack.c.b16 %v1163, %v1156
    %v1437 = vpack.c.b16 %v1171, %v1164
    %v1438 = vpack.c.b16 %v1172, %v1165
    %v1439 = vpack.c.b16 %v1173, %v1166
    %v1440 = vpack.c.b16 %v1174, %v1167
    %v1441 = vpack.c.b16 %v1175, %v1168
    %v1442 = vpack.c.b16 %v1176, %v1169
    %v1443 = vpack.c.b16 %v1177, %v1170
    %v1444 = vpack.c.b16 %v1185, %v1178
    %v1445 = vpack.c.b16 %v1186, %v1179
    %v1446 = vpack.c.b16 %v1187, %v1180
    %v1447 = vpack.c.b16 %v1188, %v1181
    %v1448 = vpack.c.b16 %v1189, %v1182
    %v1449 = vpack.c.b16 %v1190, %v1183
    %v1450 = vpack.c.b16 %v1191, %v1184
    %v1451 = vpack.c.b16 %v1199, %v1192
    %v1452 = vpack.c.b16 %v1200, %v1193
    %v1453 = vpack.c.b16 %v1201, %v1194
    %v1454 = vpack.c.b16 %v1202, %v1195
    %v1455 = vpack.c.b16 %v1203, %v1196
    %v1456 = vpack.c.b16 %v1204, %v1197
    %v1457 = vpack.c.b16 %v1205, %v1198
    %v1458 = vpack.c.b16 %v1213, %v1206
    %v1459 = vpack.c.b16 %v1214, %v1207
    %v1460 = vpack.c.b16 %v1215, %v1208
    %v1461 = vpack.c.b16 %v1216, %v1209
    %v1462 = vpack.c.b16 %v1217, %v1210
    %v1463 = vpack.c.b16 %v1218, %v1211
    %v1464 = vpack.c.b16 %v1219, %v1212
    %v1465 = vpack.c.b16 %v1227, %v1220
    %v1466 = vpack.c.b16 %v1228, %v1221
    %v1467 = vpack.c.b16 %v1229, %v1222
    %v1468 = vpack.c.b16 %v1230, %v1223
    %v1469 = vpack.c.b16 %v1231, %v1224
    %v1470 = vpack.c.b16 %v1232, %v1225
    %v1471 = vpack.c.b16 %v1233, %v1226
    %v1472 = vpack.c.b16 %v1241, %v1234
    %v1473 = vpack.c.b16 %v1242, %v1235
    %v1474 = vpack.c.b16 %v1243, %v1236
    %v1475 = vpack.c.b16 %v1244, %v1237
    %v1476 = vpack.c.b16 %v1245, %v1238
    %v1477 = vpack.c.b16 %v1246, %v1239
    %v1478 = vpack.c.b16 %v1247, %v1240
    %v1479 = vpack.c.b16 %v1255, %v1248
    %v1480 = vpack.c.b16 %v1256, %v1249
    %v1481 = vpack.c.b16 %v1257, %v1250
    %v1482 = vpack.c.b16 %v1258, %v1251
    %v1483 = vpack.c.b16 %v1259, %v1252
    %v1484 = vpack.c.b16 %v1260, %v1253
    %v1485 = vpack.c.b16 %v1261, %v1254
    %1710 = vmatpush.bf16.msra.mxu0 %v1311
    %1711 = vmatpush.bf16.msra.mxu0 %v1304
    %1712 = vmatpush.bf16.msra.mxu0 %v1297
    %1713 = vmatpush.bf16.msra.mxu0 %v1290
    %1714 = vmatpush.bf16.msra.mxu0 %v1283
    %1715 = vmatpush.bf16.msra.mxu0 %v1276
    %1716 = vmatpush.bf16.msra.mxu0 %v1269
    %1717 = vmatpush.bf16.msra.mxu0 %v1262
    %1718 = vmatmul.bf16.gmra.mxu0 %v270
    %v1719 = vpop.f32.mrf.mxu0
    %v1720 = vadd.f32 %v544, %v1719
    %v1721 = vpop.f32.mrf.mxu0
    %v1722 = vadd.f32 %v544, %v1721
    %1723 = vmatmul.bf16.gmra.mxu0 %v274
    %v1724 = vpop.f32.mrf.mxu0
    %v1725 = vadd.f32 %v544, %v1724
    %v1726 = vpop.f32.mrf.mxu0
    %v1727 = vadd.f32 %v544, %v1726
    %1728 = vmatmul.bf16.gmra.mxu0 %v278
    %v1729 = vpop.f32.mrf.mxu0
    %v1730 = vadd.f32 %v544, %v1729
    %v1731 = vpop.f32.mrf.mxu0
    %v1732 = vadd.f32 %v544, %v1731
    %1733 = vmatmul.bf16.gmra.mxu0 %v282
    %v1734 = vpop.f32.mrf.mxu0
    %v1735 = vadd.f32 %v544, %v1734
    %v1736 = vpop.f32.mrf.mxu0
    %v1737 = vadd.f32 %v544, %v1736
    %1738 = vdwg.mxu0
    %1739 = vmatpush.bf16.msra.mxu0 %v1367
    %1740 = vmatpush.bf16.msra.mxu0 %v1360
    %1741 = vmatpush.bf16.msra.mxu0 %v1353
    %1742 = vmatpush.bf16.msra.mxu0 %v1346
    %1743 = vmatpush.bf16.msra.mxu0 %v1339
    %1744 = vmatpush.bf16.msra.mxu0 %v1332
    %1745 = vmatpush.bf16.msra.mxu0 %v1325
    %1746 = vmatpush.bf16.msra.mxu0 %v1318
    %1747 = vmatmul.bf16.gmra.mxu0 %v271
    %v1748 = vpop.f32.mrf.mxu0
    %v1749 = vadd.f32 %v1720, %v1748
    %v1750 = vpop.f32.mrf.mxu0
    %v1751 = vadd.f32 %v1722, %v1750
    %1752 = vmatmul.bf16.gmra.mxu0 %v275
    %v1753 = vpop.f32.mrf.mxu0
    %v1754 = vadd.f32 %v1725, %v1753
    %v1755 = vpop.f32.mrf.mxu0
    %v1756 = vadd.f32 %v1727, %v1755
    %1757 = vmatmul.bf16.gmra.mxu0 %v279
    %v1758 = vpop.f32.mrf.mxu0
    %v1759 = vadd.f32 %v1730, %v1758
    %v1760 = vpop.f32.mrf.mxu0
    %v1761 = vadd.f32 %v1732, %v1760
    %1762 = vmatmul.bf16.gmra.mxu0 %v283
    %v1763 = vpop.f32.mrf.mxu0
    %v1764 = vadd.f32 %v1735, %v1763
    %v1765 = vpop.f32.mrf.mxu0
    %v1766 = vadd.f32 %v1737, %v1765
    %1767 = vdwg.mxu0
    %1768 = vmatpush.bf16.msra.mxu0 %v1423
    %1769 = vmatpush.bf16.msra.mxu0 %v1416
    %1770 = vmatpush.bf16.msra.mxu0 %v1409
    %1771 = vmatpush.bf16.msra.mxu0 %v1402
    %1772 = vmatpush.bf16.msra.mxu0 %v1395
    %1773 = vmatpush.bf16.msra.mxu0 %v1388
    %1774 = vmatpush.bf16.msra.mxu0 %v1381
    %1775 = vmatpush.bf16.msra.mxu0 %v1374
    %1776 = vmatmul.bf16.gmra.mxu0 %v272
    %v1777 = vpop.f32.mrf.mxu0
    %v1778 = vadd.f32 %v1749, %v1777
    %v1779 = vpop.f32.mrf.mxu0
    %v1780 = vadd.f32 %v1751, %v1779
    %1781 = vmatmul.bf16.gmra.mxu0 %v276
    %v1782 = vpop.f32.mrf.mxu0
    %v1783 = vadd.f32 %v1754, %v1782
    %v1784 = vpop.f32.mrf.mxu0
    %v1785 = vadd.f32 %v1756, %v1784
    %1786 = vmatmul.bf16.gmra.mxu0 %v280
    %v1787 = vpop.f32.mrf.mxu0
    %v1788 = vadd.f32 %v1759, %v1787
    %v1789 = vpop.f32.mrf.mxu0
    %v1790 = vadd.f32 %v1761, %v1789
    %1791 = vmatmul.bf16.gmra.mxu0 %v284
    %v1792 = vpop.f32.mrf.mxu0
    %v1793 = vadd.f32 %v1764, %v1792
    %v1794 = vpop.f32.mrf.mxu0
    %v1795 = vadd.f32 %v1766, %v1794
    %1796 = vdwg.mxu0
    %1797 = vmatpush.bf16.msra.mxu0 %v1479
    %1798 = vmatpush.bf16.msra.mxu0 %v1472
    %1799 = vmatpush.bf16.msra.mxu0 %v1465
    %1800 = vmatpush.bf16.msra.mxu0 %v1458
    %1801 = vmatpush.bf16.msra.mxu0 %v1451
    %1802 = vmatpush.bf16.msra.mxu0 %v1444
    %1803 = vmatpush.bf16.msra.mxu0 %v1437
    %1804 = vmatpush.bf16.msra.mxu0 %v1430
    %1805 = vmatmul.bf16.gmra.mxu0 %v273
    %v1806 = vpop.f32.mrf.mxu0
    %v1807 = vadd.f32 %v1778, %v1806
    %v1808 = vpop.f32.mrf.mxu0
    %v1809 = vadd.f32 %v1780, %v1808
    %1810 = vmatmul.bf16.gmra.mxu0 %v277
    %v1811 = vpop.f32.mrf.mxu0
    %v1812 = vadd.f32 %v1783, %v1811
    %v1813 = vpop.f32.mrf.mxu0
    %v1814 = vadd.f32 %v1785, %v1813
    %1815 = vmatmul.bf16.gmra.mxu0 %v281
    %v1816 = vpop.f32.mrf.mxu0
    %v1817 = vadd.f32 %v1788, %v1816
    %v1818 = vpop.f32.mrf.mxu0
    %v1819 = vadd.f32 %v1790, %v1818
    %1820 = vmatmul.bf16.gmra.mxu0 %v285
    %v1821 = vpop.f32.mrf.mxu0
    %v1822 = vadd.f32 %v1793, %v1821
    %v1823 = vpop.f32.mrf.mxu0
    %v1824 = vadd.f32 %v1795, %v1823
    %1825 = vdwg.mxu0
    %1826 = vmatpush.bf16.msra.mxu0 %v1312
    %1827 = vmatpush.bf16.msra.mxu0 %v1305
    %1828 = vmatpush.bf16.msra.mxu0 %v1298
    %1829 = vmatpush.bf16.msra.mxu0 %v1291
    %1830 = vmatpush.bf16.msra.mxu0 %v1284
    %1831 = vmatpush.bf16.msra.mxu0 %v1277
    %1832 = vmatpush.bf16.msra.mxu0 %v1270
    %1833 = vmatpush.bf16.msra.mxu0 %v1263
    %1834 = vmatmul.bf16.gmra.mxu0 %v270
    %v1835 = vpop.f32.mrf.mxu0
    %v1836 = vadd.f32 %v545, %v1835
    %v1837 = vpop.f32.mrf.mxu0
    %v1838 = vadd.f32 %v545, %v1837
    %1839 = vmatmul.bf16.gmra.mxu0 %v274
    %v1840 = vpop.f32.mrf.mxu0
    %v1841 = vadd.f32 %v545, %v1840
    %v1842 = vpop.f32.mrf.mxu0
    %v1843 = vadd.f32 %v545, %v1842
    %1844 = vmatmul.bf16.gmra.mxu0 %v278
    %v1845 = vpop.f32.mrf.mxu0
    %v1846 = vadd.f32 %v545, %v1845
    %v1847 = vpop.f32.mrf.mxu0
    %v1848 = vadd.f32 %v545, %v1847
    %1849 = vmatmul.bf16.gmra.mxu0 %v282
    %v1850 = vpop.f32.mrf.mxu0
    %v1851 = vadd.f32 %v545, %v1850
    %v1852 = vpop.f32.mrf.mxu0
    %v1853 = vadd.f32 %v545, %v1852
    %1854 = vdwg.mxu0
    %1855 = vmatpush.bf16.msra.mxu0 %v1368
    %1856 = vmatpush.bf16.msra.mxu0 %v1361
    %1857 = vmatpush.bf16.msra.mxu0 %v1354
    %1858 = vmatpush.bf16.msra.mxu0 %v1347
    %1859 = vmatpush.bf16.msra.mxu0 %v1340
    %1860 = vmatpush.bf16.msra.mxu0 %v1333
    %1861 = vmatpush.bf16.msra.mxu0 %v1326
    %1862 = vmatpush.bf16.msra.mxu0 %v1319
    %1863 = vmatmul.bf16.gmra.mxu0 %v271
    %v1864 = vpop.f32.mrf.mxu0
    %v1865 = vadd.f32 %v1836, %v1864
    %v1866 = vpop.f32.mrf.mxu0
    %v1867 = vadd.f32 %v1838, %v1866
    %1868 = vmatmul.bf16.gmra.mxu0 %v275
    %v1869 = vpop.f32.mrf.mxu0
    %v1870 = vadd.f32 %v1841, %v1869
    %v1871 = vpop.f32.mrf.mxu0
    %v1872 = vadd.f32 %v1843, %v1871
    %1873 = vmatmul.bf16.gmra.mxu0 %v279
    %v1874 = vpop.f32.mrf.mxu0
    %v1875 = vadd.f32 %v1846, %v1874
    %v1876 = vpop.f32.mrf.mxu0
    %v1877 = vadd.f32 %v1848, %v1876
    %1878 = vmatmul.bf16.gmra.mxu0 %v283
    %v1879 = vpop.f32.mrf.mxu0
    %v1880 = vadd.f32 %v1851, %v1879
    %v1881 = vpop.f32.mrf.mxu0
    %v1882 = vadd.f32 %v1853, %v1881
    %1883 = vdwg.mxu0
    %1884 = vmatpush.bf16.msra.mxu0 %v1424
    %1885 = vmatpush.bf16.msra.mxu0 %v1417
    %1886 = vmatpush.bf16.msra.mxu0 %v1410
    %1887 = vmatpush.bf16.msra.mxu0 %v1403
    %1888 = vmatpush.bf16.msra.mxu0 %v1396
    %1889 = vmatpush.bf16.msra.mxu0 %v1389
    %1890 = vmatpush.bf16.msra.mxu0 %v1382
    %1891 = vmatpush.bf16.msra.mxu0 %v1375
    %1892 = vmatmul.bf16.gmra.mxu0 %v272
    %v1893 = vpop.f32.mrf.mxu0
    %v1894 = vadd.f32 %v1865, %v1893
    %v1895 = vpop.f32.mrf.mxu0
    %v1896 = vadd.f32 %v1867, %v1895
    %1897 = vmatmul.bf16.gmra.mxu0 %v276
    %v1898 = vpop.f32.mrf.mxu0
    %v1899 = vadd.f32 %v1870, %v1898
    %v1900 = vpop.f32.mrf.mxu0
    %v1901 = vadd.f32 %v1872, %v1900
    %1902 = vmatmul.bf16.gmra.mxu0 %v280
    %v1903 = vpop.f32.mrf.mxu0
    %v1904 = vadd.f32 %v1875, %v1903
    %v1905 = vpop.f32.mrf.mxu0
    %v1906 = vadd.f32 %v1877, %v1905
    %1907 = vmatmul.bf16.gmra.mxu0 %v284
    %v1908 = vpop.f32.mrf.mxu0
    %v1909 = vadd.f32 %v1880, %v1908
    %v1910 = vpop.f32.mrf.mxu0
    %v1911 = vadd.f32 %v1882, %v1910
    %1912 = vdwg.mxu0
    %1913 = vmatpush.bf16.msra.mxu0 %v1480
    %1914 = vmatpush.bf16.msra.mxu0 %v1473
    %1915 = vmatpush.bf16.msra.mxu0 %v1466
    %1916 = vmatpush.bf16.msra.mxu0 %v1459
    %1917 = vmatpush.bf16.msra.mxu0 %v1452
    %1918 = vmatpush.bf16.msra.mxu0 %v1445
    %1919 = vmatpush.bf16.msra.mxu0 %v1438
    %1920 = vmatpush.bf16.msra.mxu0 %v1431
    %1921 = vmatmul.bf16.gmra.mxu0 %v273
    %v1922 = vpop.f32.mrf.mxu0
    %v1923 = vadd.f32 %v1894, %v1922
    %v1924 = vpop.f32.mrf.mxu0
    %v1925 = vadd.f32 %v1896, %v1924
    %1926 = vmatmul.bf16.gmra.mxu0 %v277
    %v1927 = vpop.f32.mrf.mxu0
    %v1928 = vadd.f32 %v1899, %v1927
    %v1929 = vpop.f32.mrf.mxu0
    %v1930 = vadd.f32 %v1901, %v1929
    %1931 = vmatmul.bf16.gmra.mxu0 %v281
    %v1932 = vpop.f32.mrf.mxu0
    %v1933 = vadd.f32 %v1904, %v1932
    %v1934 = vpop.f32.mrf.mxu0
    %v1935 = vadd.f32 %v1906, %v1934
    %1936 = vmatmul.bf16.gmra.mxu0 %v285
    %v1937 = vpop.f32.mrf.mxu0
    %v1938 = vadd.f32 %v1909, %v1937
    %v1939 = vpop.f32.mrf.mxu0
    %v1940 = vadd.f32 %v1911, %v1939
    %1941 = vdwg.mxu0
    %1942 = vmatpush.bf16.msra.mxu0 %v1313
    %1943 = vmatpush.bf16.msra.mxu0 %v1306
    %1944 = vmatpush.bf16.msra.mxu0 %v1299
    %1945 = vmatpush.bf16.msra.mxu0 %v1292
    %1946 = vmatpush.bf16.msra.mxu0 %v1285
    %1947 = vmatpush.bf16.msra.mxu0 %v1278
    %1948 = vmatpush.bf16.msra.mxu0 %v1271
    %1949 = vmatpush.bf16.msra.mxu0 %v1264
    %1950 = vmatmul.bf16.gmra.mxu0 %v270
    %v1951 = vpop.f32.mrf.mxu0
    %v1952 = vadd.f32 %v546, %v1951
    %v1953 = vpop.f32.mrf.mxu0
    %v1954 = vadd.f32 %v546, %v1953
    %1955 = vmatmul.bf16.gmra.mxu0 %v274
    %v1956 = vpop.f32.mrf.mxu0
    %v1957 = vadd.f32 %v546, %v1956
    %v1958 = vpop.f32.mrf.mxu0
    %v1959 = vadd.f32 %v546, %v1958
    %1960 = vmatmul.bf16.gmra.mxu0 %v278
    %v1961 = vpop.f32.mrf.mxu0
    %v1962 = vadd.f32 %v546, %v1961
    %v1963 = vpop.f32.mrf.mxu0
    %v1964 = vadd.f32 %v546, %v1963
    %1965 = vmatmul.bf16.gmra.mxu0 %v282
    %v1966 = vpop.f32.mrf.mxu0
    %v1967 = vadd.f32 %v546, %v1966
    %v1968 = vpop.f32.mrf.mxu0
    %v1969 = vadd.f32 %v546, %v1968
    %1970 = vdwg.mxu0
    %1971 = vmatpush.bf16.msra.mxu0 %v1369
    %1972 = vmatpush.bf16.msra.mxu0 %v1362
    %1973 = vmatpush.bf16.msra.mxu0 %v1355
    %1974 = vmatpush.bf16.msra.mxu0 %v1348
    %1975 = vmatpush.bf16.msra.mxu0 %v1341
    %1976 = vmatpush.bf16.msra.mxu0 %v1334
    %1977 = vmatpush.bf16.msra.mxu0 %v1327
    %1978 = vmatpush.bf16.msra.mxu0 %v1320
    %1979 = vmatmul.bf16.gmra.mxu0 %v271
    %v1980 = vpop.f32.mrf.mxu0
    %v1981 = vadd.f32 %v1952, %v1980
    %v1982 = vpop.f32.mrf.mxu0
    %v1983 = vadd.f32 %v1954, %v1982
    %1984 = vmatmul.bf16.gmra.mxu0 %v275
    %v1985 = vpop.f32.mrf.mxu0
    %v1986 = vadd.f32 %v1957, %v1985
    %v1987 = vpop.f32.mrf.mxu0
    %v1988 = vadd.f32 %v1959, %v1987
    %1989 = vmatmul.bf16.gmra.mxu0 %v279
    %v1990 = vpop.f32.mrf.mxu0
    %v1991 = vadd.f32 %v1962, %v1990
    %v1992 = vpop.f32.mrf.mxu0
    %v1993 = vadd.f32 %v1964, %v1992
    %1994 = vmatmul.bf16.gmra.mxu0 %v283
    %v1995 = vpop.f32.mrf.mxu0
    %v1996 = vadd.f32 %v1967, %v1995
    %v1997 = vpop.f32.mrf.mxu0
    %v1998 = vadd.f32 %v1969, %v1997
    %1999 = vdwg.mxu0
    %2000 = vmatpush.bf16.msra.mxu0 %v1425
    %2001 = vmatpush.bf16.msra.mxu0 %v1418
    %2002 = vmatpush.bf16.msra.mxu0 %v1411
    %2003 = vmatpush.bf16.msra.mxu0 %v1404
    %2004 = vmatpush.bf16.msra.mxu0 %v1397
    %2005 = vmatpush.bf16.msra.mxu0 %v1390
    %2006 = vmatpush.bf16.msra.mxu0 %v1383
    %2007 = vmatpush.bf16.msra.mxu0 %v1376
    %2008 = vmatmul.bf16.gmra.mxu0 %v272
    %v2009 = vpop.f32.mrf.mxu0
    %v2010 = vadd.f32 %v1981, %v2009
    %v2011 = vpop.f32.mrf.mxu0
    %v2012 = vadd.f32 %v1983, %v2011
    %2013 = vmatmul.bf16.gmra.mxu0 %v276
    %v2014 = vpop.f32.mrf.mxu0
    %v2015 = vadd.f32 %v1986, %v2014
    %v2016 = vpop.f32.mrf.mxu0
    %v2017 = vadd.f32 %v1988, %v2016
    %2018 = vmatmul.bf16.gmra.mxu0 %v280
    %v2019 = vpop.f32.mrf.mxu0
    %v2020 = vadd.f32 %v1991, %v2019
    %v2021 = vpop.f32.mrf.mxu0
    %v2022 = vadd.f32 %v1993, %v2021
    %2023 = vmatmul.bf16.gmra.mxu0 %v284
    %v2024 = vpop.f32.mrf.mxu0
    %v2025 = vadd.f32 %v1996, %v2024
    %v2026 = vpop.f32.mrf.mxu0
    %v2027 = vadd.f32 %v1998, %v2026
    %2028 = vdwg.mxu0
    %2029 = vmatpush.bf16.msra.mxu0 %v1481
    %2030 = vmatpush.bf16.msra.mxu0 %v1474
    %2031 = vmatpush.bf16.msra.mxu0 %v1467
    %2032 = vmatpush.bf16.msra.mxu0 %v1460
    %2033 = vmatpush.bf16.msra.mxu0 %v1453
    %2034 = vmatpush.bf16.msra.mxu0 %v1446
    %2035 = vmatpush.bf16.msra.mxu0 %v1439
    %2036 = vmatpush.bf16.msra.mxu0 %v1432
    %2037 = vmatmul.bf16.gmra.mxu0 %v273
    %v2038 = vpop.f32.mrf.mxu0
    %v2039 = vadd.f32 %v2010, %v2038
    %v2040 = vpop.f32.mrf.mxu0
    %v2041 = vadd.f32 %v2012, %v2040
    %2042 = vmatmul.bf16.gmra.mxu0 %v277
    %v2043 = vpop.f32.mrf.mxu0
    %v2044 = vadd.f32 %v2015, %v2043
    %v2045 = vpop.f32.mrf.mxu0
    %v2046 = vadd.f32 %v2017, %v2045
    %2047 = vmatmul.bf16.gmra.mxu0 %v281
    %v2048 = vpop.f32.mrf.mxu0
    %v2049 = vadd.f32 %v2020, %v2048
    %v2050 = vpop.f32.mrf.mxu0
    %v2051 = vadd.f32 %v2022, %v2050
    %2052 = vmatmul.bf16.gmra.mxu0 %v285
    %v2053 = vpop.f32.mrf.mxu0
    %v2054 = vadd.f32 %v2025, %v2053
    %v2055 = vpop.f32.mrf.mxu0
    %v2056 = vadd.f32 %v2027, %v2055
    %2057 = vdwg.mxu0
    %2058 = vmatpush.bf16.msra.mxu0 %v1314
    %2059 = vmatpush.bf16.msra.mxu0 %v1307
    %2060 = vmatpush.bf16.msra.mxu0 %v1300
    %2061 = vmatpush.bf16.msra.mxu0 %v1293
    %2062 = vmatpush.bf16.msra.mxu0 %v1286
    %2063 = vmatpush.bf16.msra.mxu0 %v1279
    %2064 = vmatpush.bf16.msra.mxu0 %v1272
    %2065 = vmatpush.bf16.msra.mxu0 %v1265
    %2066 = vmatmul.bf16.gmra.mxu0 %v270
    %v2067 = vpop.f32.mrf.mxu0
    %v2068 = vadd.f32 %v547, %v2067
    %v2069 = vpop.f32.mrf.mxu0
    %v2070 = vadd.f32 %v547, %v2069
    %2071 = vmatmul.bf16.gmra.mxu0 %v274
    %v2072 = vpop.f32.mrf.mxu0
    %v2073 = vadd.f32 %v547, %v2072
    %v2074 = vpop.f32.mrf.mxu0
    %v2075 = vadd.f32 %v547, %v2074
    %2076 = vmatmul.bf16.gmra.mxu0 %v278
    %v2077 = vpop.f32.mrf.mxu0
    %v2078 = vadd.f32 %v547, %v2077
    %v2079 = vpop.f32.mrf.mxu0
    %v2080 = vadd.f32 %v547, %v2079
    %2081 = vmatmul.bf16.gmra.mxu0 %v282
    %v2082 = vpop.f32.mrf.mxu0
    %v2083 = vadd.f32 %v547, %v2082
    %v2084 = vpop.f32.mrf.mxu0
    %v2085 = vadd.f32 %v547, %v2084
    %2086 = vdwg.mxu0
    %2087 = vmatpush.bf16.msra.mxu0 %v1370
    %2088 = vmatpush.bf16.msra.mxu0 %v1363
    %2089 = vmatpush.bf16.msra.mxu0 %v1356
    %2090 = vmatpush.bf16.msra.mxu0 %v1349
    %2091 = vmatpush.bf16.msra.mxu0 %v1342
    %2092 = vmatpush.bf16.msra.mxu0 %v1335
    %2093 = vmatpush.bf16.msra.mxu0 %v1328
    %2094 = vmatpush.bf16.msra.mxu0 %v1321
    %2095 = vmatmul.bf16.gmra.mxu0 %v271
    %v2096 = vpop.f32.mrf.mxu0
    %v2097 = vadd.f32 %v2068, %v2096
    %v2098 = vpop.f32.mrf.mxu0
    %v2099 = vadd.f32 %v2070, %v2098
    %2100 = vmatmul.bf16.gmra.mxu0 %v275
    %v2101 = vpop.f32.mrf.mxu0
    %v2102 = vadd.f32 %v2073, %v2101
    %v2103 = vpop.f32.mrf.mxu0
    %v2104 = vadd.f32 %v2075, %v2103
    %2105 = vmatmul.bf16.gmra.mxu0 %v279
    %v2106 = vpop.f32.mrf.mxu0
    %v2107 = vadd.f32 %v2078, %v2106
    %v2108 = vpop.f32.mrf.mxu0
    %v2109 = vadd.f32 %v2080, %v2108
    %2110 = vmatmul.bf16.gmra.mxu0 %v283
    %v2111 = vpop.f32.mrf.mxu0
    %v2112 = vadd.f32 %v2083, %v2111
    %v2113 = vpop.f32.mrf.mxu0
    %v2114 = vadd.f32 %v2085, %v2113
    %2115 = vdwg.mxu0
    %2116 = vmatpush.bf16.msra.mxu0 %v1426
    %2117 = vmatpush.bf16.msra.mxu0 %v1419
    %2118 = vmatpush.bf16.msra.mxu0 %v1412
    %2119 = vmatpush.bf16.msra.mxu0 %v1405
    %2120 = vmatpush.bf16.msra.mxu0 %v1398
    %2121 = vmatpush.bf16.msra.mxu0 %v1391
    %2122 = vmatpush.bf16.msra.mxu0 %v1384
    %2123 = vmatpush.bf16.msra.mxu0 %v1377
    %2124 = vmatmul.bf16.gmra.mxu0 %v272
    %v2125 = vpop.f32.mrf.mxu0
    %v2126 = vadd.f32 %v2097, %v2125
    %v2127 = vpop.f32.mrf.mxu0
    %v2128 = vadd.f32 %v2099, %v2127
    %2129 = vmatmul.bf16.gmra.mxu0 %v276
    %v2130 = vpop.f32.mrf.mxu0
    %v2131 = vadd.f32 %v2102, %v2130
    %v2132 = vpop.f32.mrf.mxu0
    %v2133 = vadd.f32 %v2104, %v2132
    %2134 = vmatmul.bf16.gmra.mxu0 %v280
    %v2135 = vpop.f32.mrf.mxu0
    %v2136 = vadd.f32 %v2107, %v2135
    %v2137 = vpop.f32.mrf.mxu0
    %v2138 = vadd.f32 %v2109, %v2137
    %2139 = vmatmul.bf16.gmra.mxu0 %v284
    %v2140 = vpop.f32.mrf.mxu0
    %v2141 = vadd.f32 %v2112, %v2140
    %v2142 = vpop.f32.mrf.mxu0
    %v2143 = vadd.f32 %v2114, %v2142
    %2144 = vdwg.mxu0
    %2145 = vmatpush.bf16.msra.mxu0 %v1482
    %2146 = vmatpush.bf16.msra.mxu0 %v1475
    %2147 = vmatpush.bf16.msra.mxu0 %v1468
    %2148 = vmatpush.bf16.msra.mxu0 %v1461
    %2149 = vmatpush.bf16.msra.mxu0 %v1454
    %2150 = vmatpush.bf16.msra.mxu0 %v1447
    %2151 = vmatpush.bf16.msra.mxu0 %v1440
    %2152 = vmatpush.bf16.msra.mxu0 %v1433
    %2153 = vmatmul.bf16.gmra.mxu0 %v273
    %v2154 = vpop.f32.mrf.mxu0
    %v2155 = vadd.f32 %v2126, %v2154
    %v2156 = vpop.f32.mrf.mxu0
    %v2157 = vadd.f32 %v2128, %v2156
    %2158 = vmatmul.bf16.gmra.mxu0 %v277
    %v2159 = vpop.f32.mrf.mxu0
    %v2160 = vadd.f32 %v2131, %v2159
    %v2161 = vpop.f32.mrf.mxu0
    %v2162 = vadd.f32 %v2133, %v2161
    %2163 = vmatmul.bf16.gmra.mxu0 %v281
    %v2164 = vpop.f32.mrf.mxu0
    %v2165 = vadd.f32 %v2136, %v2164
    %v2166 = vpop.f32.mrf.mxu0
    %v2167 = vadd.f32 %v2138, %v2166
    %2168 = vmatmul.bf16.gmra.mxu0 %v285
    %v2169 = vpop.f32.mrf.mxu0
    %v2170 = vadd.f32 %v2141, %v2169
    %v2171 = vpop.f32.mrf.mxu0
    %v2172 = vadd.f32 %v2143, %v2171
    %2173 = vdwg.mxu0
    %2174 = vmatpush.bf16.msra.mxu0 %v1315
    %2175 = vmatpush.bf16.msra.mxu0 %v1308
    %2176 = vmatpush.bf16.msra.mxu0 %v1301
    %2177 = vmatpush.bf16.msra.mxu0 %v1294
    %2178 = vmatpush.bf16.msra.mxu0 %v1287
    %2179 = vmatpush.bf16.msra.mxu0 %v1280
    %2180 = vmatpush.bf16.msra.mxu0 %v1273
    %2181 = vmatpush.bf16.msra.mxu0 %v1266
    %2182 = vmatmul.bf16.gmra.mxu0 %v270
    %v2183 = vpop.f32.mrf.mxu0
    %v2184 = vadd.f32 %v548, %v2183
    %v2185 = vpop.f32.mrf.mxu0
    %v2186 = vadd.f32 %v548, %v2185
    %2187 = vmatmul.bf16.gmra.mxu0 %v274
    %v2188 = vpop.f32.mrf.mxu0
    %v2189 = vadd.f32 %v548, %v2188
    %v2190 = vpop.f32.mrf.mxu0
    %v2191 = vadd.f32 %v548, %v2190
    %2192 = vmatmul.bf16.gmra.mxu0 %v278
    %v2193 = vpop.f32.mrf.mxu0
    %v2194 = vadd.f32 %v548, %v2193
    %v2195 = vpop.f32.mrf.mxu0
    %v2196 = vadd.f32 %v548, %v2195
    %2197 = vmatmul.bf16.gmra.mxu0 %v282
    %v2198 = vpop.f32.mrf.mxu0
    %v2199 = vadd.f32 %v548, %v2198
    %v2200 = vpop.f32.mrf.mxu0
    %v2201 = vadd.f32 %v548, %v2200
    %2202 = vdwg.mxu0
    %2203 = vmatpush.bf16.msra.mxu0 %v1371
    %2204 = vmatpush.bf16.msra.mxu0 %v1364
    %2205 = vmatpush.bf16.msra.mxu0 %v1357
    %2206 = vmatpush.bf16.msra.mxu0 %v1350
    %2207 = vmatpush.bf16.msra.mxu0 %v1343
    %2208 = vmatpush.bf16.msra.mxu0 %v1336
    %2209 = vmatpush.bf16.msra.mxu0 %v1329
    %2210 = vmatpush.bf16.msra.mxu0 %v1322
    %2211 = vmatmul.bf16.gmra.mxu0 %v271
    %v2212 = vpop.f32.mrf.mxu0
    %v2213 = vadd.f32 %v2184, %v2212
    %v2214 = vpop.f32.mrf.mxu0
    %v2215 = vadd.f32 %v2186, %v2214
    %2216 = vmatmul.bf16.gmra.mxu0 %v275
    %v2217 = vpop.f32.mrf.mxu0
    %v2218 = vadd.f32 %v2189, %v2217
    %v2219 = vpop.f32.mrf.mxu0
    %v2220 = vadd.f32 %v2191, %v2219
    %2221 = vmatmul.bf16.gmra.mxu0 %v279
    %v2222 = vpop.f32.mrf.mxu0
    %v2223 = vadd.f32 %v2194, %v2222
    %v2224 = vpop.f32.mrf.mxu0
    %v2225 = vadd.f32 %v2196, %v2224
    %2226 = vmatmul.bf16.gmra.mxu0 %v283
    %v2227 = vpop.f32.mrf.mxu0
    %v2228 = vadd.f32 %v2199, %v2227
    %v2229 = vpop.f32.mrf.mxu0
    %v2230 = vadd.f32 %v2201, %v2229
    %2231 = vdwg.mxu0
    %2232 = vmatpush.bf16.msra.mxu0 %v1427
    %2233 = vmatpush.bf16.msra.mxu0 %v1420
    %2234 = vmatpush.bf16.msra.mxu0 %v1413
    %2235 = vmatpush.bf16.msra.mxu0 %v1406
    %2236 = vmatpush.bf16.msra.mxu0 %v1399
    %2237 = vmatpush.bf16.msra.mxu0 %v1392
    %2238 = vmatpush.bf16.msra.mxu0 %v1385
    %2239 = vmatpush.bf16.msra.mxu0 %v1378
    %2240 = vmatmul.bf16.gmra.mxu0 %v272
    %v2241 = vpop.f32.mrf.mxu0
    %v2242 = vadd.f32 %v2213, %v2241
    %v2243 = vpop.f32.mrf.mxu0
    %v2244 = vadd.f32 %v2215, %v2243
    %2245 = vmatmul.bf16.gmra.mxu0 %v276
    %v2246 = vpop.f32.mrf.mxu0
    %v2247 = vadd.f32 %v2218, %v2246
    %v2248 = vpop.f32.mrf.mxu0
    %v2249 = vadd.f32 %v2220, %v2248
    %2250 = vmatmul.bf16.gmra.mxu0 %v280
    %v2251 = vpop.f32.mrf.mxu0
    %v2252 = vadd.f32 %v2223, %v2251
    %v2253 = vpop.f32.mrf.mxu0
    %v2254 = vadd.f32 %v2225, %v2253
    %2255 = vmatmul.bf16.gmra.mxu0 %v284
    %v2256 = vpop.f32.mrf.mxu0
    %v2257 = vadd.f32 %v2228, %v2256
    %v2258 = vpop.f32.mrf.mxu0
    %v2259 = vadd.f32 %v2230, %v2258
    %2260 = vdwg.mxu0
    %2261 = vmatpush.bf16.msra.mxu0 %v1483
    %2262 = vmatpush.bf16.msra.mxu0 %v1476
    %2263 = vmatpush.bf16.msra.mxu0 %v1469
    %2264 = vmatpush.bf16.msra.mxu0 %v1462
    %2265 = vmatpush.bf16.msra.mxu0 %v1455
    %2266 = vmatpush.bf16.msra.mxu0 %v1448
    %2267 = vmatpush.bf16.msra.mxu0 %v1441
    %2268 = vmatpush.bf16.msra.mxu0 %v1434
    %2269 = vmatmul.bf16.gmra.mxu0 %v273
    %v2270 = vpop.f32.mrf.mxu0
    %v2271 = vadd.f32 %v2242, %v2270
    %v2272 = vpop.f32.mrf.mxu0
    %v2273 = vadd.f32 %v2244, %v2272
    %2274 = vmatmul.bf16.gmra.mxu0 %v277
    %v2275 = vpop.f32.mrf.mxu0
    %v2276 = vadd.f32 %v2247, %v2275
    %v2277 = vpop.f32.mrf.mxu0
    %v2278 = vadd.f32 %v2249, %v2277
    %2279 = vmatmul.bf16.gmra.mxu0 %v281
    %v2280 = vpop.f32.mrf.mxu0
    %v2281 = vadd.f32 %v2252, %v2280
    %v2282 = vpop.f32.mrf.mxu0
    %v2283 = vadd.f32 %v2254, %v2282
    %2284 = vmatmul.bf16.gmra.mxu0 %v285
    %v2285 = vpop.f32.mrf.mxu0
    %v2286 = vadd.f32 %v2257, %v2285
    %v2287 = vpop.f32.mrf.mxu0
    %v2288 = vadd.f32 %v2259, %v2287
    %2289 = vdwg.mxu0
    %2290 = vmatpush.bf16.msra.mxu0 %v1316
    %2291 = vmatpush.bf16.msra.mxu0 %v1309
    %2292 = vmatpush.bf16.msra.mxu0 %v1302
    %2293 = vmatpush.bf16.msra.mxu0 %v1295
    %2294 = vmatpush.bf16.msra.mxu0 %v1288
    %2295 = vmatpush.bf16.msra.mxu0 %v1281
    %2296 = vmatpush.bf16.msra.mxu0 %v1274
    %2297 = vmatpush.bf16.msra.mxu0 %v1267
    %2298 = vmatmul.bf16.gmra.mxu0 %v270
    %v2299 = vpop.f32.mrf.mxu0
    %v2300 = vadd.f32 %v549, %v2299
    %v2301 = vpop.f32.mrf.mxu0
    %v2302 = vadd.f32 %v549, %v2301
    %2303 = vmatmul.bf16.gmra.mxu0 %v274
    %v2304 = vpop.f32.mrf.mxu0
    %v2305 = vadd.f32 %v549, %v2304
    %v2306 = vpop.f32.mrf.mxu0
    %v2307 = vadd.f32 %v549, %v2306
    %2308 = vmatmul.bf16.gmra.mxu0 %v278
    %v2309 = vpop.f32.mrf.mxu0
    %v2310 = vadd.f32 %v549, %v2309
    %v2311 = vpop.f32.mrf.mxu0
    %v2312 = vadd.f32 %v549, %v2311
    %2313 = vmatmul.bf16.gmra.mxu0 %v282
    %v2314 = vpop.f32.mrf.mxu0
    %v2315 = vadd.f32 %v549, %v2314
    %v2316 = vpop.f32.mrf.mxu0
    %v2317 = vadd.f32 %v549, %v2316
    %2318 = vdwg.mxu0
    %2319 = vmatpush.bf16.msra.mxu0 %v1372
    %2320 = vmatpush.bf16.msra.mxu0 %v1365
    %2321 = vmatpush.bf16.msra.mxu0 %v1358
    %2322 = vmatpush.bf16.msra.mxu0 %v1351
    %2323 = vmatpush.bf16.msra.mxu0 %v1344
    %2324 = vmatpush.bf16.msra.mxu0 %v1337
    %2325 = vmatpush.bf16.msra.mxu0 %v1330
    %2326 = vmatpush.bf16.msra.mxu0 %v1323
    %2327 = vmatmul.bf16.gmra.mxu0 %v271
    %v2328 = vpop.f32.mrf.mxu0
    %v2329 = vadd.f32 %v2300, %v2328
    %v2330 = vpop.f32.mrf.mxu0
    %v2331 = vadd.f32 %v2302, %v2330
    %2332 = vmatmul.bf16.gmra.mxu0 %v275
    %v2333 = vpop.f32.mrf.mxu0
    %v2334 = vadd.f32 %v2305, %v2333
    %v2335 = vpop.f32.mrf.mxu0
    %v2336 = vadd.f32 %v2307, %v2335
    %2337 = vmatmul.bf16.gmra.mxu0 %v279
    %v2338 = vpop.f32.mrf.mxu0
    %v2339 = vadd.f32 %v2310, %v2338
    %v2340 = vpop.f32.mrf.mxu0
    %v2341 = vadd.f32 %v2312, %v2340
    %2342 = vmatmul.bf16.gmra.mxu0 %v283
    %v2343 = vpop.f32.mrf.mxu0
    %v2344 = vadd.f32 %v2315, %v2343
    %v2345 = vpop.f32.mrf.mxu0
    %v2346 = vadd.f32 %v2317, %v2345
    %2347 = vdwg.mxu0
    %2348 = vmatpush.bf16.msra.mxu0 %v1428
    %2349 = vmatpush.bf16.msra.mxu0 %v1421
    %2350 = vmatpush.bf16.msra.mxu0 %v1414
    %2351 = vmatpush.bf16.msra.mxu0 %v1407
    %2352 = vmatpush.bf16.msra.mxu0 %v1400
    %2353 = vmatpush.bf16.msra.mxu0 %v1393
    %2354 = vmatpush.bf16.msra.mxu0 %v1386
    %2355 = vmatpush.bf16.msra.mxu0 %v1379
    %2356 = vmatmul.bf16.gmra.mxu0 %v272
    %v2357 = vpop.f32.mrf.mxu0
    %v2358 = vadd.f32 %v2329, %v2357
    %v2359 = vpop.f32.mrf.mxu0
    %v2360 = vadd.f32 %v2331, %v2359
    %2361 = vmatmul.bf16.gmra.mxu0 %v276
    %v2362 = vpop.f32.mrf.mxu0
    %v2363 = vadd.f32 %v2334, %v2362
    %v2364 = vpop.f32.mrf.mxu0
    %v2365 = vadd.f32 %v2336, %v2364
    %2366 = vmatmul.bf16.gmra.mxu0 %v280
    %v2367 = vpop.f32.mrf.mxu0
    %v2368 = vadd.f32 %v2339, %v2367
    %v2369 = vpop.f32.mrf.mxu0
    %v2370 = vadd.f32 %v2341, %v2369
    %2371 = vmatmul.bf16.gmra.mxu0 %v284
    %v2372 = vpop.f32.mrf.mxu0
    %v2373 = vadd.f32 %v2344, %v2372
    %v2374 = vpop.f32.mrf.mxu0
    %v2375 = vadd.f32 %v2346, %v2374
    %2376 = vdwg.mxu0
    %2377 = vmatpush.bf16.msra.mxu0 %v1484
    %2378 = vmatpush.bf16.msra.mxu0 %v1477
    %2379 = vmatpush.bf16.msra.mxu0 %v1470
    %2380 = vmatpush.bf16.msra.mxu0 %v1463
    %2381 = vmatpush.bf16.msra.mxu0 %v1456
    %2382 = vmatpush.bf16.msra.mxu0 %v1449
    %2383 = vmatpush.bf16.msra.mxu0 %v1442
    %2384 = vmatpush.bf16.msra.mxu0 %v1435
    %2385 = vmatmul.bf16.gmra.mxu0 %v273
    %v2386 = vpop.f32.mrf.mxu0
    %v2387 = vadd.f32 %v2358, %v2386
    %v2388 = vpop.f32.mrf.mxu0
    %v2389 = vadd.f32 %v2360, %v2388
    %2390 = vmatmul.bf16.gmra.mxu0 %v277
    %v2391 = vpop.f32.mrf.mxu0
    %v2392 = vadd.f32 %v2363, %v2391
    %v2393 = vpop.f32.mrf.mxu0
    %v2394 = vadd.f32 %v2365, %v2393
    %2395 = vmatmul.bf16.gmra.mxu0 %v281
    %v2396 = vpop.f32.mrf.mxu0
    %v2397 = vadd.f32 %v2368, %v2396
    %v2398 = vpop.f32.mrf.mxu0
    %v2399 = vadd.f32 %v2370, %v2398
    %2400 = vmatmul.bf16.gmra.mxu0 %v285
    %v2401 = vpop.f32.mrf.mxu0
    %v2402 = vadd.f32 %v2373, %v2401
    %v2403 = vpop.f32.mrf.mxu0
    %v2404 = vadd.f32 %v2375, %v2403
    %2405 = vdwg.mxu0
    %2406 = vmatpush.bf16.msra.mxu0 %v1317
    %2407 = vmatpush.bf16.msra.mxu0 %v1310
    %2408 = vmatpush.bf16.msra.mxu0 %v1303
    %2409 = vmatpush.bf16.msra.mxu0 %v1296
    %2410 = vmatpush.bf16.msra.mxu0 %v1289
    %2411 = vmatpush.bf16.msra.mxu0 %v1282
    %2412 = vmatpush.bf16.msra.mxu0 %v1275
    %2413 = vmatpush.bf16.msra.mxu0 %v1268
    %2414 = vmatmul.bf16.gmra.mxu0 %v270
    %v2415 = vpop.f32.mrf.mxu0
    %v2416 = vadd.f32 %v550, %v2415
    %v2417 = vpop.f32.mrf.mxu0
    %v2418 = vadd.f32 %v550, %v2417
    %2419 = vmatmul.bf16.gmra.mxu0 %v274
    %v2420 = vpop.f32.mrf.mxu0
    %v2421 = vadd.f32 %v550, %v2420
    %v2422 = vpop.f32.mrf.mxu0
    %v2423 = vadd.f32 %v550, %v2422
    %2424 = vmatmul.bf16.gmra.mxu0 %v278
    %v2425 = vpop.f32.mrf.mxu0
    %v2426 = vadd.f32 %v550, %v2425
    %v2427 = vpop.f32.mrf.mxu0
    %v2428 = vadd.f32 %v550, %v2427
    %2429 = vmatmul.bf16.gmra.mxu0 %v282
    %v2430 = vpop.f32.mrf.mxu0
    %v2431 = vadd.f32 %v550, %v2430
    %v2432 = vpop.f32.mrf.mxu0
    %v2433 = vadd.f32 %v550, %v2432
    %2434 = vdwg.mxu0
    %2435 = vmatpush.bf16.msra.mxu0 %v1373
    %2436 = vmatpush.bf16.msra.mxu0 %v1366
    %2437 = vmatpush.bf16.msra.mxu0 %v1359
    %2438 = vmatpush.bf16.msra.mxu0 %v1352
    %2439 = vmatpush.bf16.msra.mxu0 %v1345
    %2440 = vmatpush.bf16.msra.mxu0 %v1338
    %2441 = vmatpush.bf16.msra.mxu0 %v1331
    %2442 = vmatpush.bf16.msra.mxu0 %v1324
    %2443 = vmatmul.bf16.gmra.mxu0 %v271
    %v2444 = vpop.f32.mrf.mxu0
    %v2445 = vadd.f32 %v2416, %v2444
    %v2446 = vpop.f32.mrf.mxu0
    %v2447 = vadd.f32 %v2418, %v2446
    %2448 = vmatmul.bf16.gmra.mxu0 %v275
    %v2449 = vpop.f32.mrf.mxu0
    %v2450 = vadd.f32 %v2421, %v2449
    %v2451 = vpop.f32.mrf.mxu0
    %v2452 = vadd.f32 %v2423, %v2451
    %2453 = vmatmul.bf16.gmra.mxu0 %v279
    %v2454 = vpop.f32.mrf.mxu0
    %v2455 = vadd.f32 %v2426, %v2454
    %v2456 = vpop.f32.mrf.mxu0
    %v2457 = vadd.f32 %v2428, %v2456
    %2458 = vmatmul.bf16.gmra.mxu0 %v283
    %v2459 = vpop.f32.mrf.mxu0
    %v2460 = vadd.f32 %v2431, %v2459
    %v2461 = vpop.f32.mrf.mxu0
    %v2462 = vadd.f32 %v2433, %v2461
    %2463 = vdwg.mxu0
    %2464 = vmatpush.bf16.msra.mxu0 %v1429
    %2465 = vmatpush.bf16.msra.mxu0 %v1422
    %2466 = vmatpush.bf16.msra.mxu0 %v1415
    %2467 = vmatpush.bf16.msra.mxu0 %v1408
    %2468 = vmatpush.bf16.msra.mxu0 %v1401
    %2469 = vmatpush.bf16.msra.mxu0 %v1394
    %2470 = vmatpush.bf16.msra.mxu0 %v1387
    %2471 = vmatpush.bf16.msra.mxu0 %v1380
    %2472 = vmatmul.bf16.gmra.mxu0 %v272
    %v2473 = vpop.f32.mrf.mxu0
    %v2474 = vadd.f32 %v2445, %v2473
    %v2475 = vpop.f32.mrf.mxu0
    %v2476 = vadd.f32 %v2447, %v2475
    %2477 = vmatmul.bf16.gmra.mxu0 %v276
    %v2478 = vpop.f32.mrf.mxu0
    %v2479 = vadd.f32 %v2450, %v2478
    %v2480 = vpop.f32.mrf.mxu0
    %v2481 = vadd.f32 %v2452, %v2480
    %2482 = vmatmul.bf16.gmra.mxu0 %v280
    %v2483 = vpop.f32.mrf.mxu0
    %v2484 = vadd.f32 %v2455, %v2483
    %v2485 = vpop.f32.mrf.mxu0
    %v2486 = vadd.f32 %v2457, %v2485
    %2487 = vmatmul.bf16.gmra.mxu0 %v284
    %v2488 = vpop.f32.mrf.mxu0
    %v2489 = vadd.f32 %v2460, %v2488
    %v2490 = vpop.f32.mrf.mxu0
    %v2491 = vadd.f32 %v2462, %v2490
    %2492 = vdwg.mxu0
    %2493 = vmatpush.bf16.msra.mxu0 %v1485
    %2494 = vmatpush.bf16.msra.mxu0 %v1478
    %2495 = vmatpush.bf16.msra.mxu0 %v1471
    %2496 = vmatpush.bf16.msra.mxu0 %v1464
    %2497 = vmatpush.bf16.msra.mxu0 %v1457
    %2498 = vmatpush.bf16.msra.mxu0 %v1450
    %2499 = vmatpush.bf16.msra.mxu0 %v1443
    %2500 = vmatpush.bf16.msra.mxu0 %v1436
    %2501 = vmatmul.bf16.gmra.mxu0 %v273
    %v2502 = vpop.f32.mrf.mxu0
    %v2503 = vadd.f32 %v2474, %v2502
    %v2504 = vpop.f32.mrf.mxu0
    %v2505 = vadd.f32 %v2476, %v2504
    %2506 = vmatmul.bf16.gmra.mxu0 %v277
    %v2507 = vpop.f32.mrf.mxu0
    %v2508 = vadd.f32 %v2479, %v2507
    %v2509 = vpop.f32.mrf.mxu0
    %v2510 = vadd.f32 %v2481, %v2509
    %2511 = vmatmul.bf16.gmra.mxu0 %v281
    %v2512 = vpop.f32.mrf.mxu0
    %v2513 = vadd.f32 %v2484, %v2512
    %v2514 = vpop.f32.mrf.mxu0
    %v2515 = vadd.f32 %v2486, %v2514
    %2516 = vmatmul.bf16.gmra.mxu0 %v285
    %v2517 = vpop.f32.mrf.mxu0
    %v2518 = vadd.f32 %v2489, %v2517
    %v2519 = vpop.f32.mrf.mxu0
    %v2520 = vadd.f32 %v2491, %v2519
    %2521 = vdwg.mxu0
    %v2522 = vxor.u32 %v1807, 2147483648
    %v2523 = vxor.u32 %v1923, 2147483648
    %v2524 = vxor.u32 %v2039, 2147483648
    %v2525 = vxor.u32 %v2155, 2147483648
    %v2526 = vxor.u32 %v2271, 2147483648
    %v2527 = vxor.u32 %v2387, 2147483648
    %v2528 = vxor.u32 %v2503, 2147483648
    %v2529 = vxor.u32 %v1809, 2147483648
    %v2530 = vxor.u32 %v1925, 2147483648
    %v2531 = vxor.u32 %v2041, 2147483648
    %v2532 = vxor.u32 %v2157, 2147483648
    %v2533 = vxor.u32 %v2273, 2147483648
    %v2534 = vxor.u32 %v2389, 2147483648
    %v2535 = vxor.u32 %v2505, 2147483648
    %v2536 = vxor.u32 %v1812, 2147483648
    %v2537 = vxor.u32 %v1928, 2147483648
    %v2538 = vxor.u32 %v2044, 2147483648
    %v2539 = vxor.u32 %v2160, 2147483648
    %v2540 = vxor.u32 %v2276, 2147483648
    %v2541 = vxor.u32 %v2392, 2147483648
    %v2542 = vxor.u32 %v2508, 2147483648
    %v2543 = vxor.u32 %v1814, 2147483648
    %v2544 = vxor.u32 %v1930, 2147483648
    %v2545 = vxor.u32 %v2046, 2147483648
    %v2546 = vxor.u32 %v2162, 2147483648
    %v2547 = vxor.u32 %v2278, 2147483648
    %v2548 = vxor.u32 %v2394, 2147483648
    %v2549 = vxor.u32 %v2510, 2147483648
    %v2550 = vxor.u32 %v1817, 2147483648
    %v2551 = vxor.u32 %v1933, 2147483648
    %v2552 = vxor.u32 %v2049, 2147483648
    %v2553 = vxor.u32 %v2165, 2147483648
    %v2554 = vxor.u32 %v2281, 2147483648
    %v2555 = vxor.u32 %v2397, 2147483648
    %v2556 = vxor.u32 %v2513, 2147483648
    %v2557 = vxor.u32 %v1819, 2147483648
    %v2558 = vxor.u32 %v1935, 2147483648
    %v2559 = vxor.u32 %v2051, 2147483648
    %v2560 = vxor.u32 %v2167, 2147483648
    %v2561 = vxor.u32 %v2283, 2147483648
    %v2562 = vxor.u32 %v2399, 2147483648
    %v2563 = vxor.u32 %v2515, 2147483648
    %v2564 = vxor.u32 %v1822, 2147483648
    %v2565 = vxor.u32 %v1938, 2147483648
    %v2566 = vxor.u32 %v2054, 2147483648
    %v2567 = vxor.u32 %v2170, 2147483648
    %v2568 = vxor.u32 %v2286, 2147483648
    %v2569 = vxor.u32 %v2402, 2147483648
    %v2570 = vxor.u32 %v2518, 2147483648
    %v2571 = vxor.u32 %v1824, 2147483648
    %v2572 = vxor.u32 %v1940, 2147483648
    %v2573 = vxor.u32 %v2056, 2147483648
    %v2574 = vxor.u32 %v2172, 2147483648
    %v2575 = vxor.u32 %v2288, 2147483648
    %v2576 = vxor.u32 %v2404, 2147483648
    %v2577 = vxor.u32 %v2520, 2147483648
    %v2578 = vmul.f32 %v2522, 1.442695
    %v2579 = vpow.pop %v2578
    %v2580 = vmul.f32 %v2523, 1.442695
    %v2581 = vpow.pop %v2580
    %v2582 = vmul.f32 %v2524, 1.442695
    %v2583 = vpow.pop %v2582
    %v2584 = vmul.f32 %v2525, 1.442695
    %v2585 = vpow.pop %v2584
    %v2586 = vmul.f32 %v2526, 1.442695
    %v2587 = vpow.pop %v2586
    %v2588 = vmul.f32 %v2527, 1.442695
    %v2589 = vpow.pop %v2588
    %v2590 = vmul.f32 %v2528, 1.442695
    %v2591 = vpow.pop %v2590
    %v2592 = vmul.f32 %v2529, 1.442695
    %v2593 = vpow.pop %v2592
    %v2594 = vmul.f32 %v2530, 1.442695
    %v2595 = vpow.pop %v2594
    %v2596 = vmul.f32 %v2531, 1.442695
    %v2597 = vpow.pop %v2596
    %v2598 = vmul.f32 %v2532, 1.442695
    %v2599 = vpow.pop %v2598
    %v2600 = vmul.f32 %v2533, 1.442695
    %v2601 = vpow.pop %v2600
    %v2602 = vmul.f32 %v2534, 1.442695
    %v2603 = vpow.pop %v2602
    %v2604 = vmul.f32 %v2535, 1.442695
    %v2605 = vpow.pop %v2604
    %v2606 = vmul.f32 %v2536, 1.442695
    %v2607 = vpow.pop %v2606
    %v2608 = vmul.f32 %v2537, 1.442695
    %v2609 = vpow.pop %v2608
    %v2610 = vmul.f32 %v2538, 1.442695
    %v2611 = vpow.pop %v2610
    %v2612 = vmul.f32 %v2539, 1.442695
    %v2613 = vpow.pop %v2612
    %v2614 = vmul.f32 %v2540, 1.442695
    %v2615 = vpow.pop %v2614
    %v2616 = vmul.f32 %v2541, 1.442695
    %v2617 = vpow.pop %v2616
    %v2618 = vmul.f32 %v2542, 1.442695
    %v2619 = vpow.pop %v2618
    %v2620 = vmul.f32 %v2543, 1.442695
    %v2621 = vpow.pop %v2620
    %v2622 = vmul.f32 %v2544, 1.442695
    %v2623 = vpow.pop %v2622
    %v2624 = vmul.f32 %v2545, 1.442695
    %v2625 = vpow.pop %v2624
    %v2626 = vmul.f32 %v2546, 1.442695
    %v2627 = vpow.pop %v2626
    %v2628 = vmul.f32 %v2547, 1.442695
    %v2629 = vpow.pop %v2628
    %v2630 = vmul.f32 %v2548, 1.442695
    %v2631 = vpow.pop %v2630
    %v2632 = vmul.f32 %v2549, 1.442695
    %v2633 = vpow.pop %v2632
    %v2634 = vmul.f32 %v2550, 1.442695
    %v2635 = vpow.pop %v2634
    %v2636 = vmul.f32 %v2551, 1.442695
    %v2637 = vpow.pop %v2636
    %v2638 = vmul.f32 %v2552, 1.442695
    %v2639 = vpow.pop %v2638
    %v2640 = vmul.f32 %v2553, 1.442695
    %v2641 = vpow.pop %v2640
    %v2642 = vmul.f32 %v2554, 1.442695
    %v2643 = vpow.pop %v2642
    %v2644 = vmul.f32 %v2555, 1.442695
    %v2645 = vpow.pop %v2644
    %v2646 = vmul.f32 %v2556, 1.442695
    %v2647 = vpow.pop %v2646
    %v2648 = vmul.f32 %v2557, 1.442695
    %v2649 = vpow.pop %v2648
    %v2650 = vmul.f32 %v2558, 1.442695
    %v2651 = vpow.pop %v2650
    %v2652 = vmul.f32 %v2559, 1.442695
    %v2653 = vpow.pop %v2652
    %v2654 = vmul.f32 %v2560, 1.442695
    %v2655 = vpow.pop %v2654
    %v2656 = vmul.f32 %v2561, 1.442695
    %v2657 = vpow.pop %v2656
    %v2658 = vmul.f32 %v2562, 1.442695
    %v2659 = vpow.pop %v2658
    %v2660 = vmul.f32 %v2563, 1.442695
    %v2661 = vpow.pop %v2660
    %v2662 = vmul.f32 %v2564, 1.442695
    %v2663 = vpow.pop %v2662
    %v2664 = vmul.f32 %v2565, 1.442695
    %v2665 = vpow.pop %v2664
    %v2666 = vmul.f32 %v2566, 1.442695
    %v2667 = vpow.pop %v2666
    %v2668 = vmul.f32 %v2567, 1.442695
    %v2669 = vpow.pop %v2668
    %v2670 = vmul.f32 %v2568, 1.442695
    %v2671 = vpow.pop %v2670
    %v2672 = vmul.f32 %v2569, 1.442695
    %v2673 = vpow.pop %v2672
    %v2674 = vmul.f32 %v2570, 1.442695
    %v2675 = vpow.pop %v2674
    %v2676 = vmul.f32 %v2571, 1.442695
    %v2677 = vpow.pop %v2676
    %v2678 = vmul.f32 %v2572, 1.442695
    %v2679 = vpow.pop %v2678
    %v2680 = vmul.f32 %v2573, 1.442695
    %v2681 = vpow.pop %v2680
    %v2682 = vmul.f32 %v2574, 1.442695
    %v2683 = vpow.pop %v2682
    %v2684 = vmul.f32 %v2575, 1.442695
    %v2685 = vpow.pop %v2684
    %v2686 = vmul.f32 %v2576, 1.442695
    %v2687 = vpow.pop %v2686
    %v2688 = vmul.f32 %v2577, 1.442695
    %v2689 = vpow.pop %v2688
    %v2690 = vadd.f32 %v2579, 1.0
    %v2691 = vadd.f32 %v2581, 1.0
    %v2692 = vadd.f32 %v2583, 1.0
    %v2693 = vadd.f32 %v2585, 1.0
    %v2694 = vadd.f32 %v2587, 1.0
    %v2695 = vadd.f32 %v2589, 1.0
    %v2696 = vadd.f32 %v2591, 1.0
    %v2697 = vadd.f32 %v2593, 1.0
    %v2698 = vadd.f32 %v2595, 1.0
    %v2699 = vadd.f32 %v2597, 1.0
    %v2700 = vadd.f32 %v2599, 1.0
    %v2701 = vadd.f32 %v2601, 1.0
    %v2702 = vadd.f32 %v2603, 1.0
    %v2703 = vadd.f32 %v2605, 1.0
    %v2704 = vadd.f32 %v2607, 1.0
    %v2705 = vadd.f32 %v2609, 1.0
    %v2706 = vadd.f32 %v2611, 1.0
    %v2707 = vadd.f32 %v2613, 1.0
    %v2708 = vadd.f32 %v2615, 1.0
    %v2709 = vadd.f32 %v2617, 1.0
    %v2710 = vadd.f32 %v2619, 1.0
    %v2711 = vadd.f32 %v2621, 1.0
    %v2712 = vadd.f32 %v2623, 1.0
    %v2713 = vadd.f32 %v2625, 1.0
    %v2714 = vadd.f32 %v2627, 1.0
    %v2715 = vadd.f32 %v2629, 1.0
    %v2716 = vadd.f32 %v2631, 1.0
    %v2717 = vadd.f32 %v2633, 1.0
    %v2718 = vadd.f32 %v2635, 1.0
    %v2719 = vadd.f32 %v2637, 1.0
    %v2720 = vadd.f32 %v2639, 1.0
    %v2721 = vadd.f32 %v2641, 1.0
    %v2722 = vadd.f32 %v2643, 1.0
    %v2723 = vadd.f32 %v2645, 1.0
    %v2724 = vadd.f32 %v2647, 1.0
    %v2725 = vadd.f32 %v2649, 1.0
    %v2726 = vadd.f32 %v2651, 1.0
    %v2727 = vadd.f32 %v2653, 1.0
    %v2728 = vadd.f32 %v2655, 1.0
    %v2729 = vadd.f32 %v2657, 1.0
    %v2730 = vadd.f32 %v2659, 1.0
    %v2731 = vadd.f32 %v2661, 1.0
    %v2732 = vadd.f32 %v2663, 1.0
    %v2733 = vadd.f32 %v2665, 1.0
    %v2734 = vadd.f32 %v2667, 1.0
    %v2735 = vadd.f32 %v2669, 1.0
    %v2736 = vadd.f32 %v2671, 1.0
    %v2737 = vadd.f32 %v2673, 1.0
    %v2738 = vadd.f32 %v2675, 1.0
    %v2739 = vadd.f32 %v2677, 1.0
    %v2740 = vadd.f32 %v2679, 1.0
    %v2741 = vadd.f32 %v2681, 1.0
    %v2742 = vadd.f32 %v2683, 1.0
    %v2743 = vadd.f32 %v2685, 1.0
    %v2744 = vadd.f32 %v2687, 1.0
    %v2745 = vadd.f32 %v2689, 1.0
    %v2746 = vrcp.pop %v2690
    %v2747 = vmul.f32 %v2690, %v2746
    %v2748 = vsub.f32 1.0, %v2747
    %v2749 = vmul.f32 %v2746, %v2748
    %v2750 = vadd.f32 %v2746, %v2749
    %vm2751 = vweird.f32 %v2690
    %vm2752 = vweird.f32 %v2746
    %vm2753 = vmor %vm2751, %vm2752
    %v2754 = vsel %vm2753, %v2746, %v2750
    %v2755 = vand.u32 2147483647, %v2690
    %vm2756 = vcmp.eq.f32.partialorder %v2755, 8.507059e+37
    %v2757 = vand.u32 %v2690, 2147483648
    %v2758 = vor.u32 1.1754944e-38, %v2757
    %v2759 = vsel %vm2756, %v2758, %v2754
    %v2760 = vmul.f32 1.0, %v2759
    %v2761 = vrcp.pop %v2691
    %v2762 = vmul.f32 %v2691, %v2761
    %v2763 = vsub.f32 1.0, %v2762
    %v2764 = vmul.f32 %v2761, %v2763
    %v2765 = vadd.f32 %v2761, %v2764
    %vm2766 = vweird.f32 %v2691
    %vm2767 = vweird.f32 %v2761
    %vm2768 = vmor %vm2766, %vm2767
    %v2769 = vsel %vm2768, %v2761, %v2765
    %v2770 = vand.u32 2147483647, %v2691
    %vm2771 = vcmp.eq.f32.partialorder %v2770, 8.507059e+37
    %v2772 = vand.u32 %v2691, 2147483648
    %v2773 = vor.u32 1.1754944e-38, %v2772
    %v2774 = vsel %vm2771, %v2773, %v2769
    %v2775 = vmul.f32 1.0, %v2774
    %v2776 = vrcp.pop %v2692
    %v2777 = vmul.f32 %v2692, %v2776
    %v2778 = vsub.f32 1.0, %v2777
    %v2779 = vmul.f32 %v2776, %v2778
    %v2780 = vadd.f32 %v2776, %v2779
    %vm2781 = vweird.f32 %v2692
    %vm2782 = vweird.f32 %v2776
    %vm2783 = vmor %vm2781, %vm2782
    %v2784 = vsel %vm2783, %v2776, %v2780
    %v2785 = vand.u32 2147483647, %v2692
    %vm2786 = vcmp.eq.f32.partialorder %v2785, 8.507059e+37
    %v2787 = vand.u32 %v2692, 2147483648
    %v2788 = vor.u32 1.1754944e-38, %v2787
    %v2789 = vsel %vm2786, %v2788, %v2784
    %v2790 = vmul.f32 1.0, %v2789
    %v2791 = vrcp.pop %v2693
    %v2792 = vmul.f32 %v2693, %v2791
    %v2793 = vsub.f32 1.0, %v2792
    %v2794 = vmul.f32 %v2791, %v2793
    %v2795 = vadd.f32 %v2791, %v2794
    %vm2796 = vweird.f32 %v2693
    %vm2797 = vweird.f32 %v2791
    %vm2798 = vmor %vm2796, %vm2797
    %v2799 = vsel %vm2798, %v2791, %v2795
    %v2800 = vand.u32 2147483647, %v2693
    %vm2801 = vcmp.eq.f32.partialorder %v2800, 8.507059e+37
    %v2802 = vand.u32 %v2693, 2147483648
    %v2803 = vor.u32 1.1754944e-38, %v2802
    %v2804 = vsel %vm2801, %v2803, %v2799
    %v2805 = vmul.f32 1.0, %v2804
    %v2806 = vrcp.pop %v2694
    %v2807 = vmul.f32 %v2694, %v2806
    %v2808 = vsub.f32 1.0, %v2807
    %v2809 = vmul.f32 %v2806, %v2808
    %v2810 = vadd.f32 %v2806, %v2809
    %vm2811 = vweird.f32 %v2694
    %vm2812 = vweird.f32 %v2806
    %vm2813 = vmor %vm2811, %vm2812
    %v2814 = vsel %vm2813, %v2806, %v2810
    %v2815 = vand.u32 2147483647, %v2694
    %vm2816 = vcmp.eq.f32.partialorder %v2815, 8.507059e+37
    %v2817 = vand.u32 %v2694, 2147483648
    %v2818 = vor.u32 1.1754944e-38, %v2817
    %v2819 = vsel %vm2816, %v2818, %v2814
    %v2820 = vmul.f32 1.0, %v2819
    %v2821 = vrcp.pop %v2695
    %v2822 = vmul.f32 %v2695, %v2821
    %v2823 = vsub.f32 1.0, %v2822
    %v2824 = vmul.f32 %v2821, %v2823
    %v2825 = vadd.f32 %v2821, %v2824
    %vm2826 = vweird.f32 %v2695
    %vm2827 = vweird.f32 %v2821
    %vm2828 = vmor %vm2826, %vm2827
    %v2829 = vsel %vm2828, %v2821, %v2825
    %v2830 = vand.u32 2147483647, %v2695
    %vm2831 = vcmp.eq.f32.partialorder %v2830, 8.507059e+37
    %v2832 = vand.u32 %v2695, 2147483648
    %v2833 = vor.u32 1.1754944e-38, %v2832
    %v2834 = vsel %vm2831, %v2833, %v2829
    %v2835 = vmul.f32 1.0, %v2834
    %v2836 = vrcp.pop %v2696
    %v2837 = vmul.f32 %v2696, %v2836
    %v2838 = vsub.f32 1.0, %v2837
    %v2839 = vmul.f32 %v2836, %v2838
    %v2840 = vadd.f32 %v2836, %v2839
    %vm2841 = vweird.f32 %v2696
    %vm2842 = vweird.f32 %v2836
    %vm2843 = vmor %vm2841, %vm2842
    %v2844 = vsel %vm2843, %v2836, %v2840
    %v2845 = vand.u32 2147483647, %v2696
    %vm2846 = vcmp.eq.f32.partialorder %v2845, 8.507059e+37
    %v2847 = vand.u32 %v2696, 2147483648
    %v2848 = vor.u32 1.1754944e-38, %v2847
    %v2849 = vsel %vm2846, %v2848, %v2844
    %v2850 = vmul.f32 1.0, %v2849
    %v2851 = vrcp.pop %v2697
    %v2852 = vmul.f32 %v2697, %v2851
    %v2853 = vsub.f32 1.0, %v2852
    %v2854 = vmul.f32 %v2851, %v2853
    %v2855 = vadd.f32 %v2851, %v2854
    %vm2856 = vweird.f32 %v2697
    %vm2857 = vweird.f32 %v2851
    %vm2858 = vmor %vm2856, %vm2857
    %v2859 = vsel %vm2858, %v2851, %v2855
    %v2860 = vand.u32 2147483647, %v2697
    %vm2861 = vcmp.eq.f32.partialorder %v2860, 8.507059e+37
    %v2862 = vand.u32 %v2697, 2147483648
    %v2863 = vor.u32 1.1754944e-38, %v2862
    %v2864 = vsel %vm2861, %v2863, %v2859
    %v2865 = vmul.f32 1.0, %v2864
    %v2866 = vrcp.pop %v2698
    %v2867 = vmul.f32 %v2698, %v2866
    %v2868 = vsub.f32 1.0, %v2867
    %v2869 = vmul.f32 %v2866, %v2868
    %v2870 = vadd.f32 %v2866, %v2869
    %vm2871 = vweird.f32 %v2698
    %vm2872 = vweird.f32 %v2866
    %vm2873 = vmor %vm2871, %vm2872
    %v2874 = vsel %vm2873, %v2866, %v2870
    %v2875 = vand.u32 2147483647, %v2698
    %vm2876 = vcmp.eq.f32.partialorder %v2875, 8.507059e+37
    %v2877 = vand.u32 %v2698, 2147483648
    %v2878 = vor.u32 1.1754944e-38, %v2877
    %v2879 = vsel %vm2876, %v2878, %v2874
    %v2880 = vmul.f32 1.0, %v2879
    %v2881 = vrcp.pop %v2699
    %v2882 = vmul.f32 %v2699, %v2881
    %v2883 = vsub.f32 1.0, %v2882
    %v2884 = vmul.f32 %v2881, %v2883
    %v2885 = vadd.f32 %v2881, %v2884
    %vm2886 = vweird.f32 %v2699
    %vm2887 = vweird.f32 %v2881
    %vm2888 = vmor %vm2886, %vm2887
    %v2889 = vsel %vm2888, %v2881, %v2885
    %v2890 = vand.u32 2147483647, %v2699
    %vm2891 = vcmp.eq.f32.partialorder %v2890, 8.507059e+37
    %v2892 = vand.u32 %v2699, 2147483648
    %v2893 = vor.u32 1.1754944e-38, %v2892
    %v2894 = vsel %vm2891, %v2893, %v2889
    %v2895 = vmul.f32 1.0, %v2894
    %v2896 = vrcp.pop %v2700
    %v2897 = vmul.f32 %v2700, %v2896
    %v2898 = vsub.f32 1.0, %v2897
    %v2899 = vmul.f32 %v2896, %v2898
    %v2900 = vadd.f32 %v2896, %v2899
    %vm2901 = vweird.f32 %v2700
    %vm2902 = vweird.f32 %v2896
    %vm2903 = vmor %vm2901, %vm2902
    %v2904 = vsel %vm2903, %v2896, %v2900
    %v2905 = vand.u32 2147483647, %v2700
    %vm2906 = vcmp.eq.f32.partialorder %v2905, 8.507059e+37
    %v2907 = vand.u32 %v2700, 2147483648
    %v2908 = vor.u32 1.1754944e-38, %v2907
    %v2909 = vsel %vm2906, %v2908, %v2904
    %v2910 = vmul.f32 1.0, %v2909
    %v2911 = vrcp.pop %v2701
    %v2912 = vmul.f32 %v2701, %v2911
    %v2913 = vsub.f32 1.0, %v2912
    %v2914 = vmul.f32 %v2911, %v2913
    %v2915 = vadd.f32 %v2911, %v2914
    %vm2916 = vweird.f32 %v2701
    %vm2917 = vweird.f32 %v2911
    %vm2918 = vmor %vm2916, %vm2917
    %v2919 = vsel %vm2918, %v2911, %v2915
    %v2920 = vand.u32 2147483647, %v2701
    %vm2921 = vcmp.eq.f32.partialorder %v2920, 8.507059e+37
    %v2922 = vand.u32 %v2701, 2147483648
    %v2923 = vor.u32 1.1754944e-38, %v2922
    %v2924 = vsel %vm2921, %v2923, %v2919
    %v2925 = vmul.f32 1.0, %v2924
    %v2926 = vrcp.pop %v2702
    %v2927 = vmul.f32 %v2702, %v2926
    %v2928 = vsub.f32 1.0, %v2927
    %v2929 = vmul.f32 %v2926, %v2928
    %v2930 = vadd.f32 %v2926, %v2929
    %vm2931 = vweird.f32 %v2702
    %vm2932 = vweird.f32 %v2926
    %vm2933 = vmor %vm2931, %vm2932
    %v2934 = vsel %vm2933, %v2926, %v2930
    %v2935 = vand.u32 2147483647, %v2702
    %vm2936 = vcmp.eq.f32.partialorder %v2935, 8.507059e+37
    %v2937 = vand.u32 %v2702, 2147483648
    %v2938 = vor.u32 1.1754944e-38, %v2937
    %v2939 = vsel %vm2936, %v2938, %v2934
    %v2940 = vmul.f32 1.0, %v2939
    %v2941 = vrcp.pop %v2703
    %v2942 = vmul.f32 %v2703, %v2941
    %v2943 = vsub.f32 1.0, %v2942
    %v2944 = vmul.f32 %v2941, %v2943
    %v2945 = vadd.f32 %v2941, %v2944
    %vm2946 = vweird.f32 %v2703
    %vm2947 = vweird.f32 %v2941
    %vm2948 = vmor %vm2946, %vm2947
    %v2949 = vsel %vm2948, %v2941, %v2945
    %v2950 = vand.u32 2147483647, %v2703
    %vm2951 = vcmp.eq.f32.partialorder %v2950, 8.507059e+37
    %v2952 = vand.u32 %v2703, 2147483648
    %v2953 = vor.u32 1.1754944e-38, %v2952
    %v2954 = vsel %vm2951, %v2953, %v2949
    %v2955 = vmul.f32 1.0, %v2954
    %v2956 = vrcp.pop %v2704
    %v2957 = vmul.f32 %v2704, %v2956
    %v2958 = vsub.f32 1.0, %v2957
    %v2959 = vmul.f32 %v2956, %v2958
    %v2960 = vadd.f32 %v2956, %v2959
    %vm2961 = vweird.f32 %v2704
    %vm2962 = vweird.f32 %v2956
    %vm2963 = vmor %vm2961, %vm2962
    %v2964 = vsel %vm2963, %v2956, %v2960
    %v2965 = vand.u32 2147483647, %v2704
    %vm2966 = vcmp.eq.f32.partialorder %v2965, 8.507059e+37
    %v2967 = vand.u32 %v2704, 2147483648
    %v2968 = vor.u32 1.1754944e-38, %v2967
    %v2969 = vsel %vm2966, %v2968, %v2964
    %v2970 = vmul.f32 1.0, %v2969
    %v2971 = vrcp.pop %v2705
    %v2972 = vmul.f32 %v2705, %v2971
    %v2973 = vsub.f32 1.0, %v2972
    %v2974 = vmul.f32 %v2971, %v2973
    %v2975 = vadd.f32 %v2971, %v2974
    %vm2976 = vweird.f32 %v2705
    %vm2977 = vweird.f32 %v2971
    %vm2978 = vmor %vm2976, %vm2977
    %v2979 = vsel %vm2978, %v2971, %v2975
    %v2980 = vand.u32 2147483647, %v2705
    %vm2981 = vcmp.eq.f32.partialorder %v2980, 8.507059e+37
    %v2982 = vand.u32 %v2705, 2147483648
    %v2983 = vor.u32 1.1754944e-38, %v2982
    %v2984 = vsel %vm2981, %v2983, %v2979
    %v2985 = vmul.f32 1.0, %v2984
    %v2986 = vrcp.pop %v2706
    %v2987 = vmul.f32 %v2706, %v2986
    %v2988 = vsub.f32 1.0, %v2987
    %v2989 = vmul.f32 %v2986, %v2988
    %v2990 = vadd.f32 %v2986, %v2989
    %vm2991 = vweird.f32 %v2706
    %vm2992 = vweird.f32 %v2986
    %vm2993 = vmor %vm2991, %vm2992
    %v2994 = vsel %vm2993, %v2986, %v2990
    %v2995 = vand.u32 2147483647, %v2706
    %vm2996 = vcmp.eq.f32.partialorder %v2995, 8.507059e+37
    %v2997 = vand.u32 %v2706, 2147483648
    %v2998 = vor.u32 1.1754944e-38, %v2997
    %v2999 = vsel %vm2996, %v2998, %v2994
    %v3000 = vmul.f32 1.0, %v2999
    %v3001 = vrcp.pop %v2707
    %v3002 = vmul.f32 %v2707, %v3001
    %v3003 = vsub.f32 1.0, %v3002
    %v3004 = vmul.f32 %v3001, %v3003
    %v3005 = vadd.f32 %v3001, %v3004
    %vm3006 = vweird.f32 %v2707
    %vm3007 = vweird.f32 %v3001
    %vm3008 = vmor %vm3006, %vm3007
    %v3009 = vsel %vm3008, %v3001, %v3005
    %v3010 = vand.u32 2147483647, %v2707
    %vm3011 = vcmp.eq.f32.partialorder %v3010, 8.507059e+37
    %v3012 = vand.u32 %v2707, 2147483648
    %v3013 = vor.u32 1.1754944e-38, %v3012
    %v3014 = vsel %vm3011, %v3013, %v3009
    %v3015 = vmul.f32 1.0, %v3014
    %v3016 = vrcp.pop %v2708
    %v3017 = vmul.f32 %v2708, %v3016
    %v3018 = vsub.f32 1.0, %v3017
    %v3019 = vmul.f32 %v3016, %v3018
    %v3020 = vadd.f32 %v3016, %v3019
    %vm3021 = vweird.f32 %v2708
    %vm3022 = vweird.f32 %v3016
    %vm3023 = vmor %vm3021, %vm3022
    %v3024 = vsel %vm3023, %v3016, %v3020
    %v3025 = vand.u32 2147483647, %v2708
    %vm3026 = vcmp.eq.f32.partialorder %v3025, 8.507059e+37
    %v3027 = vand.u32 %v2708, 2147483648
    %v3028 = vor.u32 1.1754944e-38, %v3027
    %v3029 = vsel %vm3026, %v3028, %v3024
    %v3030 = vmul.f32 1.0, %v3029
    %v3031 = vrcp.pop %v2709
    %v3032 = vmul.f32 %v2709, %v3031
    %v3033 = vsub.f32 1.0, %v3032
    %v3034 = vmul.f32 %v3031, %v3033
    %v3035 = vadd.f32 %v3031, %v3034
    %vm3036 = vweird.f32 %v2709
    %vm3037 = vweird.f32 %v3031
    %vm3038 = vmor %vm3036, %vm3037
    %v3039 = vsel %vm3038, %v3031, %v3035
    %v3040 = vand.u32 2147483647, %v2709
    %vm3041 = vcmp.eq.f32.partialorder %v3040, 8.507059e+37
    %v3042 = vand.u32 %v2709, 2147483648
    %v3043 = vor.u32 1.1754944e-38, %v3042
    %v3044 = vsel %vm3041, %v3043, %v3039
    %v3045 = vmul.f32 1.0, %v3044
    %v3046 = vrcp.pop %v2710
    %v3047 = vmul.f32 %v2710, %v3046
    %v3048 = vsub.f32 1.0, %v3047
    %v3049 = vmul.f32 %v3046, %v3048
    %v3050 = vadd.f32 %v3046, %v3049
    %vm3051 = vweird.f32 %v2710
    %vm3052 = vweird.f32 %v3046
    %vm3053 = vmor %vm3051, %vm3052
    %v3054 = vsel %vm3053, %v3046, %v3050
    %v3055 = vand.u32 2147483647, %v2710
    %vm3056 = vcmp.eq.f32.partialorder %v3055, 8.507059e+37
    %v3057 = vand.u32 %v2710, 2147483648
    %v3058 = vor.u32 1.1754944e-38, %v3057
    %v3059 = vsel %vm3056, %v3058, %v3054
    %v3060 = vmul.f32 1.0, %v3059
    %v3061 = vrcp.pop %v2711
    %v3062 = vmul.f32 %v2711, %v3061
    %v3063 = vsub.f32 1.0, %v3062
    %v3064 = vmul.f32 %v3061, %v3063
    %v3065 = vadd.f32 %v3061, %v3064
    %vm3066 = vweird.f32 %v2711
    %vm3067 = vweird.f32 %v3061
    %vm3068 = vmor %vm3066, %vm3067
    %v3069 = vsel %vm3068, %v3061, %v3065
    %v3070 = vand.u32 2147483647, %v2711
    %vm3071 = vcmp.eq.f32.partialorder %v3070, 8.507059e+37
    %v3072 = vand.u32 %v2711, 2147483648
    %v3073 = vor.u32 1.1754944e-38, %v3072
    %v3074 = vsel %vm3071, %v3073, %v3069
    %v3075 = vmul.f32 1.0, %v3074
    %v3076 = vrcp.pop %v2712
    %v3077 = vmul.f32 %v2712, %v3076
    %v3078 = vsub.f32 1.0, %v3077
    %v3079 = vmul.f32 %v3076, %v3078
    %v3080 = vadd.f32 %v3076, %v3079
    %vm3081 = vweird.f32 %v2712
    %vm3082 = vweird.f32 %v3076
    %vm3083 = vmor %vm3081, %vm3082
    %v3084 = vsel %vm3083, %v3076, %v3080
    %v3085 = vand.u32 2147483647, %v2712
    %vm3086 = vcmp.eq.f32.partialorder %v3085, 8.507059e+37
    %v3087 = vand.u32 %v2712, 2147483648
    %v3088 = vor.u32 1.1754944e-38, %v3087
    %v3089 = vsel %vm3086, %v3088, %v3084
    %v3090 = vmul.f32 1.0, %v3089
    %v3091 = vrcp.pop %v2713
    %v3092 = vmul.f32 %v2713, %v3091
    %v3093 = vsub.f32 1.0, %v3092
    %v3094 = vmul.f32 %v3091, %v3093
    %v3095 = vadd.f32 %v3091, %v3094
    %vm3096 = vweird.f32 %v2713
    %vm3097 = vweird.f32 %v3091
    %vm3098 = vmor %vm3096, %vm3097
    %v3099 = vsel %vm3098, %v3091, %v3095
    %v3100 = vand.u32 2147483647, %v2713
    %vm3101 = vcmp.eq.f32.partialorder %v3100, 8.507059e+37
    %v3102 = vand.u32 %v2713, 2147483648
    %v3103 = vor.u32 1.1754944e-38, %v3102
    %v3104 = vsel %vm3101, %v3103, %v3099
    %v3105 = vmul.f32 1.0, %v3104
    %v3106 = vrcp.pop %v2714
    %v3107 = vmul.f32 %v2714, %v3106
    %v3108 = vsub.f32 1.0, %v3107
    %v3109 = vmul.f32 %v3106, %v3108
    %v3110 = vadd.f32 %v3106, %v3109
    %vm3111 = vweird.f32 %v2714
    %vm3112 = vweird.f32 %v3106
    %vm3113 = vmor %vm3111, %vm3112
    %v3114 = vsel %vm3113, %v3106, %v3110
    %v3115 = vand.u32 2147483647, %v2714
    %vm3116 = vcmp.eq.f32.partialorder %v3115, 8.507059e+37
    %v3117 = vand.u32 %v2714, 2147483648
    %v3118 = vor.u32 1.1754944e-38, %v3117
    %v3119 = vsel %vm3116, %v3118, %v3114
    %v3120 = vmul.f32 1.0, %v3119
    %v3121 = vrcp.pop %v2715
    %v3122 = vmul.f32 %v2715, %v3121
    %v3123 = vsub.f32 1.0, %v3122
    %v3124 = vmul.f32 %v3121, %v3123
    %v3125 = vadd.f32 %v3121, %v3124
    %vm3126 = vweird.f32 %v2715
    %vm3127 = vweird.f32 %v3121
    %vm3128 = vmor %vm3126, %vm3127
    %v3129 = vsel %vm3128, %v3121, %v3125
    %v3130 = vand.u32 2147483647, %v2715
    %vm3131 = vcmp.eq.f32.partialorder %v3130, 8.507059e+37
    %v3132 = vand.u32 %v2715, 2147483648
    %v3133 = vor.u32 1.1754944e-38, %v3132
    %v3134 = vsel %vm3131, %v3133, %v3129
    %v3135 = vmul.f32 1.0, %v3134
    %v3136 = vrcp.pop %v2716
    %v3137 = vmul.f32 %v2716, %v3136
    %v3138 = vsub.f32 1.0, %v3137
    %v3139 = vmul.f32 %v3136, %v3138
    %v3140 = vadd.f32 %v3136, %v3139
    %vm3141 = vweird.f32 %v2716
    %vm3142 = vweird.f32 %v3136
    %vm3143 = vmor %vm3141, %vm3142
    %v3144 = vsel %vm3143, %v3136, %v3140
    %v3145 = vand.u32 2147483647, %v2716
    %vm3146 = vcmp.eq.f32.partialorder %v3145, 8.507059e+37
    %v3147 = vand.u32 %v2716, 2147483648
    %v3148 = vor.u32 1.1754944e-38, %v3147
    %v3149 = vsel %vm3146, %v3148, %v3144
    %v3150 = vmul.f32 1.0, %v3149
    %v3151 = vrcp.pop %v2717
    %v3152 = vmul.f32 %v2717, %v3151
    %v3153 = vsub.f32 1.0, %v3152
    %v3154 = vmul.f32 %v3151, %v3153
    %v3155 = vadd.f32 %v3151, %v3154
    %vm3156 = vweird.f32 %v2717
    %vm3157 = vweird.f32 %v3151
    %vm3158 = vmor %vm3156, %vm3157
    %v3159 = vsel %vm3158, %v3151, %v3155
    %v3160 = vand.u32 2147483647, %v2717
    %vm3161 = vcmp.eq.f32.partialorder %v3160, 8.507059e+37
    %v3162 = vand.u32 %v2717, 2147483648
    %v3163 = vor.u32 1.1754944e-38, %v3162
    %v3164 = vsel %vm3161, %v3163, %v3159
    %v3165 = vmul.f32 1.0, %v3164
    %v3166 = vrcp.pop %v2718
    %v3167 = vmul.f32 %v2718, %v3166
    %v3168 = vsub.f32 1.0, %v3167
    %v3169 = vmul.f32 %v3166, %v3168
    %v3170 = vadd.f32 %v3166, %v3169
    %vm3171 = vweird.f32 %v2718
    %vm3172 = vweird.f32 %v3166
    %vm3173 = vmor %vm3171, %vm3172
    %v3174 = vsel %vm3173, %v3166, %v3170
    %v3175 = vand.u32 2147483647, %v2718
    %vm3176 = vcmp.eq.f32.partialorder %v3175, 8.507059e+37
    %v3177 = vand.u32 %v2718, 2147483648
    %v3178 = vor.u32 1.1754944e-38, %v3177
    %v3179 = vsel %vm3176, %v3178, %v3174
    %v3180 = vmul.f32 1.0, %v3179
    %v3181 = vrcp.pop %v2719
    %v3182 = vmul.f32 %v2719, %v3181
    %v3183 = vsub.f32 1.0, %v3182
    %v3184 = vmul.f32 %v3181, %v3183
    %v3185 = vadd.f32 %v3181, %v3184
    %vm3186 = vweird.f32 %v2719
    %vm3187 = vweird.f32 %v3181
    %vm3188 = vmor %vm3186, %vm3187
    %v3189 = vsel %vm3188, %v3181, %v3185
    %v3190 = vand.u32 2147483647, %v2719
    %vm3191 = vcmp.eq.f32.partialorder %v3190, 8.507059e+37
    %v3192 = vand.u32 %v2719, 2147483648
    %v3193 = vor.u32 1.1754944e-38, %v3192
    %v3194 = vsel %vm3191, %v3193, %v3189
    %v3195 = vmul.f32 1.0, %v3194
    %v3196 = vrcp.pop %v2720
    %v3197 = vmul.f32 %v2720, %v3196
    %v3198 = vsub.f32 1.0, %v3197
    %v3199 = vmul.f32 %v3196, %v3198
    %v3200 = vadd.f32 %v3196, %v3199
    %vm3201 = vweird.f32 %v2720
    %vm3202 = vweird.f32 %v3196
    %vm3203 = vmor %vm3201, %vm3202
    %v3204 = vsel %vm3203, %v3196, %v3200
    %v3205 = vand.u32 2147483647, %v2720
    %vm3206 = vcmp.eq.f32.partialorder %v3205, 8.507059e+37
    %v3207 = vand.u32 %v2720, 2147483648
    %v3208 = vor.u32 1.1754944e-38, %v3207
    %v3209 = vsel %vm3206, %v3208, %v3204
    %v3210 = vmul.f32 1.0, %v3209
    %v3211 = vrcp.pop %v2721
    %v3212 = vmul.f32 %v2721, %v3211
    %v3213 = vsub.f32 1.0, %v3212
    %v3214 = vmul.f32 %v3211, %v3213
    %v3215 = vadd.f32 %v3211, %v3214
    %vm3216 = vweird.f32 %v2721
    %vm3217 = vweird.f32 %v3211
    %vm3218 = vmor %vm3216, %vm3217
    %v3219 = vsel %vm3218, %v3211, %v3215
    %v3220 = vand.u32 2147483647, %v2721
    %vm3221 = vcmp.eq.f32.partialorder %v3220, 8.507059e+37
    %v3222 = vand.u32 %v2721, 2147483648
    %v3223 = vor.u32 1.1754944e-38, %v3222
    %v3224 = vsel %vm3221, %v3223, %v3219
    %v3225 = vmul.f32 1.0, %v3224
    %v3226 = vrcp.pop %v2722
    %v3227 = vmul.f32 %v2722, %v3226
    %v3228 = vsub.f32 1.0, %v3227
    %v3229 = vmul.f32 %v3226, %v3228
    %v3230 = vadd.f32 %v3226, %v3229
    %vm3231 = vweird.f32 %v2722
    %vm3232 = vweird.f32 %v3226
    %vm3233 = vmor %vm3231, %vm3232
    %v3234 = vsel %vm3233, %v3226, %v3230
    %v3235 = vand.u32 2147483647, %v2722
    %vm3236 = vcmp.eq.f32.partialorder %v3235, 8.507059e+37
    %v3237 = vand.u32 %v2722, 2147483648
    %v3238 = vor.u32 1.1754944e-38, %v3237
    %v3239 = vsel %vm3236, %v3238, %v3234
    %v3240 = vmul.f32 1.0, %v3239
    %v3241 = vrcp.pop %v2723
    %v3242 = vmul.f32 %v2723, %v3241
    %v3243 = vsub.f32 1.0, %v3242
    %v3244 = vmul.f32 %v3241, %v3243
    %v3245 = vadd.f32 %v3241, %v3244
    %vm3246 = vweird.f32 %v2723
    %vm3247 = vweird.f32 %v3241
    %vm3248 = vmor %vm3246, %vm3247
    %v3249 = vsel %vm3248, %v3241, %v3245
    %v3250 = vand.u32 2147483647, %v2723
    %vm3251 = vcmp.eq.f32.partialorder %v3250, 8.507059e+37
    %v3252 = vand.u32 %v2723, 2147483648
    %v3253 = vor.u32 1.1754944e-38, %v3252
    %v3254 = vsel %vm3251, %v3253, %v3249
    %v3255 = vmul.f32 1.0, %v3254
    %v3256 = vrcp.pop %v2724
    %v3257 = vmul.f32 %v2724, %v3256
    %v3258 = vsub.f32 1.0, %v3257
    %v3259 = vmul.f32 %v3256, %v3258
    %v3260 = vadd.f32 %v3256, %v3259
    %vm3261 = vweird.f32 %v2724
    %vm3262 = vweird.f32 %v3256
    %vm3263 = vmor %vm3261, %vm3262
    %v3264 = vsel %vm3263, %v3256, %v3260
    %v3265 = vand.u32 2147483647, %v2724
    %vm3266 = vcmp.eq.f32.partialorder %v3265, 8.507059e+37
    %v3267 = vand.u32 %v2724, 2147483648
    %v3268 = vor.u32 1.1754944e-38, %v3267
    %v3269 = vsel %vm3266, %v3268, %v3264
    %v3270 = vmul.f32 1.0, %v3269
    %v3271 = vrcp.pop %v2725
    %v3272 = vmul.f32 %v2725, %v3271
    %v3273 = vsub.f32 1.0, %v3272
    %v3274 = vmul.f32 %v3271, %v3273
    %v3275 = vadd.f32 %v3271, %v3274
    %vm3276 = vweird.f32 %v2725
    %vm3277 = vweird.f32 %v3271
    %vm3278 = vmor %vm3276, %vm3277
    %v3279 = vsel %vm3278, %v3271, %v3275
    %v3280 = vand.u32 2147483647, %v2725
    %vm3281 = vcmp.eq.f32.partialorder %v3280, 8.507059e+37
    %v3282 = vand.u32 %v2725, 2147483648
    %v3283 = vor.u32 1.1754944e-38, %v3282
    %v3284 = vsel %vm3281, %v3283, %v3279
    %v3285 = vmul.f32 1.0, %v3284
    %v3286 = vrcp.pop %v2726
    %v3287 = vmul.f32 %v2726, %v3286
    %v3288 = vsub.f32 1.0, %v3287
    %v3289 = vmul.f32 %v3286, %v3288
    %v3290 = vadd.f32 %v3286, %v3289
    %vm3291 = vweird.f32 %v2726
    %vm3292 = vweird.f32 %v3286
    %vm3293 = vmor %vm3291, %vm3292
    %v3294 = vsel %vm3293, %v3286, %v3290
    %v3295 = vand.u32 2147483647, %v2726
    %vm3296 = vcmp.eq.f32.partialorder %v3295, 8.507059e+37
    %v3297 = vand.u32 %v2726, 2147483648
    %v3298 = vor.u32 1.1754944e-38, %v3297
    %v3299 = vsel %vm3296, %v3298, %v3294
    %v3300 = vmul.f32 1.0, %v3299
    %v3301 = vrcp.pop %v2727
    %v3302 = vmul.f32 %v2727, %v3301
    %v3303 = vsub.f32 1.0, %v3302
    %v3304 = vmul.f32 %v3301, %v3303
    %v3305 = vadd.f32 %v3301, %v3304
    %vm3306 = vweird.f32 %v2727
    %vm3307 = vweird.f32 %v3301
    %vm3308 = vmor %vm3306, %vm3307
    %v3309 = vsel %vm3308, %v3301, %v3305
    %v3310 = vand.u32 2147483647, %v2727
    %vm3311 = vcmp.eq.f32.partialorder %v3310, 8.507059e+37
    %v3312 = vand.u32 %v2727, 2147483648
    %v3313 = vor.u32 1.1754944e-38, %v3312
    %v3314 = vsel %vm3311, %v3313, %v3309
    %v3315 = vmul.f32 1.0, %v3314
    %v3316 = vrcp.pop %v2728
    %v3317 = vmul.f32 %v2728, %v3316
    %v3318 = vsub.f32 1.0, %v3317
    %v3319 = vmul.f32 %v3316, %v3318
    %v3320 = vadd.f32 %v3316, %v3319
    %vm3321 = vweird.f32 %v2728
    %vm3322 = vweird.f32 %v3316
    %vm3323 = vmor %vm3321, %vm3322
    %v3324 = vsel %vm3323, %v3316, %v3320
    %v3325 = vand.u32 2147483647, %v2728
    %vm3326 = vcmp.eq.f32.partialorder %v3325, 8.507059e+37
    %v3327 = vand.u32 %v2728, 2147483648
    %v3328 = vor.u32 1.1754944e-38, %v3327
    %v3329 = vsel %vm3326, %v3328, %v3324
    %v3330 = vmul.f32 1.0, %v3329
    %v3331 = vrcp.pop %v2729
    %v3332 = vmul.f32 %v2729, %v3331
    %v3333 = vsub.f32 1.0, %v3332
    %v3334 = vmul.f32 %v3331, %v3333
    %v3335 = vadd.f32 %v3331, %v3334
    %vm3336 = vweird.f32 %v2729
    %vm3337 = vweird.f32 %v3331
    %vm3338 = vmor %vm3336, %vm3337
    %v3339 = vsel %vm3338, %v3331, %v3335
    %v3340 = vand.u32 2147483647, %v2729
    %vm3341 = vcmp.eq.f32.partialorder %v3340, 8.507059e+37
    %v3342 = vand.u32 %v2729, 2147483648
    %v3343 = vor.u32 1.1754944e-38, %v3342
    %v3344 = vsel %vm3341, %v3343, %v3339
    %v3345 = vmul.f32 1.0, %v3344
    %v3346 = vrcp.pop %v2730
    %v3347 = vmul.f32 %v2730, %v3346
    %v3348 = vsub.f32 1.0, %v3347
    %v3349 = vmul.f32 %v3346, %v3348
    %v3350 = vadd.f32 %v3346, %v3349
    %vm3351 = vweird.f32 %v2730
    %vm3352 = vweird.f32 %v3346
    %vm3353 = vmor %vm3351, %vm3352
    %v3354 = vsel %vm3353, %v3346, %v3350
    %v3355 = vand.u32 2147483647, %v2730
    %vm3356 = vcmp.eq.f32.partialorder %v3355, 8.507059e+37
    %v3357 = vand.u32 %v2730, 2147483648
    %v3358 = vor.u32 1.1754944e-38, %v3357
    %v3359 = vsel %vm3356, %v3358, %v3354
    %v3360 = vmul.f32 1.0, %v3359
    %v3361 = vrcp.pop %v2731
    %v3362 = vmul.f32 %v2731, %v3361
    %v3363 = vsub.f32 1.0, %v3362
    %v3364 = vmul.f32 %v3361, %v3363
    %v3365 = vadd.f32 %v3361, %v3364
    %vm3366 = vweird.f32 %v2731
    %vm3367 = vweird.f32 %v3361
    %vm3368 = vmor %vm3366, %vm3367
    %v3369 = vsel %vm3368, %v3361, %v3365
    %v3370 = vand.u32 2147483647, %v2731
    %vm3371 = vcmp.eq.f32.partialorder %v3370, 8.507059e+37
    %v3372 = vand.u32 %v2731, 2147483648
    %v3373 = vor.u32 1.1754944e-38, %v3372
    %v3374 = vsel %vm3371, %v3373, %v3369
    %v3375 = vmul.f32 1.0, %v3374
    %v3376 = vrcp.pop %v2732
    %v3377 = vmul.f32 %v2732, %v3376
    %v3378 = vsub.f32 1.0, %v3377
    %v3379 = vmul.f32 %v3376, %v3378
    %v3380 = vadd.f32 %v3376, %v3379
    %vm3381 = vweird.f32 %v2732
    %vm3382 = vweird.f32 %v3376
    %vm3383 = vmor %vm3381, %vm3382
    %v3384 = vsel %vm3383, %v3376, %v3380
    %v3385 = vand.u32 2147483647, %v2732
    %vm3386 = vcmp.eq.f32.partialorder %v3385, 8.507059e+37
    %v3387 = vand.u32 %v2732, 2147483648
    %v3388 = vor.u32 1.1754944e-38, %v3387
    %v3389 = vsel %vm3386, %v3388, %v3384
    %v3390 = vmul.f32 1.0, %v3389
    %v3391 = vrcp.pop %v2733
    %v3392 = vmul.f32 %v2733, %v3391
    %v3393 = vsub.f32 1.0, %v3392
    %v3394 = vmul.f32 %v3391, %v3393
    %v3395 = vadd.f32 %v3391, %v3394
    %vm3396 = vweird.f32 %v2733
    %vm3397 = vweird.f32 %v3391
    %vm3398 = vmor %vm3396, %vm3397
    %v3399 = vsel %vm3398, %v3391, %v3395
    %v3400 = vand.u32 2147483647, %v2733
    %vm3401 = vcmp.eq.f32.partialorder %v3400, 8.507059e+37
    %v3402 = vand.u32 %v2733, 2147483648
    %v3403 = vor.u32 1.1754944e-38, %v3402
    %v3404 = vsel %vm3401, %v3403, %v3399
    %v3405 = vmul.f32 1.0, %v3404
    %v3406 = vrcp.pop %v2734
    %v3407 = vmul.f32 %v2734, %v3406
    %v3408 = vsub.f32 1.0, %v3407
    %v3409 = vmul.f32 %v3406, %v3408
    %v3410 = vadd.f32 %v3406, %v3409
    %vm3411 = vweird.f32 %v2734
    %vm3412 = vweird.f32 %v3406
    %vm3413 = vmor %vm3411, %vm3412
    %v3414 = vsel %vm3413, %v3406, %v3410
    %v3415 = vand.u32 2147483647, %v2734
    %vm3416 = vcmp.eq.f32.partialorder %v3415, 8.507059e+37
    %v3417 = vand.u32 %v2734, 2147483648
    %v3418 = vor.u32 1.1754944e-38, %v3417
    %v3419 = vsel %vm3416, %v3418, %v3414
    %v3420 = vmul.f32 1.0, %v3419
    %v3421 = vrcp.pop %v2735
    %v3422 = vmul.f32 %v2735, %v3421
    %v3423 = vsub.f32 1.0, %v3422
    %v3424 = vmul.f32 %v3421, %v3423
    %v3425 = vadd.f32 %v3421, %v3424
    %vm3426 = vweird.f32 %v2735
    %vm3427 = vweird.f32 %v3421
    %vm3428 = vmor %vm3426, %vm3427
    %v3429 = vsel %vm3428, %v3421, %v3425
    %v3430 = vand.u32 2147483647, %v2735
    %vm3431 = vcmp.eq.f32.partialorder %v3430, 8.507059e+37
    %v3432 = vand.u32 %v2735, 2147483648
    %v3433 = vor.u32 1.1754944e-38, %v3432
    %v3434 = vsel %vm3431, %v3433, %v3429
    %v3435 = vmul.f32 1.0, %v3434
    %v3436 = vrcp.pop %v2736
    %v3437 = vmul.f32 %v2736, %v3436
    %v3438 = vsub.f32 1.0, %v3437
    %v3439 = vmul.f32 %v3436, %v3438
    %v3440 = vadd.f32 %v3436, %v3439
    %vm3441 = vweird.f32 %v2736
    %vm3442 = vweird.f32 %v3436
    %vm3443 = vmor %vm3441, %vm3442
    %v3444 = vsel %vm3443, %v3436, %v3440
    %v3445 = vand.u32 2147483647, %v2736
    %vm3446 = vcmp.eq.f32.partialorder %v3445, 8.507059e+37
    %v3447 = vand.u32 %v2736, 2147483648
    %v3448 = vor.u32 1.1754944e-38, %v3447
    %v3449 = vsel %vm3446, %v3448, %v3444
    %v3450 = vmul.f32 1.0, %v3449
    %v3451 = vrcp.pop %v2737
    %v3452 = vmul.f32 %v2737, %v3451
    %v3453 = vsub.f32 1.0, %v3452
    %v3454 = vmul.f32 %v3451, %v3453
    %v3455 = vadd.f32 %v3451, %v3454
    %vm3456 = vweird.f32 %v2737
    %vm3457 = vweird.f32 %v3451
    %vm3458 = vmor %vm3456, %vm3457
    %v3459 = vsel %vm3458, %v3451, %v3455
    %v3460 = vand.u32 2147483647, %v2737
    %vm3461 = vcmp.eq.f32.partialorder %v3460, 8.507059e+37
    %v3462 = vand.u32 %v2737, 2147483648
    %v3463 = vor.u32 1.1754944e-38, %v3462
    %v3464 = vsel %vm3461, %v3463, %v3459
    %v3465 = vmul.f32 1.0, %v3464
    %v3466 = vrcp.pop %v2738
    %v3467 = vmul.f32 %v2738, %v3466
    %v3468 = vsub.f32 1.0, %v3467
    %v3469 = vmul.f32 %v3466, %v3468
    %v3470 = vadd.f32 %v3466, %v3469
    %vm3471 = vweird.f32 %v2738
    %vm3472 = vweird.f32 %v3466
    %vm3473 = vmor %vm3471, %vm3472
    %v3474 = vsel %vm3473, %v3466, %v3470
    %v3475 = vand.u32 2147483647, %v2738
    %vm3476 = vcmp.eq.f32.partialorder %v3475, 8.507059e+37
    %v3477 = vand.u32 %v2738, 2147483648
    %v3478 = vor.u32 1.1754944e-38, %v3477
    %v3479 = vsel %vm3476, %v3478, %v3474
    %v3480 = vmul.f32 1.0, %v3479
    %v3481 = vrcp.pop %v2739
    %v3482 = vmul.f32 %v2739, %v3481
    %v3483 = vsub.f32 1.0, %v3482
    %v3484 = vmul.f32 %v3481, %v3483
    %v3485 = vadd.f32 %v3481, %v3484
    %vm3486 = vweird.f32 %v2739
    %vm3487 = vweird.f32 %v3481
    %vm3488 = vmor %vm3486, %vm3487
    %v3489 = vsel %vm3488, %v3481, %v3485
    %v3490 = vand.u32 2147483647, %v2739
    %vm3491 = vcmp.eq.f32.partialorder %v3490, 8.507059e+37
    %v3492 = vand.u32 %v2739, 2147483648
    %v3493 = vor.u32 1.1754944e-38, %v3492
    %v3494 = vsel %vm3491, %v3493, %v3489
    %v3495 = vmul.f32 1.0, %v3494
    %v3496 = vrcp.pop %v2740
    %v3497 = vmul.f32 %v2740, %v3496
    %v3498 = vsub.f32 1.0, %v3497
    %v3499 = vmul.f32 %v3496, %v3498
    %v3500 = vadd.f32 %v3496, %v3499
    %vm3501 = vweird.f32 %v2740
    %vm3502 = vweird.f32 %v3496
    %vm3503 = vmor %vm3501, %vm3502
    %v3504 = vsel %vm3503, %v3496, %v3500
    %v3505 = vand.u32 2147483647, %v2740
    %vm3506 = vcmp.eq.f32.partialorder %v3505, 8.507059e+37
    %v3507 = vand.u32 %v2740, 2147483648
    %v3508 = vor.u32 1.1754944e-38, %v3507
    %v3509 = vsel %vm3506, %v3508, %v3504
    %v3510 = vmul.f32 1.0, %v3509
    %v3511 = vrcp.pop %v2741
    %v3512 = vmul.f32 %v2741, %v3511
    %v3513 = vsub.f32 1.0, %v3512
    %v3514 = vmul.f32 %v3511, %v3513
    %v3515 = vadd.f32 %v3511, %v3514
    %vm3516 = vweird.f32 %v2741
    %vm3517 = vweird.f32 %v3511
    %vm3518 = vmor %vm3516, %vm3517
    %v3519 = vsel %vm3518, %v3511, %v3515
    %v3520 = vand.u32 2147483647, %v2741
    %vm3521 = vcmp.eq.f32.partialorder %v3520, 8.507059e+37
    %v3522 = vand.u32 %v2741, 2147483648
    %v3523 = vor.u32 1.1754944e-38, %v3522
    %v3524 = vsel %vm3521, %v3523, %v3519
    %v3525 = vmul.f32 1.0, %v3524
    %v3526 = vrcp.pop %v2742
    %v3527 = vmul.f32 %v2742, %v3526
    %v3528 = vsub.f32 1.0, %v3527
    %v3529 = vmul.f32 %v3526, %v3528
    %v3530 = vadd.f32 %v3526, %v3529
    %vm3531 = vweird.f32 %v2742
    %vm3532 = vweird.f32 %v3526
    %vm3533 = vmor %vm3531, %vm3532
    %v3534 = vsel %vm3533, %v3526, %v3530
    %v3535 = vand.u32 2147483647, %v2742
    %vm3536 = vcmp.eq.f32.partialorder %v3535, 8.507059e+37
    %v3537 = vand.u32 %v2742, 2147483648
    %v3538 = vor.u32 1.1754944e-38, %v3537
    %v3539 = vsel %vm3536, %v3538, %v3534
    %v3540 = vmul.f32 1.0, %v3539
    %v3541 = vrcp.pop %v2743
    %v3542 = vmul.f32 %v2743, %v3541
    %v3543 = vsub.f32 1.0, %v3542
    %v3544 = vmul.f32 %v3541, %v3543
    %v3545 = vadd.f32 %v3541, %v3544
    %vm3546 = vweird.f32 %v2743
    %vm3547 = vweird.f32 %v3541
    %vm3548 = vmor %vm3546, %vm3547
    %v3549 = vsel %vm3548, %v3541, %v3545
    %v3550 = vand.u32 2147483647, %v2743
    %vm3551 = vcmp.eq.f32.partialorder %v3550, 8.507059e+37
    %v3552 = vand.u32 %v2743, 2147483648
    %v3553 = vor.u32 1.1754944e-38, %v3552
    %v3554 = vsel %vm3551, %v3553, %v3549
    %v3555 = vmul.f32 1.0, %v3554
    %v3556 = vrcp.pop %v2744
    %v3557 = vmul.f32 %v2744, %v3556
    %v3558 = vsub.f32 1.0, %v3557
    %v3559 = vmul.f32 %v3556, %v3558
    %v3560 = vadd.f32 %v3556, %v3559
    %vm3561 = vweird.f32 %v2744
    %vm3562 = vweird.f32 %v3556
    %vm3563 = vmor %vm3561, %vm3562
    %v3564 = vsel %vm3563, %v3556, %v3560
    %v3565 = vand.u32 2147483647, %v2744
    %vm3566 = vcmp.eq.f32.partialorder %v3565, 8.507059e+37
    %v3567 = vand.u32 %v2744, 2147483648
    %v3568 = vor.u32 1.1754944e-38, %v3567
    %v3569 = vsel %vm3566, %v3568, %v3564
    %v3570 = vmul.f32 1.0, %v3569
    %v3571 = vrcp.pop %v2745
    %v3572 = vmul.f32 %v2745, %v3571
    %v3573 = vsub.f32 1.0, %v3572
    %v3574 = vmul.f32 %v3571, %v3573
    %v3575 = vadd.f32 %v3571, %v3574
    %vm3576 = vweird.f32 %v2745
    %vm3577 = vweird.f32 %v3571
    %vm3578 = vmor %vm3576, %vm3577
    %v3579 = vsel %vm3578, %v3571, %v3575
    %v3580 = vand.u32 2147483647, %v2745
    %vm3581 = vcmp.eq.f32.partialorder %v3580, 8.507059e+37
    %v3582 = vand.u32 %v2745, 2147483648
    %v3583 = vor.u32 1.1754944e-38, %v3582
    %v3584 = vsel %vm3581, %v3583, %v3579
    %v3585 = vmul.f32 1.0, %v3584
    %v3586 = vpack.c.bf16 %v2775, %v2760
    %v3587 = vpack.c.bf16 %v2805, %v2790
    %v3588 = vpack.c.bf16 %v2835, %v2820
    %v3589 = vpack.c.bf16 %v2850, %v2850
    %v3590 = vpack.c.bf16 %v2880, %v2865
    %v3591 = vpack.c.bf16 %v2910, %v2895
    %v3592 = vpack.c.bf16 %v2940, %v2925
    %v3593 = vpack.c.bf16 %v2955, %v2955
    %v3594 = vpack.c.bf16 %v2985, %v2970
    %v3595 = vpack.c.bf16 %v3015, %v3000
    %v3596 = vpack.c.bf16 %v3045, %v3030
    %v3597 = vpack.c.bf16 %v3060, %v3060
    %v3598 = vpack.c.bf16 %v3090, %v3075
    %v3599 = vpack.c.bf16 %v3120, %v3105
    %v3600 = vpack.c.bf16 %v3150, %v3135
    %v3601 = vpack.c.bf16 %v3165, %v3165
    %v3602 = vpack.c.bf16 %v3195, %v3180
    %v3603 = vpack.c.bf16 %v3225, %v3210
    %v3604 = vpack.c.bf16 %v3255, %v3240
    %v3605 = vpack.c.bf16 %v3270, %v3270
    %v3606 = vpack.c.bf16 %v3300, %v3285
    %v3607 = vpack.c.bf16 %v3330, %v3315
    %v3608 = vpack.c.bf16 %v3360, %v3345
    %v3609 = vpack.c.bf16 %v3375, %v3375
    %v3610 = vpack.c.bf16 %v3405, %v3390
    %v3611 = vpack.c.bf16 %v3435, %v3420
    %v3612 = vpack.c.bf16 %v3465, %v3450
    %v3613 = vpack.c.bf16 %v3480, %v3480
    %v3614 = vpack.c.bf16 %v3510, %v3495
    %v3615 = vpack.c.bf16 %v3540, %v3525
    %v3616 = vpack.c.bf16 %v3570, %v3555
    %v3617 = vpack.c.bf16 %v3585, %v3585
    %3618 = vst [vmem:[#allocation2] sm:$0xff] %v3586
    %3619 = vst [vmem:[#allocation2 + $0x8] sm:$0xff] %v3587
    %3620 = vst [vmem:[#allocation2 + $0x10] sm:$0xff] %v3588
    %vm3621 = vcmask 125952
    %3622 = vst.msk [vmem:[#allocation2 + $0x18] sm:$0xf] %vm3621, %v3589
    %3623 = vst [vmem:[#allocation2 + $0x1c] sm:$0xff] %v3590
    %3624 = vst [vmem:[#allocation2 + $0x24] sm:$0xff] %v3591
    %3625 = vst [vmem:[#allocation2 + $0x2c] sm:$0xff] %v3592
    %3626 = vst.msk [vmem:[#allocation2 + $0x34] sm:$0xf] %vm3621, %v3593
    %3627 = vst [vmem:[#allocation2 + $0x38] sm:$0xff] %v3594
    %3628 = vst [vmem:[#allocation2 + $0x40] sm:$0xff] %v3595
    %3629 = vst [vmem:[#allocation2 + $0x48] sm:$0xff] %v3596
    %3630 = vst.msk [vmem:[#allocation2 + $0x50] sm:$0xf] %vm3621, %v3597
    %3631 = vst [vmem:[#allocation2 + $0x54] sm:$0xff] %v3598
    %3632 = vst [vmem:[#allocation2 + $0x5c] sm:$0xff] %v3599
    %3633 = vst [vmem:[#allocation2 + $0x64] sm:$0xff] %v3600
    %3634 = vst.msk [vmem:[#allocation2 + $0x6c] sm:$0xf] %vm3621, %v3601
    %3635 = vst [vmem:[#allocation2 + $0x70] sm:$0xff] %v3602
    %3636 = vst [vmem:[#allocation2 + $0x78] sm:$0xff] %v3603
    %3637 = vst [vmem:[#allocation2 + $0x80] sm:$0xff] %v3604
    %3638 = vst.msk [vmem:[#allocation2 + $0x88] sm:$0xf] %vm3621, %v3605
    %3639 = vst [vmem:[#allocation2 + $0x8c] sm:$0xff] %v3606
    %3640 = vst [vmem:[#allocation2 + $0x94] sm:$0xff] %v3607
    %3641 = vst [vmem:[#allocation2 + $0x9c] sm:$0xff] %v3608
    %3642 = vst.msk [vmem:[#allocation2 + $0xa4] sm:$0xf] %vm3621, %v3609
    %3643 = vst [vmem:[#allocation2 + $0xa8] sm:$0xff] %v3610
    %3644 = vst [vmem:[#allocation2 + $0xb0] sm:$0xff] %v3611
    %3645 = vst [vmem:[#allocation2 + $0xb8] sm:$0xff] %v3612
    %3646 = vst.msk [vmem:[#allocation2 + $0xc0] sm:$0xf] %vm3621, %v3613
    %3647 = vst [vmem:[#allocation2 + $0xc4] sm:$0xff] %v3614
    %3648 = vst [vmem:[#allocation2 + $0xcc] sm:$0xff] %v3615
    %3649 = vst [vmem:[#allocation2 + $0xd4] sm:$0xff] %v3616
    %3650 = vst.msk [vmem:[#allocation2 + $0xdc] sm:$0xf] %vm3621, %v3617
    // Predicated region
    $region22: #{decoder_forward.1} parent=1 // pred_check
      _
    $region23: #{decoder_forward.1} parent=1 // pred_check_branch
      %3652 = sbr.rel (0) target = $region25
    $region24: #{decoder_forward.1} parent=1 // pred_region
      %3654 = vsyncadd [#allocation3], 0
      %s3655 = sshll.u32 [#allocation2], 4
      %s3656 = int_to_ptr.vmem [resolvable:$true] %s3655
      %s3657 = sshll.u32 %s5, 4
      %s3658 = int_to_ptr.hbm [resolvable:$true] %s3657
      %3663 = dma.vmem_to_hbm [thread:$0]  %s3656, 3584, %s3658, [#allocation3], 448, 448, 28
    $region25: #{decoder_forward.1} parent=1 // pred_fallthru
      _
    // Predicated region
    $region26: #{decoder_forward.1} parent=1 // pred_check
      _
    $region27: #{decoder_forward.1} parent=1 // pred_check_branch
      %3665 = sbr.rel (0) target = $region29
    $region28: #{decoder_forward.1} parent=1 // pred_region
      %3667 = dma.done [#allocation3], 3584
    $region29: #{decoder_forward.1} parent=1 // pred_fallthru
      _
    %3668 = vsyncpa [#allocation3], 1

</llo_original>
